<compile_context>
chip_gen: v7x
topology: tpu7x:2x2x1
jax: 0.10.0
libtpu: 0.0.40
codegen_flags: <defaults>
</compile_context>

<pallas_src>
import math

import jax
import jax.numpy as jnp
from jax.experimental import pallas as pl
from jax.experimental.pallas import tpu as pltpu

NUM_EMBED = 192            # num_embed in the PyTorch module
NUM_HEAD = 6               # num_head
HEAD_DIM = NUM_EMBED // NUM_HEAD
HIDDEN = 4 * NUM_EMBED
BLOCK_SIZE = 128           # block_size (max seq len for the causal mask)
LN_EPS = 1e-5
NEG_INF = -1e30            # large finite mask value (avoids inf-inf NaNs)

_SQRT_2_OVER_PI = math.sqrt(2.0 / math.pi)


def _gelu_tanh(x):
    # tanh-based GELU: jnp.tanh lowers to the EUP (otherwise idle during the
    # fc1/fc2 matmuls); |diff vs exact erf GELU| < 1e-3, well within tolerance.
    return 0.5 * x * (1.0 + jnp.tanh(_SQRT_2_OVER_PI * (x + 0.044715 * x * x * x)))


def _layernorm(x, gamma, beta):
    mean = jnp.mean(x, axis=-1, keepdims=True)
    var = jnp.mean((x - mean) ** 2, axis=-1, keepdims=True)
    return (x - mean) * jax.lax.rsqrt(var + LN_EPS) * gamma + beta


def decoder_block_kernel(x_ref,
                         g1_ref, b1_ref,
                         wq_ref, bq_ref, wk_ref, bk_ref, wv_ref, bv_ref,
                         wo_ref, bo_ref,
                         g2_ref, b2_ref,
                         w1_ref, bi1_ref, w2_ref, bi2_ref,
                         o_ref):
    bt, t, e = x_ref.shape
    x = x_ref[...]                                  # (Bt, T, E) f32
    xf = x.reshape(bt * t, e)                       # fold rows: (Bt*T, E)

    # ---- norm1 + causal multi-head self-attention + residual ----
    n1 = _layernorm(xf, g1_ref[...], b1_ref[...])
    n1_bf = n1.astype(jnp.bfloat16)

    # wq/bq arrive pre-scaled by 1/sqrt(HEAD_DIM) from the wrapper.
    q = jnp.dot(n1_bf, wq_ref[...], preferred_element_type=jnp.float32) + bq_ref[...]
    k = jnp.dot(n1_bf, wk_ref[...], preferred_element_type=jnp.float32) + bk_ref[...]
    v = jnp.dot(n1_bf, wv_ref[...], preferred_element_type=jnp.float32) + bv_ref[...]

    q_bf = q.reshape(bt, t, e).astype(jnp.bfloat16)
    k_bf = k.reshape(bt, t, e).astype(jnp.bfloat16)
    v_bf = v.reshape(bt, t, e).astype(jnp.bfloat16)

    row = jax.lax.broadcasted_iota(jnp.int32, (t, t), 0)
    col = jax.lax.broadcasted_iota(jnp.int32, (t, t), 1)
    causal = (col <= row)[None, :, :]               # (1, T, T)

    head_outs = []
    for h in range(NUM_HEAD):                       # static unroll over 6 heads
        sl = slice(h * HEAD_DIM, (h + 1) * HEAD_DIM)
        qh = q_bf[:, :, sl]                         # (Bt, T, Dh)
        kh = k_bf[:, :, sl]
        vh = v_bf[:, :, sl]
        s = jnp.einsum('btd,bsd->bts', qh, kh,
                       preferred_element_type=jnp.float32)        # (Bt, T, T)
        s = jnp.where(causal, s, NEG_INF)
        m = jnp.max(s, axis=-1, keepdims=True)
        p = jnp.exp(s - m)
        denom = jnp.sum(p, axis=-1, keepdims=True)
        p = p * pl.reciprocal(denom, approx=True)
        oh = jnp.einsum('bts,bsd->btd', p.astype(jnp.bfloat16), vh,
                        preferred_element_type=jnp.float32)       # (Bt, T, Dh)
        head_outs.append(oh)

    attn_cat = jnp.concatenate(head_outs, axis=-1)                # (Bt, T, E)
    attn_cat = attn_cat.reshape(bt * t, e).astype(jnp.bfloat16)
    attn = (jnp.dot(attn_cat, wo_ref[...], preferred_element_type=jnp.float32)
            + bo_ref[...])
    x1 = xf + attn

    # ---- norm2 + MLP (fc1 -> GELU -> fc2) + residual ----
    n2 = _layernorm(x1, g2_ref[...], b2_ref[...])
    h1 = (jnp.dot(n2.astype(jnp.bfloat16), w1_ref[...],
                  preferred_element_type=jnp.float32) + bi1_ref[...])
    h1 = _gelu_tanh(h1)
    h2 = (jnp.dot(h1.astype(jnp.bfloat16), w2_ref[...],
                  preferred_element_type=jnp.float32) + bi2_ref[...])
    o_ref[...] = (x1 + h2).reshape(bt, t, e).astype(o_ref.dtype)


def decoder_block(x, p, *, bt=None):
    """x: (B, T, E) float32; p: dict of [in, out]-layout parameters."""
    B, T, E = x.shape
    assert E == NUM_EMBED and T <= BLOCK_SIZE
    assert T % 8 == 0, "sequence length must be a multiple of 8 (sublane tile)"

    if bt is None:                                  # batch elements per grid step
        bt = 1
        for cand in (16, 8, 4, 2, 1):
            if B % cand == 0:
                bt = cand
                break
    assert B % bt == 0

    bf16 = jnp.bfloat16
    # Fold the attention score scale into the Q projection. This is a one-time
    # (E,E) weight op in the wrapper (negligible), not an activation pre-scale.
    scale = 1.0 / math.sqrt(HEAD_DIM)
    param_list = [
        p["g1"], p["b1"],
        (p["wq"] * scale).astype(bf16), p["bq"] * scale,
        p["wk"].astype(bf16), p["bk"],
        p["wv"].astype(bf16), p["bv"],
        p["wo"].astype(bf16), p["bo"],
        p["g2"], p["b2"],
        p["w1"].astype(bf16), p["bi1"],
        p["w2"].astype(bf16), p["bi2"],
    ]

    def param_spec(a):
        # Grid-invariant block (same block index each step -> fetched once).
        return pl.BlockSpec(a.shape, lambda b, nd=a.ndim: (0,) * nd)

    in_specs = ([pl.BlockSpec((bt, T, E), lambda b: (b, 0, 0))]
                + [param_spec(a) for a in param_list])
    out_specs = pl.BlockSpec((bt, T, E), lambda b: (b, 0, 0))

    return pl.pallas_call(
        decoder_block_kernel,
        out_shape=jax.ShapeDtypeStruct((B, T, E), x.dtype),
        grid_spec=pltpu.PrefetchScalarGridSpec(
            num_scalar_prefetch=0,
            grid=(B // bt,),
            in_specs=in_specs,
            out_specs=out_specs,
        ),
        compiler_params=pltpu.CompilerParams(
            dimension_semantics=("parallel",)),
    )(x, *param_list)


def init_params(key):
    ks = jax.random.split(key, 16)
    w = lambda k, shape, s: (s * jax.random.normal(k, shape)).astype(jnp.float32)
    E, Hd = NUM_EMBED, HIDDEN
    return dict(
        g1=(1.0 + w(ks[0], (1, E), 0.1)), b1=w(ks[1], (1, E), 0.05),
        wq=w(ks[2], (E, E), 0.05), bq=w(ks[3], (1, E), 0.02),
        wk=w(ks[4], (E, E), 0.05), bk=w(ks[5], (1, E), 0.02),
        wv=w(ks[6], (E, E), 0.05), bv=w(ks[7], (1, E), 0.02),
        wo=w(ks[8], (E, E), 0.05), bo=w(ks[9], (1, E), 0.02),
        g2=(1.0 + w(ks[10], (1, E), 0.1)), b2=w(ks[11], (1, E), 0.05),
        w1=w(ks[12], (E, Hd), 0.05), bi1=w(ks[13], (1, Hd), 0.02),
        w2=w(ks[14], (Hd, E), 0.05), bi2=w(ks[15], (1, E), 0.02),
    )


def reference(x, p):
    """Pure-JAX (f32, exact-GELU) mirror of the PyTorch forward pass."""
    def ln(v, g, b):
        mean = jnp.mean(v, axis=-1, keepdims=True)
        var = jnp.mean((v - mean) ** 2, axis=-1, keepdims=True)
        return (v - mean) / jnp.sqrt(var + LN_EPS) * g + b

    B, T, E = x.shape
    with jax.default_matmul_precision("float32"):
        n1 = ln(x, p["g1"][0], p["b1"][0])
        q = n1 @ p["wq"] + p["bq"][0]
        k = n1 @ p["wk"] + p["bk"][0]
        v = n1 @ p["wv"] + p["bv"][0]
        qh = q.reshape(B, T, NUM_HEAD, HEAD_DIM).transpose(0, 2, 1, 3)
        kh = k.reshape(B, T, NUM_HEAD, HEAD_DIM).transpose(0, 2, 1, 3)
        vh = v.reshape(B, T, NUM_HEAD, HEAD_DIM).transpose(0, 2, 1, 3)
        scores = jnp.einsum("bhtd,bhsd->bhts", qh, kh) / math.sqrt(HEAD_DIM)
        mask = jnp.triu(jnp.full((T, T), -jnp.inf, jnp.float32), k=1)
        attn = jax.nn.softmax(scores + mask, axis=-1)
        out = jnp.einsum("bhts,bhsd->bhtd", attn, vh)
        out = out.transpose(0, 2, 1, 3).reshape(B, T, E)
        out = out @ p["wo"] + p["bo"][0]
        x = x + out
        n2 = ln(x, p["g2"][0], p["b2"][0])
        h1 = jax.nn.gelu(n2 @ p["w1"] + p["bi1"][0], approximate=False)
        h2 = h1 @ p["w2"] + p["bi2"][0]
        return x + h2


if __name__ == "__main__":
    key = jax.random.PRNGKey(0)
    kx, kp = jax.random.split(key)
    B, T = 2, 16
    x = jax.random.normal(kx, (B, T, NUM_EMBED), jnp.float32)
    params = init_params(kp)

    out = decoder_block(x, params)
    out = jax.block_until_ready(out)

    ref = reference(x, params)
    assert out.shape == (B, T, NUM_EMBED), out.shape
    max_err = float(jnp.max(jnp.abs(out - ref)))
    assert max_err < 5e-2, f"mismatch vs reference: {max_err}"
    print("KERNEL_OK")
</pallas_src>

<mosaic_0001>
module attributes {stable_mosaic.version = 11 : i64} {
  func.func @decoder_block_kernel(%arg0: i32, %arg1: memref<2x16x192xf32, #tpu.memory_space<vmem>>, %arg2: memref<1x192xf32, #tpu.memory_space<vmem>>, %arg3: memref<1x192xf32, #tpu.memory_space<vmem>>, %arg4: memref<192x192xbf16, #tpu.memory_space<vmem>>, %arg5: memref<1x192xf32, #tpu.memory_space<vmem>>, %arg6: memref<192x192xbf16, #tpu.memory_space<vmem>>, %arg7: memref<1x192xf32, #tpu.memory_space<vmem>>, %arg8: memref<192x192xbf16, #tpu.memory_space<vmem>>, %arg9: memref<1x192xf32, #tpu.memory_space<vmem>>, %arg10: memref<192x192xbf16, #tpu.memory_space<vmem>>, %arg11: memref<1x192xf32, #tpu.memory_space<vmem>>, %arg12: memref<1x192xf32, #tpu.memory_space<vmem>>, %arg13: memref<1x192xf32, #tpu.memory_space<vmem>>, %arg14: memref<192x768xbf16, #tpu.memory_space<vmem>>, %arg15: memref<1x768xf32, #tpu.memory_space<vmem>>, %arg16: memref<768x192xbf16, #tpu.memory_space<vmem>>, %arg17: memref<1x192xf32, #tpu.memory_space<vmem>>, %arg18: memref<2x16x192xf32, #tpu.memory_space<vmem>>) attributes {dimension_semantics = [#tpu.dimension_semantics<parallel>], iteration_bounds = array<i64: 1>, scalar_prefetch = 0 : i64, scratch_operands = 0 : i64, tpu.core_type = #tpu.core_type<tc>, window_params = [{transform_indices = @transform_0, window_bounds = array<i64: 2, 16, 192>}, {pipeline_mode = #tpu.pipeline_mode<synchronous>, transform_indices = @transform_1, window_bounds = array<i64: 1, 192>}, {pipeline_mode = #tpu.pipeline_mode<synchronous>, transform_indices = @transform_2, window_bounds = array<i64: 1, 192>}, {pipeline_mode = #tpu.pipeline_mode<synchronous>, transform_indices = @transform_3, window_bounds = array<i64: 192, 192>}, {pipeline_mode = #tpu.pipeline_mode<synchronous>, transform_indices = @transform_4, window_bounds = array<i64: 1, 192>}, {pipeline_mode = #tpu.pipeline_mode<synchronous>, transform_indices = @transform_5, window_bounds = array<i64: 192, 192>}, {pipeline_mode = #tpu.pipeline_mode<synchronous>, transform_indices = @transform_6, window_bounds = array<i64: 1, 192>}, {pipeline_mode = #tpu.pipeline_mode<synchronous>, transform_indices = @transform_7, window_bounds = array<i64: 192, 192>}, {pipeline_mode = #tpu.pipeline_mode<synchronous>, transform_indices = @transform_8, window_bounds = array<i64: 1, 192>}, {pipeline_mode = #tpu.pipeline_mode<synchronous>, transform_indices = @transform_9, window_bounds = array<i64: 192, 192>}, {pipeline_mode = #tpu.pipeline_mode<synchronous>, transform_indices = @transform_10, window_bounds = array<i64: 1, 192>}, {pipeline_mode = #tpu.pipeline_mode<synchronous>, transform_indices = @transform_11, window_bounds = array<i64: 1, 192>}, {pipeline_mode = #tpu.pipeline_mode<synchronous>, transform_indices = @transform_12, window_bounds = array<i64: 1, 192>}, {pipeline_mode = #tpu.pipeline_mode<synchronous>, transform_indices = @transform_13, window_bounds = array<i64: 192, 768>}, {pipeline_mode = #tpu.pipeline_mode<synchronous>, transform_indices = @transform_14, window_bounds = array<i64: 1, 768>}, {pipeline_mode = #tpu.pipeline_mode<synchronous>, transform_indices = @transform_15, window_bounds = array<i64: 768, 192>}, {pipeline_mode = #tpu.pipeline_mode<synchronous>, transform_indices = @transform_16, window_bounds = array<i64: 1, 192>}, {transform_indices = @transform_17, window_bounds = array<i64: 2, 16, 192>}]} {
    %c0 = arith.constant 0 : index
    %c0_0 = arith.constant 0 : index
    %c0_1 = arith.constant 0 : index
    %0 = vector.load %arg1[%c0, %c0_0, %c0_1] : memref<2x16x192xf32, #tpu.memory_space<vmem>>, vector<2x16x192xf32>
    %1 = vector.shape_cast %0 : vector<2x16x192xf32> to vector<32x192xf32>
    %c0_2 = arith.constant 0 : index
    %c0_3 = arith.constant 0 : index
    %2 = vector.load %arg2[%c0_2, %c0_3] : memref<1x192xf32, #tpu.memory_space<vmem>>, vector<1x192xf32>
    %c0_4 = arith.constant 0 : index
    %c0_5 = arith.constant 0 : index
    %3 = vector.load %arg3[%c0_4, %c0_5] : memref<1x192xf32, #tpu.memory_space<vmem>>, vector<1x192xf32>
    %cst = arith.constant dense<0.000000e+00> : vector<32xf32>
    %4 = vector.multi_reduction <add>, %1, %cst [1] : vector<32x192xf32> to vector<32xf32>
    %5 = vector.shape_cast %4 : vector<32xf32> to vector<32x1xf32>
    %cst_6 = arith.constant 1.920000e+02 : f32
    %6 = vector.broadcast %cst_6 : f32 to vector<32x1xf32>
    %7 = arith.divf %5, %6 : vector<32x1xf32>
    %8 = vector.broadcast %7 : vector<32x1xf32> to vector<32x192xf32>
    %9 = arith.subf %1, %8 : vector<32x192xf32>
    %10 = arith.mulf %9, %9 : vector<32x192xf32>
    %cst_7 = arith.constant dense<0.000000e+00> : vector<32xf32>
    %11 = vector.multi_reduction <add>, %10, %cst_7 [1] : vector<32x192xf32> to vector<32xf32>
    %12 = vector.shape_cast %11 : vector<32xf32> to vector<32x1xf32>
    %cst_8 = arith.constant 1.920000e+02 : f32
    %13 = vector.broadcast %cst_8 : f32 to vector<32x1xf32>
    %14 = arith.divf %12, %13 : vector<32x1xf32>
    %15 = vector.broadcast %7 : vector<32x1xf32> to vector<32x192xf32>
    %16 = arith.subf %1, %15 : vector<32x192xf32>
    %cst_9 = arith.constant 9.99999974E-6 : f32
    %17 = vector.broadcast %cst_9 : f32 to vector<32x1xf32>
    %18 = arith.addf %14, %17 : vector<32x1xf32>
    %19 = math.rsqrt %18 : vector<32x1xf32>
    %20 = vector.broadcast %19 : vector<32x1xf32> to vector<32x192xf32>
    %21 = arith.mulf %16, %20 : vector<32x192xf32>
    %22 = vector.broadcast %2 : vector<1x192xf32> to vector<32x192xf32>
    %23 = arith.mulf %21, %22 : vector<32x192xf32>
    %24 = vector.broadcast %3 : vector<1x192xf32> to vector<32x192xf32>
    %25 = arith.addf %23, %24 : vector<32x192xf32>
    %26 = arith.truncf %25 : vector<32x192xf32> to vector<32x192xbf16>
    %c0_10 = arith.constant 0 : index
    %c0_11 = arith.constant 0 : index
    %27 = vector.load %arg4[%c0_10, %c0_11] : memref<192x192xbf16, #tpu.memory_space<vmem>>, vector<192x192xbf16>
    %cst_12 = arith.constant dense<0.000000e+00> : vector<32x192xf32>
    %28 = tpu.matmul %26, %27, %cst_12 {dimension_numbers = #tpu.dot_dimension_numbers<[1], [0], [0], [1], [0, 0, 1, 1], [], []>} : vector<32x192xbf16>, vector<192x192xbf16>, vector<32x192xf32> -> vector<32x192xf32>
    %c0_13 = arith.constant 0 : index
    %c0_14 = arith.constant 0 : index
    %29 = vector.load %arg5[%c0_13, %c0_14] : memref<1x192xf32, #tpu.memory_space<vmem>>, vector<1x192xf32>
    %30 = vector.broadcast %29 : vector<1x192xf32> to vector<32x192xf32>
    %31 = arith.addf %28, %30 : vector<32x192xf32>
    %c0_15 = arith.constant 0 : index
    %c0_16 = arith.constant 0 : index
    %32 = vector.load %arg6[%c0_15, %c0_16] : memref<192x192xbf16, #tpu.memory_space<vmem>>, vector<192x192xbf16>
    %cst_17 = arith.constant dense<0.000000e+00> : vector<32x192xf32>
    %33 = tpu.matmul %26, %32, %cst_17 {dimension_numbers = #tpu.dot_dimension_numbers<[1], [0], [0], [1], [0, 0, 1, 1], [], []>} : vector<32x192xbf16>, vector<192x192xbf16>, vector<32x192xf32> -> vector<32x192xf32>
    %c0_18 = arith.constant 0 : index
    %c0_19 = arith.constant 0 : index
    %34 = vector.load %arg7[%c0_18, %c0_19] : memref<1x192xf32, #tpu.memory_space<vmem>>, vector<1x192xf32>
    %35 = vector.broadcast %34 : vector<1x192xf32> to vector<32x192xf32>
    %36 = arith.addf %33, %35 : vector<32x192xf32>
    %c0_20 = arith.constant 0 : index
    %c0_21 = arith.constant 0 : index
    %37 = vector.load %arg8[%c0_20, %c0_21] : memref<192x192xbf16, #tpu.memory_space<vmem>>, vector<192x192xbf16>
    %cst_22 = arith.constant dense<0.000000e+00> : vector<32x192xf32>
    %38 = tpu.matmul %26, %37, %cst_22 {dimension_numbers = #tpu.dot_dimension_numbers<[1], [0], [0], [1], [0, 0, 1, 1], [], []>} : vector<32x192xbf16>, vector<192x192xbf16>, vector<32x192xf32> -> vector<32x192xf32>
    %c0_23 = arith.constant 0 : index
    %c0_24 = arith.constant 0 : index
    %39 = vector.load %arg9[%c0_23, %c0_24] : memref<1x192xf32, #tpu.memory_space<vmem>>, vector<1x192xf32>
    %40 = vector.broadcast %39 : vector<1x192xf32> to vector<32x192xf32>
    %41 = arith.addf %38, %40 : vector<32x192xf32>
    %42 = vector.shape_cast %31 : vector<32x192xf32> to vector<2x16x192xf32>
    %43 = arith.truncf %42 : vector<2x16x192xf32> to vector<2x16x192xbf16>
    %44 = vector.shape_cast %36 : vector<32x192xf32> to vector<2x16x192xf32>
    %45 = arith.truncf %44 : vector<2x16x192xf32> to vector<2x16x192xbf16>
    %46 = vector.shape_cast %41 : vector<32x192xf32> to vector<2x16x192xf32>
    %47 = arith.truncf %46 : vector<2x16x192xf32> to vector<2x16x192xbf16>
    %48 = tpu.iota {dimensions = array<i32: 0>} : vector<16x16xi32>
    %49 = tpu.iota {dimensions = array<i32: 1>} : vector<16x16xi32>
    %50 = arith.cmpi sle, %49, %48 : vector<16x16xi32>
    %51 = vector.shape_cast %50 : vector<16x16xi1> to vector<1x16x16xi1>
    %52 = vector.extract_strided_slice %43 {offsets = [0, 0, 0], sizes = [2, 16, 32], strides = [1, 1, 1]} : vector<2x16x192xbf16> to vector<2x16x32xbf16>
    %53 = vector.extract_strided_slice %45 {offsets = [0, 0, 0], sizes = [2, 16, 32], strides = [1, 1, 1]} : vector<2x16x192xbf16> to vector<2x16x32xbf16>
    %54 = vector.extract_strided_slice %47 {offsets = [0, 0, 0], sizes = [2, 16, 32], strides = [1, 1, 1]} : vector<2x16x192xbf16> to vector<2x16x32xbf16>
    "tpu.trace_start"() <{level = 10 : i32, message = "btd,bsd->bts"}> : () -> ()
    %cst_25 = arith.constant dense<0.000000e+00> : vector<2x16x16xf32>
    %55 = tpu.matmul %52, %53, %cst_25 {dimension_numbers = #tpu.dot_dimension_numbers<[2], [2], [1], [1], [0, 0, 0, 1, 1, 1], [0], [0]>} : vector<2x16x32xbf16>, vector<2x16x32xbf16>, vector<2x16x16xf32> -> vector<2x16x16xf32>
    %cst_26 = arith.constant -1.000000e+30 : f32
    "tpu.trace_stop"() : () -> ()
    %56 = vector.shape_cast %51 : vector<1x16x16xi1> to vector<1x16x16xi1>
    %57 = vector.broadcast %56 : vector<1x16x16xi1> to vector<2x16x16xi1>
    %58 = vector.broadcast %cst_26 : f32 to vector<2x16x16xf32>
    %59 = arith.select %57, %55, %58 : vector<2x16x16xi1>, vector<2x16x16xf32>
    %cst_27 = arith.constant dense<0xFF800000> : vector<2x16xf32>
    %60 = vector.multi_reduction <maximumf>, %59, %cst_27 [2] : vector<2x16x16xf32> to vector<2x16xf32>
    %61 = vector.shape_cast %60 : vector<2x16xf32> to vector<2x16x1xf32>
    %62 = vector.broadcast %61 : vector<2x16x1xf32> to vector<2x16x16xf32>
    %63 = arith.subf %59, %62 : vector<2x16x16xf32>
    %64 = math.exp %63 : vector<2x16x16xf32>
    %cst_28 = arith.constant dense<0.000000e+00> : vector<2x16xf32>
    %65 = vector.multi_reduction <add>, %64, %cst_28 [2] : vector<2x16x16xf32> to vector<2x16xf32>
    %66 = vector.shape_cast %65 : vector<2x16xf32> to vector<2x16x1xf32>
    %67 = tpu.reciprocal %66 {approx = true} : vector<2x16x1xf32> -> vector<2x16x1xf32>
    %68 = vector.broadcast %67 : vector<2x16x1xf32> to vector<2x16x16xf32>
    %69 = arith.mulf %64, %68 : vector<2x16x16xf32>
    %70 = arith.truncf %69 : vector<2x16x16xf32> to vector<2x16x16xbf16>
    "tpu.trace_start"() <{level = 10 : i32, message = "bts,bsd->btd"}> : () -> ()
    %cst_29 = arith.constant dense<0.000000e+00> : vector<2x16x32xf32>
    %71 = tpu.matmul %70, %54, %cst_29 {dimension_numbers = #tpu.dot_dimension_numbers<[2], [1], [1], [2], [0, 0, 0, 1, 1, 2], [0], [0]>} : vector<2x16x16xbf16>, vector<2x16x32xbf16>, vector<2x16x32xf32> -> vector<2x16x32xf32>
    "tpu.trace_stop"() : () -> ()
    %72 = vector.extract_strided_slice %43 {offsets = [0, 0, 32], sizes = [2, 16, 32], strides = [1, 1, 1]} : vector<2x16x192xbf16> to vector<2x16x32xbf16>
    %73 = vector.extract_strided_slice %45 {offsets = [0, 0, 32], sizes = [2, 16, 32], strides = [1, 1, 1]} : vector<2x16x192xbf16> to vector<2x16x32xbf16>
    %74 = vector.extract_strided_slice %47 {offsets = [0, 0, 32], sizes = [2, 16, 32], strides = [1, 1, 1]} : vector<2x16x192xbf16> to vector<2x16x32xbf16>
    "tpu.trace_start"() <{level = 10 : i32, message = "btd,bsd->bts"}> : () -> ()
    %cst_30 = arith.constant dense<0.000000e+00> : vector<2x16x16xf32>
    %75 = tpu.matmul %72, %73, %cst_30 {dimension_numbers = #tpu.dot_dimension_numbers<[2], [2], [1], [1], [0, 0, 0, 1, 1, 1], [0], [0]>} : vector<2x16x32xbf16>, vector<2x16x32xbf16>, vector<2x16x16xf32> -> vector<2x16x16xf32>
    %cst_31 = arith.constant -1.000000e+30 : f32
    "tpu.trace_stop"() : () -> ()
    %76 = vector.shape_cast %51 : vector<1x16x16xi1> to vector<1x16x16xi1>
    %77 = vector.broadcast %76 : vector<1x16x16xi1> to vector<2x16x16xi1>
    %78 = vector.broadcast %cst_31 : f32 to vector<2x16x16xf32>
    %79 = arith.select %77, %75, %78 : vector<2x16x16xi1>, vector<2x16x16xf32>
    %cst_32 = arith.constant dense<0xFF800000> : vector<2x16xf32>
    %80 = vector.multi_reduction <maximumf>, %79, %cst_32 [2] : vector<2x16x16xf32> to vector<2x16xf32>
    %81 = vector.shape_cast %80 : vector<2x16xf32> to vector<2x16x1xf32>
    %82 = vector.broadcast %81 : vector<2x16x1xf32> to vector<2x16x16xf32>
    %83 = arith.subf %79, %82 : vector<2x16x16xf32>
    %84 = math.exp %83 : vector<2x16x16xf32>
    %cst_33 = arith.constant dense<0.000000e+00> : vector<2x16xf32>
    %85 = vector.multi_reduction <add>, %84, %cst_33 [2] : vector<2x16x16xf32> to vector<2x16xf32>
    %86 = vector.shape_cast %85 : vector<2x16xf32> to vector<2x16x1xf32>
    %87 = tpu.reciprocal %86 {approx = true} : vector<2x16x1xf32> -> vector<2x16x1xf32>
    %88 = vector.broadcast %87 : vector<2x16x1xf32> to vector<2x16x16xf32>
    %89 = arith.mulf %84, %88 : vector<2x16x16xf32>
    %90 = arith.truncf %89 : vector<2x16x16xf32> to vector<2x16x16xbf16>
    "tpu.trace_start"() <{level = 10 : i32, message = "bts,bsd->btd"}> : () -> ()
    %cst_34 = arith.constant dense<0.000000e+00> : vector<2x16x32xf32>
    %91 = tpu.matmul %90, %74, %cst_34 {dimension_numbers = #tpu.dot_dimension_numbers<[2], [1], [1], [2], [0, 0, 0, 1, 1, 2], [0], [0]>} : vector<2x16x16xbf16>, vector<2x16x32xbf16>, vector<2x16x32xf32> -> vector<2x16x32xf32>
    "tpu.trace_stop"() : () -> ()
    %92 = vector.extract_strided_slice %43 {offsets = [0, 0, 64], sizes = [2, 16, 32], strides = [1, 1, 1]} : vector<2x16x192xbf16> to vector<2x16x32xbf16>
    %93 = vector.extract_strided_slice %45 {offsets = [0, 0, 64], sizes = [2, 16, 32], strides = [1, 1, 1]} : vector<2x16x192xbf16> to vector<2x16x32xbf16>
    %94 = vector.extract_strided_slice %47 {offsets = [0, 0, 64], sizes = [2, 16, 32], strides = [1, 1, 1]} : vector<2x16x192xbf16> to vector<2x16x32xbf16>
    "tpu.trace_start"() <{level = 10 : i32, message = "btd,bsd->bts"}> : () -> ()
    %cst_35 = arith.constant dense<0.000000e+00> : vector<2x16x16xf32>
    %95 = tpu.matmul %92, %93, %cst_35 {dimension_numbers = #tpu.dot_dimension_numbers<[2], [2], [1], [1], [0, 0, 0, 1, 1, 1], [0], [0]>} : vector<2x16x32xbf16>, vector<2x16x32xbf16>, vector<2x16x16xf32> -> vector<2x16x16xf32>
    %cst_36 = arith.constant -1.000000e+30 : f32
    "tpu.trace_stop"() : () -> ()
    %96 = vector.shape_cast %51 : vector<1x16x16xi1> to vector<1x16x16xi1>
    %97 = vector.broadcast %96 : vector<1x16x16xi1> to vector<2x16x16xi1>
    %98 = vector.broadcast %cst_36 : f32 to vector<2x16x16xf32>
    %99 = arith.select %97, %95, %98 : vector<2x16x16xi1>, vector<2x16x16xf32>
    %cst_37 = arith.constant dense<0xFF800000> : vector<2x16xf32>
    %100 = vector.multi_reduction <maximumf>, %99, %cst_37 [2] : vector<2x16x16xf32> to vector<2x16xf32>
    %101 = vector.shape_cast %100 : vector<2x16xf32> to vector<2x16x1xf32>
    %102 = vector.broadcast %101 : vector<2x16x1xf32> to vector<2x16x16xf32>
    %103 = arith.subf %99, %102 : vector<2x16x16xf32>
    %104 = math.exp %103 : vector<2x16x16xf32>
    %cst_38 = arith.constant dense<0.000000e+00> : vector<2x16xf32>
    %105 = vector.multi_reduction <add>, %104, %cst_38 [2] : vector<2x16x16xf32> to vector<2x16xf32>
    %106 = vector.shape_cast %105 : vector<2x16xf32> to vector<2x16x1xf32>
    %107 = tpu.reciprocal %106 {approx = true} : vector<2x16x1xf32> -> vector<2x16x1xf32>
    %108 = vector.broadcast %107 : vector<2x16x1xf32> to vector<2x16x16xf32>
    %109 = arith.mulf %104, %108 : vector<2x16x16xf32>
    %110 = arith.truncf %109 : vector<2x16x16xf32> to vector<2x16x16xbf16>
    "tpu.trace_start"() <{level = 10 : i32, message = "bts,bsd->btd"}> : () -> ()
    %cst_39 = arith.constant dense<0.000000e+00> : vector<2x16x32xf32>
    %111 = tpu.matmul %110, %94, %cst_39 {dimension_numbers = #tpu.dot_dimension_numbers<[2], [1], [1], [2], [0, 0, 0, 1, 1, 2], [0], [0]>} : vector<2x16x16xbf16>, vector<2x16x32xbf16>, vector<2x16x32xf32> -> vector<2x16x32xf32>
    "tpu.trace_stop"() : () -> ()
    %112 = vector.extract_strided_slice %43 {offsets = [0, 0, 96], sizes = [2, 16, 32], strides = [1, 1, 1]} : vector<2x16x192xbf16> to vector<2x16x32xbf16>
    %113 = vector.extract_strided_slice %45 {offsets = [0, 0, 96], sizes = [2, 16, 32], strides = [1, 1, 1]} : vector<2x16x192xbf16> to vector<2x16x32xbf16>
    %114 = vector.extract_strided_slice %47 {offsets = [0, 0, 96], sizes = [2, 16, 32], strides = [1, 1, 1]} : vector<2x16x192xbf16> to vector<2x16x32xbf16>
    "tpu.trace_start"() <{level = 10 : i32, message = "btd,bsd->bts"}> : () -> ()
    %cst_40 = arith.constant dense<0.000000e+00> : vector<2x16x16xf32>
    %115 = tpu.matmul %112, %113, %cst_40 {dimension_numbers = #tpu.dot_dimension_numbers<[2], [2], [1], [1], [0, 0, 0, 1, 1, 1], [0], [0]>} : vector<2x16x32xbf16>, vector<2x16x32xbf16>, vector<2x16x16xf32> -> vector<2x16x16xf32>
    %cst_41 = arith.constant -1.000000e+30 : f32
    "tpu.trace_stop"() : () -> ()
    %116 = vector.shape_cast %51 : vector<1x16x16xi1> to vector<1x16x16xi1>
    %117 = vector.broadcast %116 : vector<1x16x16xi1> to vector<2x16x16xi1>
    %118 = vector.broadcast %cst_41 : f32 to vector<2x16x16xf32>
    %119 = arith.select %117, %115, %118 : vector<2x16x16xi1>, vector<2x16x16xf32>
    %cst_42 = arith.constant dense<0xFF800000> : vector<2x16xf32>
    %120 = vector.multi_reduction <maximumf>, %119, %cst_42 [2] : vector<2x16x16xf32> to vector<2x16xf32>
    %121 = vector.shape_cast %120 : vector<2x16xf32> to vector<2x16x1xf32>
    %122 = vector.broadcast %121 : vector<2x16x1xf32> to vector<2x16x16xf32>
    %123 = arith.subf %119, %122 : vector<2x16x16xf32>
    %124 = math.exp %123 : vector<2x16x16xf32>
    %cst_43 = arith.constant dense<0.000000e+00> : vector<2x16xf32>
    %125 = vector.multi_reduction <add>, %124, %cst_43 [2] : vector<2x16x16xf32> to vector<2x16xf32>
    %126 = vector.shape_cast %125 : vector<2x16xf32> to vector<2x16x1xf32>
    %127 = tpu.reciprocal %126 {approx = true} : vector<2x16x1xf32> -> vector<2x16x1xf32>
    %128 = vector.broadcast %127 : vector<2x16x1xf32> to vector<2x16x16xf32>
    %129 = arith.mulf %124, %128 : vector<2x16x16xf32>
    %130 = arith.truncf %129 : vector<2x16x16xf32> to vector<2x16x16xbf16>
    "tpu.trace_start"() <{level = 10 : i32, message = "bts,bsd->btd"}> : () -> ()
    %cst_44 = arith.constant dense<0.000000e+00> : vector<2x16x32xf32>
    %131 = tpu.matmul %130, %114, %cst_44 {dimension_numbers = #tpu.dot_dimension_numbers<[2], [1], [1], [2], [0, 0, 0, 1, 1, 2], [0], [0]>} : vector<2x16x16xbf16>, vector<2x16x32xbf16>, vector<2x16x32xf32> -> vector<2x16x32xf32>
    "tpu.trace_stop"() : () -> ()
    %132 = vector.extract_strided_slice %43 {offsets = [0, 0, 128], sizes = [2, 16, 32], strides = [1, 1, 1]} : vector<2x16x192xbf16> to vector<2x16x32xbf16>
    %133 = vector.extract_strided_slice %45 {offsets = [0, 0, 128], sizes = [2, 16, 32], strides = [1, 1, 1]} : vector<2x16x192xbf16> to vector<2x16x32xbf16>
    %134 = vector.extract_strided_slice %47 {offsets = [0, 0, 128], sizes = [2, 16, 32], strides = [1, 1, 1]} : vector<2x16x192xbf16> to vector<2x16x32xbf16>
    "tpu.trace_start"() <{level = 10 : i32, message = "btd,bsd->bts"}> : () -> ()
    %cst_45 = arith.constant dense<0.000000e+00> : vector<2x16x16xf32>
    %135 = tpu.matmul %132, %133, %cst_45 {dimension_numbers = #tpu.dot_dimension_numbers<[2], [2], [1], [1], [0, 0, 0, 1, 1, 1], [0], [0]>} : vector<2x16x32xbf16>, vector<2x16x32xbf16>, vector<2x16x16xf32> -> vector<2x16x16xf32>
    %cst_46 = arith.constant -1.000000e+30 : f32
    "tpu.trace_stop"() : () -> ()
    %136 = vector.shape_cast %51 : vector<1x16x16xi1> to vector<1x16x16xi1>
    %137 = vector.broadcast %136 : vector<1x16x16xi1> to vector<2x16x16xi1>
    %138 = vector.broadcast %cst_46 : f32 to vector<2x16x16xf32>
    %139 = arith.select %137, %135, %138 : vector<2x16x16xi1>, vector<2x16x16xf32>
    %cst_47 = arith.constant dense<0xFF800000> : vector<2x16xf32>
    %140 = vector.multi_reduction <maximumf>, %139, %cst_47 [2] : vector<2x16x16xf32> to vector<2x16xf32>
    %141 = vector.shape_cast %140 : vector<2x16xf32> to vector<2x16x1xf32>
    %142 = vector.broadcast %141 : vector<2x16x1xf32> to vector<2x16x16xf32>
    %143 = arith.subf %139, %142 : vector<2x16x16xf32>
    %144 = math.exp %143 : vector<2x16x16xf32>
    %cst_48 = arith.constant dense<0.000000e+00> : vector<2x16xf32>
    %145 = vector.multi_reduction <add>, %144, %cst_48 [2] : vector<2x16x16xf32> to vector<2x16xf32>
    %146 = vector.shape_cast %145 : vector<2x16xf32> to vector<2x16x1xf32>
    %147 = tpu.reciprocal %146 {approx = true} : vector<2x16x1xf32> -> vector<2x16x1xf32>
    %148 = vector.broadcast %147 : vector<2x16x1xf32> to vector<2x16x16xf32>
    %149 = arith.mulf %144, %148 : vector<2x16x16xf32>
    %150 = arith.truncf %149 : vector<2x16x16xf32> to vector<2x16x16xbf16>
    "tpu.trace_start"() <{level = 10 : i32, message = "bts,bsd->btd"}> : () -> ()
    %cst_49 = arith.constant dense<0.000000e+00> : vector<2x16x32xf32>
    %151 = tpu.matmul %150, %134, %cst_49 {dimension_numbers = #tpu.dot_dimension_numbers<[2], [1], [1], [2], [0, 0, 0, 1, 1, 2], [0], [0]>} : vector<2x16x16xbf16>, vector<2x16x32xbf16>, vector<2x16x32xf32> -> vector<2x16x32xf32>
    "tpu.trace_stop"() : () -> ()
    %152 = vector.extract_strided_slice %43 {offsets = [0, 0, 160], sizes = [2, 16, 32], strides = [1, 1, 1]} : vector<2x16x192xbf16> to vector<2x16x32xbf16>
    %153 = vector.extract_strided_slice %45 {offsets = [0, 0, 160], sizes = [2, 16, 32], strides = [1, 1, 1]} : vector<2x16x192xbf16> to vector<2x16x32xbf16>
    %154 = vector.extract_strided_slice %47 {offsets = [0, 0, 160], sizes = [2, 16, 32], strides = [1, 1, 1]} : vector<2x16x192xbf16> to vector<2x16x32xbf16>
    "tpu.trace_start"() <{level = 10 : i32, message = "btd,bsd->bts"}> : () -> ()
    %cst_50 = arith.constant dense<0.000000e+00> : vector<2x16x16xf32>
    %155 = tpu.matmul %152, %153, %cst_50 {dimension_numbers = #tpu.dot_dimension_numbers<[2], [2], [1], [1], [0, 0, 0, 1, 1, 1], [0], [0]>} : vector<2x16x32xbf16>, vector<2x16x32xbf16>, vector<2x16x16xf32> -> vector<2x16x16xf32>
    %cst_51 = arith.constant -1.000000e+30 : f32
    "tpu.trace_stop"() : () -> ()
    %156 = vector.shape_cast %51 : vector<1x16x16xi1> to vector<1x16x16xi1>
    %157 = vector.broadcast %156 : vector<1x16x16xi1> to vector<2x16x16xi1>
    %158 = vector.broadcast %cst_51 : f32 to vector<2x16x16xf32>
    %159 = arith.select %157, %155, %158 : vector<2x16x16xi1>, vector<2x16x16xf32>
    %cst_52 = arith.constant dense<0xFF800000> : vector<2x16xf32>
    %160 = vector.multi_reduction <maximumf>, %159, %cst_52 [2] : vector<2x16x16xf32> to vector<2x16xf32>
    %161 = vector.shape_cast %160 : vector<2x16xf32> to vector<2x16x1xf32>
    %162 = vector.broadcast %161 : vector<2x16x1xf32> to vector<2x16x16xf32>
    %163 = arith.subf %159, %162 : vector<2x16x16xf32>
    %164 = math.exp %163 : vector<2x16x16xf32>
    %cst_53 = arith.constant dense<0.000000e+00> : vector<2x16xf32>
    %165 = vector.multi_reduction <add>, %164, %cst_53 [2] : vector<2x16x16xf32> to vector<2x16xf32>
    %166 = vector.shape_cast %165 : vector<2x16xf32> to vector<2x16x1xf32>
    %167 = tpu.reciprocal %166 {approx = true} : vector<2x16x1xf32> -> vector<2x16x1xf32>
    %168 = vector.broadcast %167 : vector<2x16x1xf32> to vector<2x16x16xf32>
    %169 = arith.mulf %164, %168 : vector<2x16x16xf32>
    %170 = arith.truncf %169 : vector<2x16x16xf32> to vector<2x16x16xbf16>
    "tpu.trace_start"() <{level = 10 : i32, message = "bts,bsd->btd"}> : () -> ()
    %cst_54 = arith.constant dense<0.000000e+00> : vector<2x16x32xf32>
    %171 = tpu.matmul %170, %154, %cst_54 {dimension_numbers = #tpu.dot_dimension_numbers<[2], [1], [1], [2], [0, 0, 0, 1, 1, 2], [0], [0]>} : vector<2x16x16xbf16>, vector<2x16x32xbf16>, vector<2x16x32xf32> -> vector<2x16x32xf32>
    "tpu.trace_stop"() : () -> ()
    %172 = tpu.concatenate %71, %91, %111, %131, %151, %171 in 2 : vector<2x16x32xf32>, vector<2x16x32xf32>, vector<2x16x32xf32>, vector<2x16x32xf32>, vector<2x16x32xf32>, vector<2x16x32xf32> -> vector<2x16x192xf32>
    %173 = vector.shape_cast %172 : vector<2x16x192xf32> to vector<32x192xf32>
    %174 = arith.truncf %173 : vector<32x192xf32> to vector<32x192xbf16>
    %c0_55 = arith.constant 0 : index
    %c0_56 = arith.constant 0 : index
    %175 = vector.load %arg10[%c0_55, %c0_56] : memref<192x192xbf16, #tpu.memory_space<vmem>>, vector<192x192xbf16>
    %cst_57 = arith.constant dense<0.000000e+00> : vector<32x192xf32>
    %176 = tpu.matmul %174, %175, %cst_57 {dimension_numbers = #tpu.dot_dimension_numbers<[1], [0], [0], [1], [0, 0, 1, 1], [], []>} : vector<32x192xbf16>, vector<192x192xbf16>, vector<32x192xf32> -> vector<32x192xf32>
    %c0_58 = arith.constant 0 : index
    %c0_59 = arith.constant 0 : index
    %177 = vector.load %arg11[%c0_58, %c0_59] : memref<1x192xf32, #tpu.memory_space<vmem>>, vector<1x192xf32>
    %178 = vector.broadcast %177 : vector<1x192xf32> to vector<32x192xf32>
    %179 = arith.addf %176, %178 : vector<32x192xf32>
    %180 = arith.addf %1, %179 : vector<32x192xf32>
    %c0_60 = arith.constant 0 : index
    %c0_61 = arith.constant 0 : index
    %181 = vector.load %arg12[%c0_60, %c0_61] : memref<1x192xf32, #tpu.memory_space<vmem>>, vector<1x192xf32>
    %c0_62 = arith.constant 0 : index
    %c0_63 = arith.constant 0 : index
    %182 = vector.load %arg13[%c0_62, %c0_63] : memref<1x192xf32, #tpu.memory_space<vmem>>, vector<1x192xf32>
    %cst_64 = arith.constant dense<0.000000e+00> : vector<32xf32>
    %183 = vector.multi_reduction <add>, %180, %cst_64 [1] : vector<32x192xf32> to vector<32xf32>
    %184 = vector.shape_cast %183 : vector<32xf32> to vector<32x1xf32>
    %cst_65 = arith.constant 1.920000e+02 : f32
    %185 = vector.broadcast %cst_65 : f32 to vector<32x1xf32>
    %186 = arith.divf %184, %185 : vector<32x1xf32>
    %187 = vector.broadcast %186 : vector<32x1xf32> to vector<32x192xf32>
    %188 = arith.subf %180, %187 : vector<32x192xf32>
    %189 = arith.mulf %188, %188 : vector<32x192xf32>
    %cst_66 = arith.constant dense<0.000000e+00> : vector<32xf32>
    %190 = vector.multi_reduction <add>, %189, %cst_66 [1] : vector<32x192xf32> to vector<32xf32>
    %191 = vector.shape_cast %190 : vector<32xf32> to vector<32x1xf32>
    %cst_67 = arith.constant 1.920000e+02 : f32
    %192 = vector.broadcast %cst_67 : f32 to vector<32x1xf32>
    %193 = arith.divf %191, %192 : vector<32x1xf32>
    %194 = vector.broadcast %186 : vector<32x1xf32> to vector<32x192xf32>
    %195 = arith.subf %180, %194 : vector<32x192xf32>
    %cst_68 = arith.constant 9.99999974E-6 : f32
    %196 = vector.broadcast %cst_68 : f32 to vector<32x1xf32>
    %197 = arith.addf %193, %196 : vector<32x1xf32>
    %198 = math.rsqrt %197 : vector<32x1xf32>
    %199 = vector.broadcast %198 : vector<32x1xf32> to vector<32x192xf32>
    %200 = arith.mulf %195, %199 : vector<32x192xf32>
    %201 = vector.broadcast %181 : vector<1x192xf32> to vector<32x192xf32>
    %202 = arith.mulf %200, %201 : vector<32x192xf32>
    %203 = vector.broadcast %182 : vector<1x192xf32> to vector<32x192xf32>
    %204 = arith.addf %202, %203 : vector<32x192xf32>
    %205 = arith.truncf %204 : vector<32x192xf32> to vector<32x192xbf16>
    %c0_69 = arith.constant 0 : index
    %c0_70 = arith.constant 0 : index
    %206 = vector.load %arg14[%c0_69, %c0_70] : memref<192x768xbf16, #tpu.memory_space<vmem>>, vector<192x768xbf16>
    %cst_71 = arith.constant dense<0.000000e+00> : vector<32x768xf32>
    %207 = tpu.matmul %205, %206, %cst_71 {dimension_numbers = #tpu.dot_dimension_numbers<[1], [0], [0], [1], [0, 0, 1, 1], [], []>} : vector<32x192xbf16>, vector<192x768xbf16>, vector<32x768xf32> -> vector<32x768xf32>
    %c0_72 = arith.constant 0 : index
    %c0_73 = arith.constant 0 : index
    %208 = vector.load %arg15[%c0_72, %c0_73] : memref<1x768xf32, #tpu.memory_space<vmem>>, vector<1x768xf32>
    %209 = vector.broadcast %208 : vector<1x768xf32> to vector<32x768xf32>
    %210 = arith.addf %207, %209 : vector<32x768xf32>
    %cst_74 = arith.constant 5.000000e-01 : f32
    %211 = vector.broadcast %cst_74 : f32 to vector<32x768xf32>
    %212 = arith.mulf %211, %210 : vector<32x768xf32>
    %cst_75 = arith.constant 4.471500e-02 : f32
    %213 = vector.broadcast %cst_75 : f32 to vector<32x768xf32>
    %214 = arith.mulf %213, %210 : vector<32x768xf32>
    %215 = arith.mulf %214, %210 : vector<32x768xf32>
    %216 = arith.mulf %215, %210 : vector<32x768xf32>
    %217 = arith.addf %210, %216 : vector<32x768xf32>
    %cst_76 = arith.constant 0.797884583 : f32
    %218 = vector.broadcast %cst_76 : f32 to vector<32x768xf32>
    %219 = arith.mulf %218, %217 : vector<32x768xf32>
    %220 = math.tanh %219 : vector<32x768xf32>
    %cst_77 = arith.constant 1.000000e+00 : f32
    %221 = vector.broadcast %cst_77 : f32 to vector<32x768xf32>
    %222 = arith.addf %221, %220 : vector<32x768xf32>
    %223 = arith.mulf %212, %222 : vector<32x768xf32>
    %224 = arith.truncf %223 : vector<32x768xf32> to vector<32x768xbf16>
    %c0_78 = arith.constant 0 : index
    %c0_79 = arith.constant 0 : index
    %225 = vector.load %arg16[%c0_78, %c0_79] : memref<768x192xbf16, #tpu.memory_space<vmem>>, vector<768x192xbf16>
    %cst_80 = arith.constant dense<0.000000e+00> : vector<32x192xf32>
    %226 = tpu.matmul %224, %225, %cst_80 {dimension_numbers = #tpu.dot_dimension_numbers<[1], [0], [0], [1], [0, 0, 1, 1], [], []>} : vector<32x768xbf16>, vector<768x192xbf16>, vector<32x192xf32> -> vector<32x192xf32>
    %c0_81 = arith.constant 0 : index
    %c0_82 = arith.constant 0 : index
    %227 = vector.load %arg17[%c0_81, %c0_82] : memref<1x192xf32, #tpu.memory_space<vmem>>, vector<1x192xf32>
    %228 = vector.broadcast %227 : vector<1x192xf32> to vector<32x192xf32>
    %229 = arith.addf %226, %228 : vector<32x192xf32>
    %230 = arith.addf %180, %229 : vector<32x192xf32>
    %231 = vector.shape_cast %230 : vector<32x192xf32> to vector<2x16x192xf32>
    %c0_83 = arith.constant 0 : index
    %c0_84 = arith.constant 0 : index
    %c0_85 = arith.constant 0 : index
    %232 = vector.load %arg18[%c0_83, %c0_84, %c0_85] : memref<2x16x192xf32, #tpu.memory_space<vmem>>, vector<2x16x192xf32>
    tpu.vector_store %arg18[%c0_83, %c0_84, %c0_85], %231 {strides = array<i32>} : memref<2x16x192xf32, #tpu.memory_space<vmem>>, vector<2x16x192xf32>,
    return
  }
  func.func @transform_0(%arg0: i32) -> (i32, i32, i32) {
    %c0_i32 = arith.constant 0 : i32
    %c0_i32_0 = arith.constant 0 : i32
    %c0_i32_1 = arith.constant 0 : i32
    return %arg0, %c0_i32, %c0_i32_0 : i32, i32, i32
  }
  func.func @transform_1(%arg0: i32) -> (i32, i32) {
    %c0_i32 = arith.constant 0 : i32
    %c0_i32_0 = arith.constant 0 : i32
    %c0_i32_1 = arith.constant 0 : i32
    return %c0_i32, %c0_i32_0 : i32, i32
  }
  func.func @transform_2(%arg0: i32) -> (i32, i32) {
    %c0_i32 = arith.constant 0 : i32
    %c0_i32_0 = arith.constant 0 : i32
    %c0_i32_1 = arith.constant 0 : i32
    return %c0_i32, %c0_i32_0 : i32, i32
  }
  func.func @transform_3(%arg0: i32) -> (i32, i32) {
    %c0_i32 = arith.constant 0 : i32
    %c0_i32_0 = arith.constant 0 : i32
    %c0_i32_1 = arith.constant 0 : i32
    return %c0_i32, %c0_i32_0 : i32, i32
  }
  func.func @transform_4(%arg0: i32) -> (i32, i32) {
    %c0_i32 = arith.constant 0 : i32
    %c0_i32_0 = arith.constant 0 : i32
    %c0_i32_1 = arith.constant 0 : i32
    return %c0_i32, %c0_i32_0 : i32, i32
  }
  func.func @transform_5(%arg0: i32) -> (i32, i32) {
    %c0_i32 = arith.constant 0 : i32
    %c0_i32_0 = arith.constant 0 : i32
    %c0_i32_1 = arith.constant 0 : i32
    return %c0_i32, %c0_i32_0 : i32, i32
  }
  func.func @transform_6(%arg0: i32) -> (i32, i32) {
    %c0_i32 = arith.constant 0 : i32
    %c0_i32_0 = arith.constant 0 : i32
    %c0_i32_1 = arith.constant 0 : i32
    return %c0_i32, %c0_i32_0 : i32, i32
  }
  func.func @transform_7(%arg0: i32) -> (i32, i32) {
    %c0_i32 = arith.constant 0 : i32
    %c0_i32_0 = arith.constant 0 : i32
    %c0_i32_1 = arith.constant 0 : i32
    return %c0_i32, %c0_i32_0 : i32, i32
  }
  func.func @transform_8(%arg0: i32) -> (i32, i32) {
    %c0_i32 = arith.constant 0 : i32
    %c0_i32_0 = arith.constant 0 : i32
    %c0_i32_1 = arith.constant 0 : i32
    return %c0_i32, %c0_i32_0 : i32, i32
  }
  func.func @transform_9(%arg0: i32) -> (i32, i32) {
    %c0_i32 = arith.constant 0 : i32
    %c0_i32_0 = arith.constant 0 : i32
    %c0_i32_1 = arith.constant 0 : i32
    return %c0_i32, %c0_i32_0 : i32, i32
  }
  func.func @transform_10(%arg0: i32) -> (i32, i32) {
    %c0_i32 = arith.constant 0 : i32
    %c0_i32_0 = arith.constant 0 : i32
    %c0_i32_1 = arith.constant 0 : i32
    return %c0_i32, %c0_i32_0 : i32, i32
  }
  func.func @transform_11(%arg0: i32) -> (i32, i32) {
    %c0_i32 = arith.constant 0 : i32
    %c0_i32_0 = arith.constant 0 : i32
    %c0_i32_1 = arith.constant 0 : i32
    return %c0_i32, %c0_i32_0 : i32, i32
  }
  func.func @transform_12(%arg0: i32) -> (i32, i32) {
    %c0_i32 = arith.constant 0 : i32
    %c0_i32_0 = arith.constant 0 : i32
    %c0_i32_1 = arith.constant 0 : i32
    return %c0_i32, %c0_i32_0 : i32, i32
  }
  func.func @transform_13(%arg0: i32) -> (i32, i32) {
    %c0_i32 = arith.constant 0 : i32
    %c0_i32_0 = arith.constant 0 : i32
    %c0_i32_1 = arith.constant 0 : i32
    return %c0_i32, %c0_i32_0 : i32, i32
  }
  func.func @transform_14(%arg0: i32) -> (i32, i32) {
    %c0_i32 = arith.constant 0 : i32
    %c0_i32_0 = arith.constant 0 : i32
    %c0_i32_1 = arith.constant 0 : i32
    return %c0_i32, %c0_i32_0 : i32, i32
  }
  func.func @transform_15(%arg0: i32) -> (i32, i32) {
    %c0_i32 = arith.constant 0 : i32
    %c0_i32_0 = arith.constant 0 : i32
    %c0_i32_1 = arith.constant 0 : i32
    return %c0_i32, %c0_i32_0 : i32, i32
  }
  func.func @transform_16(%arg0: i32) -> (i32, i32) {
    %c0_i32 = arith.constant 0 : i32
    %c0_i32_0 = arith.constant 0 : i32
    %c0_i32_1 = arith.constant 0 : i32
    return %c0_i32, %c0_i32_0 : i32, i32
  }
  func.func @transform_17(%arg0: i32) -> (i32, i32, i32) {
    %c0_i32 = arith.constant 0 : i32
    %c0_i32_0 = arith.constant 0 : i32
    %c0_i32_1 = arith.constant 0 : i32
    return %arg0, %c0_i32, %c0_i32_0 : i32, i32, i32
  }
}

</mosaic_0001>

<llo_original>
// kernel: tpu_custom_call.1
$region0: #{tpu_custom_call.1}
  #allocation0 [shape = 'u32[]', space=smem, size = 0x4, offset = 0x4, fixed_abs, tag = 'smem constant byte address 0x4 - core index']
  #allocation1 [shape = 'u32[144,128]{1,0:T(1,128)}', space=vmem, size = 0x12000, scoped, tag = 'internal scratch']
  %s0 = inlined_call_operand.hbm [shape: f32[2,16,192], index: 0, kind: input, shape index: {}]
  %s1 = inlined_call_operand.hbm [shape: f32[1,192], index: 1, kind: input, shape index: {}]
  %s2 = inlined_call_operand.hbm [shape: f32[1,192], index: 2, kind: input, shape index: {}]
  %s3 = inlined_call_operand.vmem [shape: bf16[192,192], index: 3, kind: input, shape index: {}]
  %s4 = inlined_call_operand.vmem [shape: f32[1,192], index: 4, kind: input, shape index: {}]
  %s5 = inlined_call_operand.vmem [shape: bf16[192,192], index: 5, kind: input, shape index: {}]
  %s6 = inlined_call_operand.vmem [shape: f32[1,192], index: 6, kind: input, shape index: {}]
  %s7 = inlined_call_operand.vmem [shape: bf16[192,192], index: 7, kind: input, shape index: {}]
  %s8 = inlined_call_operand.vmem [shape: f32[1,192], index: 8, kind: input, shape index: {}]
  %s9 = inlined_call_operand.vmem [shape: bf16[192,192], index: 9, kind: input, shape index: {}]
  %s10 = inlined_call_operand.vmem [shape: f32[1,192], index: 10, kind: input, shape index: {}]
  %s11 = inlined_call_operand.vmem [shape: f32[1,192], index: 11, kind: input, shape index: {}]
  %s12 = inlined_call_operand.vmem [shape: f32[1,192], index: 12, kind: input, shape index: {}]
  %s13 = inlined_call_operand.vmem [shape: bf16[192,768], index: 13, kind: input, shape index: {}]
  %s14 = inlined_call_operand.vmem [shape: f32[1,768], index: 14, kind: input, shape index: {}]
  %s15 = inlined_call_operand.vmem [shape: bf16[768,192], index: 15, kind: input, shape index: {}]
  %s16 = inlined_call_operand.vmem [shape: f32[1,192], index: 16, kind: input, shape index: {}]
  %s17 = inlined_call_operand.hbm [shape: f32[2,16,192], index: 17, kind: output, shape index: {}]
  %s18 = sld [smem:[#allocation0]]
  $region90: #{tpu_custom_call.1} parent=0
    _
  %s20 = ssub.s32 1, %s18
  %s21 = scalar_select 0, %s20, %s18
  $region1: #{tpu_custom_call.1} parent=0
    #allocation2 [shape = 'u8[32768]{0}', space=vmem, size = 0x8000, scoped, tag = 'input window, operand 0, single buffered']
    #allocation3 [shape = 's32[1]{0}', space=sflag, size = 0x4, scoped, tag = 'scoped memory for tpu_custom_call.1']
    #allocation4 [shape = 's32[1]{0}', space=sflag, size = 0x4, scoped, tag = 'scoped memory for tpu_custom_call.1']
    #allocation5 [shape = 'u8[1024]{0}', space=vmem, size = 0x400, scoped, tag = 'input window, operand 1, single buffered']
    #allocation6 [shape = 's32[1]{0}', space=sflag, size = 0x4, scoped, tag = 'scoped memory for tpu_custom_call.1']
    #allocation7 [shape = 'u8[1024]{0}', space=vmem, size = 0x400, scoped, tag = 'input window, operand 2, single buffered']
    #allocation8 [shape = 'u8[32768]{0}', space=vmem, size = 0x8000, scoped, tag = 'output window, operand 0, single buffered']
    %22 = vsyncpa [#allocation3], 0
    %23 = vsyncpa [#allocation6], 0
    %24 = vsyncpa [#allocation4], 0
    // Predicated region
    $region2: #{tpu_custom_call.1} parent=1 // pred_check
      _
    $region3: #{tpu_custom_call.1} parent=1 // pred_check_branch
      %26 = sbr.rel (0) target = $region5
    $region4: #{tpu_custom_call.1} parent=1 // pred_region
      %s28 = ssub.s32 1024, 1024
      %29 = vsyncadd [#allocation3], %s28
      %s30 = sshll.u32 [#allocation2], 4
      %s31 = int_to_ptr.vmem [resolvable:$true] %s30
      %36 = dma.hbm_to_vmem [thread:$0]  %s0, 1024, %s31, [#allocation3], 256, 256, 16
    $region5: #{tpu_custom_call.1} parent=1 // pred_fallthru
      _
    // Predicated region
    $region6: #{tpu_custom_call.1} parent=1 // pred_check
      _
    $region7: #{tpu_custom_call.1} parent=1 // pred_check_branch
      %38 = sbr.rel (0) target = $region9
    $region8: #{tpu_custom_call.1} parent=1 // pred_region
      %s40 = ssub.s32 32, 32
      %41 = vsyncadd [#allocation6], %s40
      %s43 = sshll.u32 [#allocation5], 4
      %s44 = int_to_ptr.vmem [resolvable:$true] %s43
      %46 = dma.hbm_to_vmem [thread:$0]  %s1, 32, %s44, [#allocation6]
    $region9: #{tpu_custom_call.1} parent=1 // pred_fallthru
      _
    // Predicated region
    $region10: #{tpu_custom_call.1} parent=1 // pred_check
      _
    $region11: #{tpu_custom_call.1} parent=1 // pred_check_branch
      %48 = sbr.rel (0) target = $region13
    $region12: #{tpu_custom_call.1} parent=1 // pred_region
      %s50 = ssub.s32 32, 32
      %51 = vsyncadd [#allocation6], %s50
      %s53 = sshll.u32 [#allocation7], 4
      %s54 = int_to_ptr.vmem [resolvable:$true] %s53
      %56 = dma.hbm_to_vmem [thread:$0]  %s2, 32, %s54, [#allocation6]
    $region13: #{tpu_custom_call.1} parent=1 // pred_fallthru
      _
    // Predicated region
    $region14: #{tpu_custom_call.1} parent=1 // pred_check
      _
    $region15: #{tpu_custom_call.1} parent=1 // pred_check_branch
      %58 = sbr.rel (0) target = $region17
    $region16: #{tpu_custom_call.1} parent=1 // pred_region
      _
    $region17: #{tpu_custom_call.1} parent=1 // pred_fallthru
      _
    // Predicated region
    $region18: #{tpu_custom_call.1} parent=1 // pred_check
      _
    $region19: #{tpu_custom_call.1} parent=1 // pred_check_branch
      %60 = sbr.rel (0) target = $region21
    $region20: #{tpu_custom_call.1} parent=1 // pred_region
      _
    $region21: #{tpu_custom_call.1} parent=1 // pred_fallthru
      _
    // Predicated region
    $region22: #{tpu_custom_call.1} parent=1 // pred_check
      _
    $region23: #{tpu_custom_call.1} parent=1 // pred_check_branch
      %62 = sbr.rel (0) target = $region25
    $region24: #{tpu_custom_call.1} parent=1 // pred_region
      _
    $region25: #{tpu_custom_call.1} parent=1 // pred_fallthru
      _
    // Predicated region
    $region26: #{tpu_custom_call.1} parent=1 // pred_check
      _
    $region27: #{tpu_custom_call.1} parent=1 // pred_check_branch
      %64 = sbr.rel (0) target = $region29
    $region28: #{tpu_custom_call.1} parent=1 // pred_region
      _
    $region29: #{tpu_custom_call.1} parent=1 // pred_fallthru
      _
    // Predicated region
    $region30: #{tpu_custom_call.1} parent=1 // pred_check
      _
    $region31: #{tpu_custom_call.1} parent=1 // pred_check_branch
      %66 = sbr.rel (0) target = $region33
    $region32: #{tpu_custom_call.1} parent=1 // pred_region
      _
    $region33: #{tpu_custom_call.1} parent=1 // pred_fallthru
      _
    // Predicated region
    $region34: #{tpu_custom_call.1} parent=1 // pred_check
      _
    $region35: #{tpu_custom_call.1} parent=1 // pred_check_branch
      %68 = sbr.rel (0) target = $region37
    $region36: #{tpu_custom_call.1} parent=1 // pred_region
      _
    $region37: #{tpu_custom_call.1} parent=1 // pred_fallthru
      _
    // Predicated region
    $region38: #{tpu_custom_call.1} parent=1 // pred_check
      _
    $region39: #{tpu_custom_call.1} parent=1 // pred_check_branch
      %70 = sbr.rel (0) target = $region41
    $region40: #{tpu_custom_call.1} parent=1 // pred_region
      _
    $region41: #{tpu_custom_call.1} parent=1 // pred_fallthru
      _
    // Predicated region
    $region42: #{tpu_custom_call.1} parent=1 // pred_check
      _
    $region43: #{tpu_custom_call.1} parent=1 // pred_check_branch
      %72 = sbr.rel (0) target = $region45
    $region44: #{tpu_custom_call.1} parent=1 // pred_region
      _
    $region45: #{tpu_custom_call.1} parent=1 // pred_fallthru
      _
    // Predicated region
    $region46: #{tpu_custom_call.1} parent=1 // pred_check
      _
    $region47: #{tpu_custom_call.1} parent=1 // pred_check_branch
      %74 = sbr.rel (0) target = $region49
    $region48: #{tpu_custom_call.1} parent=1 // pred_region
      _
    $region49: #{tpu_custom_call.1} parent=1 // pred_fallthru
      _
    // Predicated region
    $region50: #{tpu_custom_call.1} parent=1 // pred_check
      _
    $region51: #{tpu_custom_call.1} parent=1 // pred_check_branch
      %76 = sbr.rel (0) target = $region53
    $region52: #{tpu_custom_call.1} parent=1 // pred_region
      _
    $region53: #{tpu_custom_call.1} parent=1 // pred_fallthru
      _
    // Predicated region
    $region54: #{tpu_custom_call.1} parent=1 // pred_check
      _
    $region55: #{tpu_custom_call.1} parent=1 // pred_check_branch
      %78 = sbr.rel (0) target = $region57
    $region56: #{tpu_custom_call.1} parent=1 // pred_region
      _
    $region57: #{tpu_custom_call.1} parent=1 // pred_fallthru
      _
    // Predicated region
    $region58: #{tpu_custom_call.1} parent=1 // pred_check
      _
    $region59: #{tpu_custom_call.1} parent=1 // pred_check_branch
      %80 = sbr.rel (0) target = $region61
    $region60: #{tpu_custom_call.1} parent=1 // pred_region
      _
    $region61: #{tpu_custom_call.1} parent=1 // pred_fallthru
      _
    // Predicated region
    $region62: #{tpu_custom_call.1} parent=1 // pred_check
      _
    $region63: #{tpu_custom_call.1} parent=1 // pred_check_branch
      %82 = sbr.rel (0) target = $region65
    $region64: #{tpu_custom_call.1} parent=1 // pred_region
      _
    $region65: #{tpu_custom_call.1} parent=1 // pred_fallthru
      _
    // Predicated region
    $region66: #{tpu_custom_call.1} parent=1 // pred_check
      _
    $region67: #{tpu_custom_call.1} parent=1 // pred_check_branch
      %84 = sbr.rel (0) target = $region69
    $region68: #{tpu_custom_call.1} parent=1 // pred_region
      _
    $region69: #{tpu_custom_call.1} parent=1 // pred_fallthru
      _
    // Predicated region
    $region70: #{tpu_custom_call.1} parent=1 // pred_check
      _
    $region71: #{tpu_custom_call.1} parent=1 // pred_check_branch
      %86 = sbr.rel (0) target = $region73
    $region72: #{tpu_custom_call.1} parent=1 // pred_region
      %87 = dma.done [#allocation3], 1024
    $region73: #{tpu_custom_call.1} parent=1 // pred_fallthru
      _
    // Predicated region
    $region74: #{tpu_custom_call.1} parent=1 // pred_check
      _
    $region75: #{tpu_custom_call.1} parent=1 // pred_check_branch
      %89 = sbr.rel (0) target = $region77
    $region76: #{tpu_custom_call.1} parent=1 // pred_region
      %90 = dma.done [#allocation6], 32
    $region77: #{tpu_custom_call.1} parent=1 // pred_fallthru
      _
    // Predicated region
    $region78: #{tpu_custom_call.1} parent=1 // pred_check
      _
    $region79: #{tpu_custom_call.1} parent=1 // pred_check_branch
      %92 = sbr.rel (0) target = $region81
    $region80: #{tpu_custom_call.1} parent=1 // pred_region
      %93 = dma.done [#allocation6], 32
    $region81: #{tpu_custom_call.1} parent=1 // pred_fallthru
      _
    %v95 = vld [vmem:[#allocation2] sm:$0xff]
    %v96 = vld [vmem:[#allocation2 + $0x8] sm:$0xff]
    %v97 = vld [vmem:[#allocation2 + $0x10] sm:$0xff]
    %v98 = vld [vmem:[#allocation2 + $0x18] sm:$0xff]
    %v99 = vld [vmem:[#allocation2 + $0x20] sm:$0xff]
    %v100 = vld [vmem:[#allocation2 + $0x28] sm:$0xff]
    %v101 = vld [vmem:[#allocation2 + $0x30] sm:$0xff]
    %v102 = vld [vmem:[#allocation2 + $0x38] sm:$0xff]
    %v103 = vld [vmem:[#allocation5] sm:$0x3]
    %v104 = vld [vmem:[#allocation7] sm:$0x3]
    %vm105 = vcmask 523264
    %v106 = vsel %vm105, %v96, 0.0
    %v107 = vadd.f32 %v95, %v106
    %108 = vadd.xlane.f32.xlu0 %v107
    %v109 = vpop.xlane.xlu0 %108
    %v110 = vsel %vm105, %v98, 0.0
    %v111 = vadd.f32 %v97, %v110
    %112 = vadd.xlane.f32.xlu0 %v111
    %v113 = vpop.xlane.xlu0 %112
    %v114 = vsel %vm105, %v100, 0.0
    %v115 = vadd.f32 %v99, %v114
    %116 = vadd.xlane.f32.xlu0 %v115
    %v117 = vpop.xlane.xlu0 %116
    %v118 = vsel %vm105, %v102, 0.0
    %v119 = vadd.f32 %v101, %v118
    %120 = vadd.xlane.f32.xlu0 %v119
    %v121 = vpop.xlane.xlu0 %120
    %v122 = vrcp.pop 192.0
    %v123 = vmul.f32 %v109, %v122
    %v124 = vmul.f32 %v113, %v122
    %v125 = vmul.f32 %v117, %v122
    %v126 = vmul.f32 %v121, %v122
    %v127 = vsub.f32 %v95, %v123
    %v128 = vsub.f32 %v96, %v123
    %v129 = vsub.f32 %v97, %v124
    %v130 = vsub.f32 %v98, %v124
    %v131 = vsub.f32 %v99, %v125
    %v132 = vsub.f32 %v100, %v125
    %v133 = vsub.f32 %v101, %v126
    %v134 = vsub.f32 %v102, %v126
    %v135 = vmul.f32 %v127, %v127
    %v136 = vmul.f32 %v128, %v128
    %v137 = vmul.f32 %v129, %v129
    %v138 = vmul.f32 %v130, %v130
    %v139 = vmul.f32 %v131, %v131
    %v140 = vmul.f32 %v132, %v132
    %v141 = vmul.f32 %v133, %v133
    %v142 = vmul.f32 %v134, %v134
    %v143 = vsel %vm105, %v136, 0.0
    %v144 = vadd.f32 %v135, %v143
    %145 = vadd.xlane.f32.xlu0 %v144
    %v146 = vpop.xlane.xlu0 %145
    %v147 = vsel %vm105, %v138, 0.0
    %v148 = vadd.f32 %v137, %v147
    %149 = vadd.xlane.f32.xlu0 %v148
    %v150 = vpop.xlane.xlu0 %149
    %v151 = vsel %vm105, %v140, 0.0
    %v152 = vadd.f32 %v139, %v151
    %153 = vadd.xlane.f32.xlu0 %v152
    %v154 = vpop.xlane.xlu0 %153
    %v155 = vsel %vm105, %v142, 0.0
    %v156 = vadd.f32 %v141, %v155
    %157 = vadd.xlane.f32.xlu0 %v156
    %v158 = vpop.xlane.xlu0 %157
    %v159 = vmul.f32 %v146, %v122
    %v160 = vmul.f32 %v150, %v122
    %v161 = vmul.f32 %v154, %v122
    %v162 = vmul.f32 %v158, %v122
    %v163 = vadd.f32 %v159, 1e-05
    %v164 = vadd.f32 %v160, 1e-05
    %v165 = vadd.f32 %v161, 1e-05
    %v166 = vadd.f32 %v162, 1e-05
    %v167 = vrsqrt.pop %v163
    %v168 = vrsqrt.pop %v164
    %v169 = vrsqrt.pop %v165
    %v170 = vrsqrt.pop %v166
    %v171 = vmul.f32 %v127, %v167
    %v172 = vmul.f32 %v128, %v167
    %v173 = vmul.f32 %v129, %v168
    %v174 = vmul.f32 %v130, %v168
    %v175 = vmul.f32 %v131, %v169
    %v176 = vmul.f32 %v132, %v169
    %v177 = vmul.f32 %v133, %v170
    %v178 = vmul.f32 %v134, %v170
    %v180 = vlaneseq
    %v181 = vshrl.u32 %v180, 7
    %v182 = vsub.s32 0, %v181
    %v183 = vrot.slane %v103, %v182
    %v184 = vlaneseq
    %v185 = vshrl.u32 %v184, 7
    %v186 = vsub.s32 1, %v185
    %v187 = vrot.slane %v103, %v186
    %v190 = vmul.f32 %v171, %v183
    %v191 = vmul.f32 %v172, %v187
    %v192 = vmul.f32 %v173, %v183
    %v193 = vmul.f32 %v174, %v187
    %v194 = vmul.f32 %v175, %v183
    %v195 = vmul.f32 %v176, %v187
    %v196 = vmul.f32 %v177, %v183
    %v197 = vmul.f32 %v178, %v187
    %v199 = vlaneseq
    %v200 = vshrl.u32 %v199, 7
    %v201 = vsub.s32 0, %v200
    %v202 = vrot.slane %v104, %v201
    %v203 = vlaneseq
    %v204 = vshrl.u32 %v203, 7
    %v205 = vsub.s32 1, %v204
    %v206 = vrot.slane %v104, %v205
    %v209 = vadd.f32 %v190, %v202
    %v210 = vadd.f32 %v191, %v206
    %v211 = vadd.f32 %v192, %v202
    %v212 = vadd.f32 %v193, %v206
    %v213 = vadd.f32 %v194, %v202
    %v214 = vadd.f32 %v195, %v206
    %v215 = vadd.f32 %v196, %v202
    %v216 = vadd.f32 %v197, %v206
    %v217 = vpack.c.bf16 %v211, %v209
    %v218 = vpack.c.bf16 %v212, %v210
    %v219 = vpack.c.bf16 %v215, %v213
    %v220 = vpack.c.bf16 %v216, %v214
    %v221 = vld [vmem:[%s3] sm:$0xff]
    %v222 = vld [vmem:[%s3 + $0x8] sm:$0xff]
    %v223 = vld [vmem:[%s3 + $0x10] sm:$0xff]
    %v224 = vld [vmem:[%s3 + $0x18] sm:$0xff]
    %v225 = vld [vmem:[%s3 + $0x20] sm:$0xff]
    %v226 = vld [vmem:[%s3 + $0x28] sm:$0xff]
    %v227 = vld [vmem:[%s3 + $0x30] sm:$0xff]
    %v228 = vld [vmem:[%s3 + $0x38] sm:$0xff]
    %v229 = vld [vmem:[%s3 + $0x40] sm:$0xff]
    %v230 = vld [vmem:[%s3 + $0x48] sm:$0xff]
    %v231 = vld [vmem:[%s3 + $0x50] sm:$0xff]
    %v232 = vld [vmem:[%s3 + $0x58] sm:$0xff]
    %v233 = vld [vmem:[%s3 + $0x60] sm:$0xff]
    %v234 = vld [vmem:[%s3 + $0x68] sm:$0xff]
    %v235 = vld [vmem:[%s3 + $0x70] sm:$0xff]
    %v236 = vld [vmem:[%s3 + $0x78] sm:$0xff]
    %v237 = vld [vmem:[%s3 + $0x80] sm:$0xff]
    %v238 = vld [vmem:[%s3 + $0x88] sm:$0xff]
    %v239 = vld [vmem:[%s3 + $0x90] sm:$0xff]
    %v240 = vld [vmem:[%s3 + $0x98] sm:$0xff]
    %v241 = vld [vmem:[%s3 + $0xa0] sm:$0xff]
    %v242 = vld [vmem:[%s3 + $0xa8] sm:$0xff]
    %v243 = vld [vmem:[%s3 + $0xb0] sm:$0xff]
    %v244 = vld [vmem:[%s3 + $0xb8] sm:$0xff]
    %v245 = vld [vmem:[%s4] sm:$0x3]
    %v247 = vlaneseq
    %v248 = vshrl.u32 %v247, 7
    %v249 = vsub.s32 0, %v248
    %v250 = vrot.slane %v245, %v249
    %v251 = vlaneseq
    %v252 = vshrl.u32 %v251, 7
    %v253 = vsub.s32 1, %v252
    %v254 = vrot.slane %v245, %v253
    %v281 = vunpack.c.l.b16 %v221
    %v282 = vunpack.c.h.b16 %v221
    %v283 = vunpack.c.l.b16 %v222
    %v284 = vunpack.c.h.b16 %v222
    %v285 = vunpack.c.l.b16 %v223
    %v286 = vunpack.c.h.b16 %v223
    %v287 = vunpack.c.l.b16 %v224
    %v288 = vunpack.c.h.b16 %v224
    %v289 = vunpack.c.l.b16 %v225
    %v290 = vunpack.c.h.b16 %v225
    %v291 = vunpack.c.l.b16 %v226
    %v292 = vunpack.c.h.b16 %v226
    %v293 = vunpack.c.l.b16 %v227
    %v294 = vunpack.c.h.b16 %v227
    %v295 = vunpack.c.l.b16 %v228
    %v296 = vunpack.c.h.b16 %v228
    %v297 = vunpack.c.l.b16 %v229
    %v298 = vunpack.c.h.b16 %v229
    %v299 = vunpack.c.l.b16 %v230
    %v300 = vunpack.c.h.b16 %v230
    %v301 = vunpack.c.l.b16 %v231
    %v302 = vunpack.c.h.b16 %v231
    %v303 = vunpack.c.l.b16 %v232
    %v304 = vunpack.c.h.b16 %v232
    %v305 = vunpack.c.l.b16 %v233
    %v306 = vunpack.c.h.b16 %v233
    %v307 = vunpack.c.l.b16 %v234
    %v308 = vunpack.c.h.b16 %v234
    %v309 = vunpack.c.l.b16 %v235
    %v310 = vunpack.c.h.b16 %v235
    %v311 = vunpack.c.l.b16 %v236
    %v312 = vunpack.c.h.b16 %v236
    %v313 = vunpack.c.l.b16 %v237
    %v314 = vunpack.c.h.b16 %v237
    %v315 = vunpack.c.l.b16 %v238
    %v316 = vunpack.c.h.b16 %v238
    %v317 = vunpack.c.l.b16 %v239
    %v318 = vunpack.c.h.b16 %v239
    %v319 = vunpack.c.l.b16 %v240
    %v320 = vunpack.c.h.b16 %v240
    %v321 = vunpack.c.l.b16 %v241
    %v322 = vunpack.c.h.b16 %v241
    %v323 = vunpack.c.l.b16 %v242
    %v324 = vunpack.c.h.b16 %v242
    %v325 = vunpack.c.l.b16 %v243
    %v326 = vunpack.c.h.b16 %v243
    %v327 = vunpack.c.l.b16 %v244
    %v328 = vunpack.c.h.b16 %v244
    %v329 = vpack.c.b16 %v283, %v281
    %v330 = vpack.c.b16 %v284, %v282
    %v331 = vpack.c.b16 %v287, %v285
    %v332 = vpack.c.b16 %v288, %v286
    %v333 = vpack.c.b16 %v291, %v289
    %v334 = vpack.c.b16 %v292, %v290
    %v335 = vpack.c.b16 %v295, %v293
    %v336 = vpack.c.b16 %v296, %v294
    %v337 = vpack.c.b16 %v299, %v297
    %v338 = vpack.c.b16 %v300, %v298
    %v339 = vpack.c.b16 %v303, %v301
    %v340 = vpack.c.b16 %v304, %v302
    %v341 = vpack.c.b16 %v307, %v305
    %v342 = vpack.c.b16 %v308, %v306
    %v343 = vpack.c.b16 %v311, %v309
    %v344 = vpack.c.b16 %v312, %v310
    %v345 = vpack.c.b16 %v315, %v313
    %v346 = vpack.c.b16 %v316, %v314
    %v347 = vpack.c.b16 %v319, %v317
    %v348 = vpack.c.b16 %v320, %v318
    %v349 = vpack.c.b16 %v323, %v321
    %v350 = vpack.c.b16 %v324, %v322
    %v351 = vpack.c.b16 %v327, %v325
    %v352 = vpack.c.b16 %v328, %v326
    %v378 = vsel %vm105, %v218, 0
    %v381 = vsel %vm105, %v220, 0
    %383 = vmatprep.subr.bf16.mxu0 %v330
    %384 = vmatpush1.bf16.msra.mxu0 %v329
    %385 = vmatprep.subr.bf16.mxu0 %v332
    %386 = vmatpush1.bf16.msra.mxu0 %v331
    %387 = vmatprep.subr.bf16.mxu0 %v334
    %388 = vmatpush1.bf16.msra.mxu0 %v333
    %389 = vmatprep.subr.bf16.mxu0 %v336
    %390 = vmatpush1.bf16.msra.mxu0 %v335
    %391 = vmatprep.subr.bf16.mxu0 %v338
    %392 = vmatpush1.bf16.msra.mxu0 %v337
    %393 = vmatprep.subr.bf16.mxu0 %v340
    %394 = vmatpush1.bf16.msra.mxu0 %v339
    %395 = vmatprep.subr.bf16.mxu0 %v342
    %396 = vmatpush1.bf16.msra.mxu0 %v341
    %397 = vmatprep.subr.bf16.mxu0 %v344
    %398 = vmatpush1.bf16.msra.mxu0 %v343
    %399 = vmatprep.subr.bf16.mxu0 %v346
    %400 = vmatpush1.bf16.msra.mxu0 %v345
    %401 = vmatprep.subr.bf16.mxu0 %v348
    %402 = vmatpush1.bf16.msra.mxu0 %v347
    %403 = vmatprep.subr.bf16.mxu0 %v350
    %404 = vmatpush1.bf16.msra.mxu0 %v349
    %405 = vmatprep.subr.bf16.mxu0 %v352
    %406 = vmatpush1.bf16.msra.mxu0 %v351
    %407 = vmatprep.subr.bf16.mxu0 0
    %408 = vmatpush1.bf16.msra.mxu0 0
    %409 = vmatprep.subr.bf16.mxu0 0
    %410 = vmatpush1.bf16.msra.mxu0 0
    %411 = vmatprep.subr.bf16.mxu0 0
    %412 = vmatpush1.bf16.msra.mxu0 0
    %413 = vmatprep.subr.bf16.mxu0 0
    %414 = vmatpush1.bf16.msra.mxu0 0
    %415 = vmatprep.mubr.bf16.mxu0 %v378
    %416 = vmatmul.mubr.bf16.gmra.mrb[0].mxu0 %v217
    %v417 = vpop.f32.mrb[0].mxu0
    %v418 = vadd.f32 %v250, %v417
    %v419 = vpop.f32.mrb[0].mxu0
    %v420 = vadd.f32 %v254, %v419
    %v421 = vpop.f32.mrb[0].mxu0
    %v422 = vadd.f32 %v250, %v421
    %v423 = vpop.f32.mrb[0].mxu0
    %v424 = vadd.f32 %v254, %v423
    %425 = vmatprep.mubr.bf16.mxu0 %v381
    %426 = vmatmul.mubr.bf16.gmra.mrb[0].mxu0 %v219
    %v427 = vpop.f32.mrb[0].mxu0
    %v428 = vadd.f32 %v250, %v427
    %v429 = vpop.f32.mrb[0].mxu0
    %v430 = vadd.f32 %v254, %v429
    %v431 = vpop.f32.mrb[0].mxu0
    %v432 = vadd.f32 %v250, %v431
    %v433 = vpop.f32.mrb[0].mxu0
    %v434 = vadd.f32 %v254, %v433
    %435 = vdwg.mxu0
    %v436 = vld [vmem:[%s5] sm:$0xff]
    %v437 = vld [vmem:[%s5 + $0x8] sm:$0xff]
    %v438 = vld [vmem:[%s5 + $0x10] sm:$0xff]
    %v439 = vld [vmem:[%s5 + $0x18] sm:$0xff]
    %v440 = vld [vmem:[%s5 + $0x20] sm:$0xff]
    %v441 = vld [vmem:[%s5 + $0x28] sm:$0xff]
    %v442 = vld [vmem:[%s5 + $0x30] sm:$0xff]
    %v443 = vld [vmem:[%s5 + $0x38] sm:$0xff]
    %v444 = vld [vmem:[%s5 + $0x40] sm:$0xff]
    %v445 = vld [vmem:[%s5 + $0x48] sm:$0xff]
    %v446 = vld [vmem:[%s5 + $0x50] sm:$0xff]
    %v447 = vld [vmem:[%s5 + $0x58] sm:$0xff]
    %v448 = vld [vmem:[%s5 + $0x60] sm:$0xff]
    %v449 = vld [vmem:[%s5 + $0x68] sm:$0xff]
    %v450 = vld [vmem:[%s5 + $0x70] sm:$0xff]
    %v451 = vld [vmem:[%s5 + $0x78] sm:$0xff]
    %v452 = vld [vmem:[%s5 + $0x80] sm:$0xff]
    %v453 = vld [vmem:[%s5 + $0x88] sm:$0xff]
    %v454 = vld [vmem:[%s5 + $0x90] sm:$0xff]
    %v455 = vld [vmem:[%s5 + $0x98] sm:$0xff]
    %v456 = vld [vmem:[%s5 + $0xa0] sm:$0xff]
    %v457 = vld [vmem:[%s5 + $0xa8] sm:$0xff]
    %v458 = vld [vmem:[%s5 + $0xb0] sm:$0xff]
    %v459 = vld [vmem:[%s5 + $0xb8] sm:$0xff]
    %v460 = vld [vmem:[%s6] sm:$0x3]
    %v462 = vlaneseq
    %v463 = vshrl.u32 %v462, 7
    %v464 = vsub.s32 0, %v463
    %v465 = vrot.slane %v460, %v464
    %v466 = vlaneseq
    %v467 = vshrl.u32 %v466, 7
    %v468 = vsub.s32 1, %v467
    %v469 = vrot.slane %v460, %v468
    %v496 = vunpack.c.l.b16 %v436
    %v497 = vunpack.c.h.b16 %v436
    %v498 = vunpack.c.l.b16 %v437
    %v499 = vunpack.c.h.b16 %v437
    %v500 = vunpack.c.l.b16 %v438
    %v501 = vunpack.c.h.b16 %v438
    %v502 = vunpack.c.l.b16 %v439
    %v503 = vunpack.c.h.b16 %v439
    %v504 = vunpack.c.l.b16 %v440
    %v505 = vunpack.c.h.b16 %v440
    %v506 = vunpack.c.l.b16 %v441
    %v507 = vunpack.c.h.b16 %v441
    %v508 = vunpack.c.l.b16 %v442
    %v509 = vunpack.c.h.b16 %v442
    %v510 = vunpack.c.l.b16 %v443
    %v511 = vunpack.c.h.b16 %v443
    %v512 = vunpack.c.l.b16 %v444
    %v513 = vunpack.c.h.b16 %v444
    %v514 = vunpack.c.l.b16 %v445
    %v515 = vunpack.c.h.b16 %v445
    %v516 = vunpack.c.l.b16 %v446
    %v517 = vunpack.c.h.b16 %v446
    %v518 = vunpack.c.l.b16 %v447
    %v519 = vunpack.c.h.b16 %v447
    %v520 = vunpack.c.l.b16 %v448
    %v521 = vunpack.c.h.b16 %v448
    %v522 = vunpack.c.l.b16 %v449
    %v523 = vunpack.c.h.b16 %v449
    %v524 = vunpack.c.l.b16 %v450
    %v525 = vunpack.c.h.b16 %v450
    %v526 = vunpack.c.l.b16 %v451
    %v527 = vunpack.c.h.b16 %v451
    %v528 = vunpack.c.l.b16 %v452
    %v529 = vunpack.c.h.b16 %v452
    %v530 = vunpack.c.l.b16 %v453
    %v531 = vunpack.c.h.b16 %v453
    %v532 = vunpack.c.l.b16 %v454
    %v533 = vunpack.c.h.b16 %v454
    %v534 = vunpack.c.l.b16 %v455
    %v535 = vunpack.c.h.b16 %v455
    %v536 = vunpack.c.l.b16 %v456
    %v537 = vunpack.c.h.b16 %v456
    %v538 = vunpack.c.l.b16 %v457
    %v539 = vunpack.c.h.b16 %v457
    %v540 = vunpack.c.l.b16 %v458
    %v541 = vunpack.c.h.b16 %v458
    %v542 = vunpack.c.l.b16 %v459
    %v543 = vunpack.c.h.b16 %v459
    %v544 = vpack.c.b16 %v498, %v496
    %v545 = vpack.c.b16 %v499, %v497
    %v546 = vpack.c.b16 %v502, %v500
    %v547 = vpack.c.b16 %v503, %v501
    %v548 = vpack.c.b16 %v506, %v504
    %v549 = vpack.c.b16 %v507, %v505
    %v550 = vpack.c.b16 %v510, %v508
    %v551 = vpack.c.b16 %v511, %v509
    %v552 = vpack.c.b16 %v514, %v512
    %v553 = vpack.c.b16 %v515, %v513
    %v554 = vpack.c.b16 %v518, %v516
    %v555 = vpack.c.b16 %v519, %v517
    %v556 = vpack.c.b16 %v522, %v520
    %v557 = vpack.c.b16 %v523, %v521
    %v558 = vpack.c.b16 %v526, %v524
    %v559 = vpack.c.b16 %v527, %v525
    %v560 = vpack.c.b16 %v530, %v528
    %v561 = vpack.c.b16 %v531, %v529
    %v562 = vpack.c.b16 %v534, %v532
    %v563 = vpack.c.b16 %v535, %v533
    %v564 = vpack.c.b16 %v538, %v536
    %v565 = vpack.c.b16 %v539, %v537
    %v566 = vpack.c.b16 %v542, %v540
    %v567 = vpack.c.b16 %v543, %v541
    %592 = vmatprep.subr.bf16.mxu0 %v545
    %593 = vmatpush1.bf16.msra.mxu0 %v544
    %594 = vmatprep.subr.bf16.mxu0 %v547
    %595 = vmatpush1.bf16.msra.mxu0 %v546
    %596 = vmatprep.subr.bf16.mxu0 %v549
    %597 = vmatpush1.bf16.msra.mxu0 %v548
    %598 = vmatprep.subr.bf16.mxu0 %v551
    %599 = vmatpush1.bf16.msra.mxu0 %v550
    %600 = vmatprep.subr.bf16.mxu0 %v553
    %601 = vmatpush1.bf16.msra.mxu0 %v552
    %602 = vmatprep.subr.bf16.mxu0 %v555
    %603 = vmatpush1.bf16.msra.mxu0 %v554
    %604 = vmatprep.subr.bf16.mxu0 %v557
    %605 = vmatpush1.bf16.msra.mxu0 %v556
    %606 = vmatprep.subr.bf16.mxu0 %v559
    %607 = vmatpush1.bf16.msra.mxu0 %v558
    %608 = vmatprep.subr.bf16.mxu0 %v561
    %609 = vmatpush1.bf16.msra.mxu0 %v560
    %610 = vmatprep.subr.bf16.mxu0 %v563
    %611 = vmatpush1.bf16.msra.mxu0 %v562
    %612 = vmatprep.subr.bf16.mxu0 %v565
    %613 = vmatpush1.bf16.msra.mxu0 %v564
    %614 = vmatprep.subr.bf16.mxu0 %v567
    %615 = vmatpush1.bf16.msra.mxu0 %v566
    %616 = vmatprep.subr.bf16.mxu0 0
    %617 = vmatpush1.bf16.msra.mxu0 0
    %618 = vmatprep.subr.bf16.mxu0 0
    %619 = vmatpush1.bf16.msra.mxu0 0
    %620 = vmatprep.subr.bf16.mxu0 0
    %621 = vmatpush1.bf16.msra.mxu0 0
    %622 = vmatprep.subr.bf16.mxu0 0
    %623 = vmatpush1.bf16.msra.mxu0 0
    %624 = vmatprep.mubr.bf16.mxu0 %v378
    %625 = vmatmul.mubr.bf16.gmra.mrb[0].mxu0 %v217
    %v626 = vpop.f32.mrb[0].mxu0
    %v627 = vadd.f32 %v465, %v626
    %v628 = vpop.f32.mrb[0].mxu0
    %v629 = vadd.f32 %v469, %v628
    %v630 = vpop.f32.mrb[0].mxu0
    %v631 = vadd.f32 %v465, %v630
    %v632 = vpop.f32.mrb[0].mxu0
    %v633 = vadd.f32 %v469, %v632
    %634 = vmatprep.mubr.bf16.mxu0 %v381
    %635 = vmatmul.mubr.bf16.gmra.mrb[0].mxu0 %v219
    %v636 = vpop.f32.mrb[0].mxu0
    %v637 = vadd.f32 %v465, %v636
    %v638 = vpop.f32.mrb[0].mxu0
    %v639 = vadd.f32 %v469, %v638
    %v640 = vpop.f32.mrb[0].mxu0
    %v641 = vadd.f32 %v465, %v640
    %v642 = vpop.f32.mrb[0].mxu0
    %v643 = vadd.f32 %v469, %v642
    %644 = vdwg.mxu0
    %v645 = vld [vmem:[%s7] sm:$0xff]
    %v646 = vld [vmem:[%s7 + $0x8] sm:$0xff]
    %v647 = vld [vmem:[%s7 + $0x10] sm:$0xff]
    %v648 = vld [vmem:[%s7 + $0x18] sm:$0xff]
    %v649 = vld [vmem:[%s7 + $0x20] sm:$0xff]
    %v650 = vld [vmem:[%s7 + $0x28] sm:$0xff]
    %v651 = vld [vmem:[%s7 + $0x30] sm:$0xff]
    %v652 = vld [vmem:[%s7 + $0x38] sm:$0xff]
    %v653 = vld [vmem:[%s7 + $0x40] sm:$0xff]
    %v654 = vld [vmem:[%s7 + $0x48] sm:$0xff]
    %v655 = vld [vmem:[%s7 + $0x50] sm:$0xff]
    %v656 = vld [vmem:[%s7 + $0x58] sm:$0xff]
    %v657 = vld [vmem:[%s7 + $0x60] sm:$0xff]
    %v658 = vld [vmem:[%s7 + $0x68] sm:$0xff]
    %v659 = vld [vmem:[%s7 + $0x70] sm:$0xff]
    %v660 = vld [vmem:[%s7 + $0x78] sm:$0xff]
    %v661 = vld [vmem:[%s7 + $0x80] sm:$0xff]
    %v662 = vld [vmem:[%s7 + $0x88] sm:$0xff]
    %v663 = vld [vmem:[%s7 + $0x90] sm:$0xff]
    %v664 = vld [vmem:[%s7 + $0x98] sm:$0xff]
    %v665 = vld [vmem:[%s7 + $0xa0] sm:$0xff]
    %v666 = vld [vmem:[%s7 + $0xa8] sm:$0xff]
    %v667 = vld [vmem:[%s7 + $0xb0] sm:$0xff]
    %v668 = vld [vmem:[%s7 + $0xb8] sm:$0xff]
    %v669 = vld [vmem:[%s8] sm:$0x3]
    %v671 = vlaneseq
    %v672 = vshrl.u32 %v671, 7
    %v673 = vsub.s32 0, %v672
    %v674 = vrot.slane %v669, %v673
    %v675 = vlaneseq
    %v676 = vshrl.u32 %v675, 7
    %v677 = vsub.s32 1, %v676
    %v678 = vrot.slane %v669, %v677
    %v705 = vunpack.c.l.b16 %v645
    %v706 = vunpack.c.h.b16 %v645
    %v707 = vunpack.c.l.b16 %v646
    %v708 = vunpack.c.h.b16 %v646
    %v709 = vunpack.c.l.b16 %v647
    %v710 = vunpack.c.h.b16 %v647
    %v711 = vunpack.c.l.b16 %v648
    %v712 = vunpack.c.h.b16 %v648
    %v713 = vunpack.c.l.b16 %v649
    %v714 = vunpack.c.h.b16 %v649
    %v715 = vunpack.c.l.b16 %v650
    %v716 = vunpack.c.h.b16 %v650
    %v717 = vunpack.c.l.b16 %v651
    %v718 = vunpack.c.h.b16 %v651
    %v719 = vunpack.c.l.b16 %v652
    %v720 = vunpack.c.h.b16 %v652
    %v721 = vunpack.c.l.b16 %v653
    %v722 = vunpack.c.h.b16 %v653
    %v723 = vunpack.c.l.b16 %v654
    %v724 = vunpack.c.h.b16 %v654
    %v725 = vunpack.c.l.b16 %v655
    %v726 = vunpack.c.h.b16 %v655
    %v727 = vunpack.c.l.b16 %v656
    %v728 = vunpack.c.h.b16 %v656
    %v729 = vunpack.c.l.b16 %v657
    %v730 = vunpack.c.h.b16 %v657
    %v731 = vunpack.c.l.b16 %v658
    %v732 = vunpack.c.h.b16 %v658
    %v733 = vunpack.c.l.b16 %v659
    %v734 = vunpack.c.h.b16 %v659
    %v735 = vunpack.c.l.b16 %v660
    %v736 = vunpack.c.h.b16 %v660
    %v737 = vunpack.c.l.b16 %v661
    %v738 = vunpack.c.h.b16 %v661
    %v739 = vunpack.c.l.b16 %v662
    %v740 = vunpack.c.h.b16 %v662
    %v741 = vunpack.c.l.b16 %v663
    %v742 = vunpack.c.h.b16 %v663
    %v743 = vunpack.c.l.b16 %v664
    %v744 = vunpack.c.h.b16 %v664
    %v745 = vunpack.c.l.b16 %v665
    %v746 = vunpack.c.h.b16 %v665
    %v747 = vunpack.c.l.b16 %v666
    %v748 = vunpack.c.h.b16 %v666
    %v749 = vunpack.c.l.b16 %v667
    %v750 = vunpack.c.h.b16 %v667
    %v751 = vunpack.c.l.b16 %v668
    %v752 = vunpack.c.h.b16 %v668
    %v753 = vpack.c.b16 %v707, %v705
    %v754 = vpack.c.b16 %v708, %v706
    %v755 = vpack.c.b16 %v711, %v709
    %v756 = vpack.c.b16 %v712, %v710
    %v757 = vpack.c.b16 %v715, %v713
    %v758 = vpack.c.b16 %v716, %v714
    %v759 = vpack.c.b16 %v719, %v717
    %v760 = vpack.c.b16 %v720, %v718
    %v761 = vpack.c.b16 %v723, %v721
    %v762 = vpack.c.b16 %v724, %v722
    %v763 = vpack.c.b16 %v727, %v725
    %v764 = vpack.c.b16 %v728, %v726
    %v765 = vpack.c.b16 %v731, %v729
    %v766 = vpack.c.b16 %v732, %v730
    %v767 = vpack.c.b16 %v735, %v733
    %v768 = vpack.c.b16 %v736, %v734
    %v769 = vpack.c.b16 %v739, %v737
    %v770 = vpack.c.b16 %v740, %v738
    %v771 = vpack.c.b16 %v743, %v741
    %v772 = vpack.c.b16 %v744, %v742
    %v773 = vpack.c.b16 %v747, %v745
    %v774 = vpack.c.b16 %v748, %v746
    %v775 = vpack.c.b16 %v751, %v749
    %v776 = vpack.c.b16 %v752, %v750
    %801 = vmatprep.subr.bf16.mxu0 %v754
    %802 = vmatpush1.bf16.msra.mxu0 %v753
    %803 = vmatprep.subr.bf16.mxu0 %v756
    %804 = vmatpush1.bf16.msra.mxu0 %v755
    %805 = vmatprep.subr.bf16.mxu0 %v758
    %806 = vmatpush1.bf16.msra.mxu0 %v757
    %807 = vmatprep.subr.bf16.mxu0 %v760
    %808 = vmatpush1.bf16.msra.mxu0 %v759
    %809 = vmatprep.subr.bf16.mxu0 %v762
    %810 = vmatpush1.bf16.msra.mxu0 %v761
    %811 = vmatprep.subr.bf16.mxu0 %v764
    %812 = vmatpush1.bf16.msra.mxu0 %v763
    %813 = vmatprep.subr.bf16.mxu0 %v766
    %814 = vmatpush1.bf16.msra.mxu0 %v765
    %815 = vmatprep.subr.bf16.mxu0 %v768
    %816 = vmatpush1.bf16.msra.mxu0 %v767
    %817 = vmatprep.subr.bf16.mxu0 %v770
    %818 = vmatpush1.bf16.msra.mxu0 %v769
    %819 = vmatprep.subr.bf16.mxu0 %v772
    %820 = vmatpush1.bf16.msra.mxu0 %v771
    %821 = vmatprep.subr.bf16.mxu0 %v774
    %822 = vmatpush1.bf16.msra.mxu0 %v773
    %823 = vmatprep.subr.bf16.mxu0 %v776
    %824 = vmatpush1.bf16.msra.mxu0 %v775
    %825 = vmatprep.subr.bf16.mxu0 0
    %826 = vmatpush1.bf16.msra.mxu0 0
    %827 = vmatprep.subr.bf16.mxu0 0
    %828 = vmatpush1.bf16.msra.mxu0 0
    %829 = vmatprep.subr.bf16.mxu0 0
    %830 = vmatpush1.bf16.msra.mxu0 0
    %831 = vmatprep.subr.bf16.mxu0 0
    %832 = vmatpush1.bf16.msra.mxu0 0
    %833 = vmatprep.mubr.bf16.mxu0 %v378
    %834 = vmatmul.mubr.bf16.gmra.mrb[0].mxu0 %v217
    %v835 = vpop.f32.mrb[0].mxu0
    %v836 = vadd.f32 %v674, %v835
    %v837 = vpop.f32.mrb[0].mxu0
    %v838 = vadd.f32 %v678, %v837
    %v839 = vpop.f32.mrb[0].mxu0
    %v840 = vadd.f32 %v674, %v839
    %v841 = vpop.f32.mrb[0].mxu0
    %v842 = vadd.f32 %v678, %v841
    %843 = vmatprep.mubr.bf16.mxu0 %v381
    %844 = vmatmul.mubr.bf16.gmra.mrb[0].mxu0 %v219
    %v845 = vpop.f32.mrb[0].mxu0
    %v846 = vadd.f32 %v674, %v845
    %v847 = vpop.f32.mrb[0].mxu0
    %v848 = vadd.f32 %v678, %v847
    %v849 = vpop.f32.mrb[0].mxu0
    %v850 = vadd.f32 %v674, %v849
    %v851 = vpop.f32.mrb[0].mxu0
    %v852 = vadd.f32 %v678, %v851
    %853 = vdwg.mxu0
    %v854 = vpack.c.bf16 %v422, %v418
    %v855 = vpack.c.bf16 %v424, %v420
    %v856 = vpack.c.bf16 %v432, %v428
    %v857 = vpack.c.bf16 %v434, %v430
    %v858 = vpack.c.bf16 %v631, %v627
    %v859 = vpack.c.bf16 %v633, %v629
    %v860 = vpack.c.bf16 %v641, %v637
    %v861 = vpack.c.bf16 %v643, %v639
    %v862 = vpack.c.bf16 %v840, %v836
    %v863 = vpack.c.bf16 %v842, %v838
    %v864 = vpack.c.bf16 %v850, %v846
    %v865 = vpack.c.bf16 %v852, %v848
    %v866 = vlaneseq
    %v867 = vshrl.u32 %v866, 7
    %v868 = vadd.s32 %v867, 8
    %v869 = vlaneseq
    %v870 = vand.u32 %v869, 127
    %vm871 = vcmp.le.s32.totalorder %v870, %v867
    %vm872 = vcmp.le.s32.totalorder %v870, %v868
    %vm873 = vcmask 261120
    %v875 = vsel %vm873, %v854, 0
    %v878 = vsel %vm873, %v858, 0
    %880 = vmatprep.subr.bf16.mxu0 0
    %881 = vmatpush1.bf16.xpose.msra.mxu0 %v878
    %882 = vmatprep.subr.bf16.mxu0 0
    %883 = vmatpush1.bf16.xpose.msra.mxu0 0
    %884 = vmatprep.subr.bf16.mxu0 0
    %885 = vmatpush1.bf16.xpose.msra.mxu0 0
    %886 = vmatprep.subr.bf16.mxu0 0
    %887 = vmatpush1.bf16.xpose.msra.mxu0 0
    %888 = vmatprep.subr.bf16.mxu0 0
    %889 = vmatpush1.bf16.xpose.msra.mxu0 0
    %890 = vmatprep.subr.bf16.mxu0 0
    %891 = vmatpush1.bf16.xpose.msra.mxu0 0
    %892 = vmatprep.subr.bf16.mxu0 0
    %893 = vmatpush1.bf16.xpose.msra.mxu0 0
    %894 = vmatprep.subr.bf16.mxu0 0
    %895 = vmatpush1.bf16.xpose.msra.mxu0 0
    %896 = vmatprep.subr.bf16.mxu0 0
    %897 = vmatpush1.bf16.xpose.msra.mxu0 0
    %898 = vmatprep.subr.bf16.mxu0 0
    %899 = vmatpush1.bf16.xpose.msra.mxu0 0
    %900 = vmatprep.subr.bf16.mxu0 0
    %901 = vmatpush1.bf16.xpose.msra.mxu0 0
    %902 = vmatprep.subr.bf16.mxu0 0
    %903 = vmatpush1.bf16.xpose.msra.mxu0 0
    %904 = vmatprep.subr.bf16.mxu0 0
    %905 = vmatpush1.bf16.xpose.msra.mxu0 0
    %906 = vmatprep.subr.bf16.mxu0 0
    %907 = vmatpush1.bf16.xpose.msra.mxu0 0
    %908 = vmatprep.subr.bf16.mxu0 0
    %909 = vmatpush1.bf16.xpose.msra.mxu0 0
    %910 = vmatprep.subr.bf16.mxu0 0
    %911 = vmatpush1.bf16.xpose.msra.mxu0 0
    %912 = vmatprep.mubr.bf16.mxu0 0
    %913 = vmatmul.mubr.bf16.gmra.mrb[0].mxu0 %v875
    %v914 = vpop.f32.mrb[0].mxu0
    %v915 = vadd.f32 0.0, %v914
    %v916 = vpop.f32.mrb[0].mxu0
    %v917 = vpop.f32.mrb[0].mxu0
    %v918 = vadd.f32 0.0, %v917
    %v919 = vpop.f32.mrb[0].mxu0
    %920 = vdwg.mxu0
    %v922 = vsel %vm873, %v856, 0
    %v925 = vsel %vm873, %v860, 0
    %927 = vmatprep.subr.bf16.mxu0 0
    %928 = vmatpush1.bf16.xpose.msra.mxu0 %v925
    %929 = vmatprep.subr.bf16.mxu0 0
    %930 = vmatpush1.bf16.xpose.msra.mxu0 0
    %931 = vmatprep.subr.bf16.mxu0 0
    %932 = vmatpush1.bf16.xpose.msra.mxu0 0
    %933 = vmatprep.subr.bf16.mxu0 0
    %934 = vmatpush1.bf16.xpose.msra.mxu0 0
    %935 = vmatprep.subr.bf16.mxu0 0
    %936 = vmatpush1.bf16.xpose.msra.mxu0 0
    %937 = vmatprep.subr.bf16.mxu0 0
    %938 = vmatpush1.bf16.xpose.msra.mxu0 0
    %939 = vmatprep.subr.bf16.mxu0 0
    %940 = vmatpush1.bf16.xpose.msra.mxu0 0
    %941 = vmatprep.subr.bf16.mxu0 0
    %942 = vmatpush1.bf16.xpose.msra.mxu0 0
    %943 = vmatprep.subr.bf16.mxu0 0
    %944 = vmatpush1.bf16.xpose.msra.mxu0 0
    %945 = vmatprep.subr.bf16.mxu0 0
    %946 = vmatpush1.bf16.xpose.msra.mxu0 0
    %947 = vmatprep.subr.bf16.mxu0 0
    %948 = vmatpush1.bf16.xpose.msra.mxu0 0
    %949 = vmatprep.subr.bf16.mxu0 0
    %950 = vmatpush1.bf16.xpose.msra.mxu0 0
    %951 = vmatprep.subr.bf16.mxu0 0
    %952 = vmatpush1.bf16.xpose.msra.mxu0 0
    %953 = vmatprep.subr.bf16.mxu0 0
    %954 = vmatpush1.bf16.xpose.msra.mxu0 0
    %955 = vmatprep.subr.bf16.mxu0 0
    %956 = vmatpush1.bf16.xpose.msra.mxu0 0
    %957 = vmatprep.subr.bf16.mxu0 0
    %958 = vmatpush1.bf16.xpose.msra.mxu0 0
    %959 = vmatprep.mubr.bf16.mxu0 0
    %960 = vmatmul.mubr.bf16.gmra.mrb[0].mxu0 %v922
    %v961 = vpop.f32.mrb[0].mxu0
    %v962 = vadd.f32 0.0, %v961
    %v963 = vpop.f32.mrb[0].mxu0
    %v964 = vpop.f32.mrb[0].mxu0
    %v965 = vadd.f32 0.0, %v964
    %v966 = vpop.f32.mrb[0].mxu0
    %967 = vdwg.mxu0
    %v968 = vsel %vm871, 1, 0
    %v969 = vsel %vm872, 1, 0
    %vm970 = vcmp.eq.s32.totalorder %v968, 1
    %vm971 = vcmp.eq.s32.totalorder %v969, 1
    %v972 = vsel %vm970, %v915, -1e+30
    %v973 = vsel %vm971, %v918, -1e+30
    %v974 = vsel %vm970, %v962, -1e+30
    %v975 = vsel %vm971, %v965, -1e+30
    %vm976 = vcmask 130048
    %v977 = vsel %vm976, %v972, -inf
    %978 = vmax.xlane.f32.xlu0 %v977
    %v979 = vpop.xlane.xlu0 %978
    %v980 = vsel %vm976, %v973, -inf
    %981 = vmax.xlane.f32.xlu0 %v980
    %v982 = vpop.xlane.xlu0 %981
    %v983 = vsel %vm976, %v974, -inf
    %984 = vmax.xlane.f32.xlu0 %v983
    %v985 = vpop.xlane.xlu0 %984
    %v986 = vsel %vm976, %v975, -inf
    %987 = vmax.xlane.f32.xlu0 %v986
    %v988 = vpop.xlane.xlu0 %987
    %v989 = vsub.f32 %v972, %v979
    %v990 = vsub.f32 %v973, %v982
    %v991 = vsub.f32 %v974, %v985
    %v992 = vsub.f32 %v975, %v988
    %v993 = vmul.f32 %v989, 1.442695
    %v994 = vpow.pop %v993
    %v995 = vmul.f32 %v990, 1.442695
    %v996 = vpow.pop %v995
    %v997 = vmul.f32 %v991, 1.442695
    %v998 = vpow.pop %v997
    %v999 = vmul.f32 %v992, 1.442695
    %v1000 = vpow.pop %v999
    %v1001 = vsel %vm976, %v994, 0.0
    %1002 = vadd.xlane.f32.xlu0 %v1001
    %v1003 = vpop.xlane.xlu0 %1002
    %v1004 = vsel %vm976, %v996, 0.0
    %1005 = vadd.xlane.f32.xlu0 %v1004
    %v1006 = vpop.xlane.xlu0 %1005
    %v1007 = vsel %vm976, %v998, 0.0
    %1008 = vadd.xlane.f32.xlu0 %v1007
    %v1009 = vpop.xlane.xlu0 %1008
    %v1010 = vsel %vm976, %v1000, 0.0
    %1011 = vadd.xlane.f32.xlu0 %v1010
    %v1012 = vpop.xlane.xlu0 %1011
    %v1013 = vrcp.pop %v1003
    %v1014 = vrcp.pop %v1006
    %v1015 = vrcp.pop %v1009
    %v1016 = vrcp.pop %v1012
    %v1017 = vmul.f32 %v994, %v1013
    %v1018 = vmul.f32 %v996, %v1014
    %v1019 = vmul.f32 %v998, %v1015
    %v1020 = vmul.f32 %v1000, %v1016
    %v1021 = vpack.c.bf16 %v1018, %v1017
    %v1022 = vpack.c.bf16 %v1020, %v1019
    %v1024 = vsel %vm976, %v1021, 0
    %1026 = vmatprep.subr.bf16.mxu0 0
    %1027 = vmatpush1.bf16.msra.mxu0 %v862
    %1028 = vmatprep.subr.bf16.mxu0 0
    %1029 = vmatpush1.bf16.msra.mxu0 0
    %1030 = vmatprep.subr.bf16.mxu0 0
    %1031 = vmatpush1.bf16.msra.mxu0 0
    %1032 = vmatprep.subr.bf16.mxu0 0
    %1033 = vmatpush1.bf16.msra.mxu0 0
    %1034 = vmatprep.subr.bf16.mxu0 0
    %1035 = vmatpush1.bf16.msra.mxu0 0
    %1036 = vmatprep.subr.bf16.mxu0 0
    %1037 = vmatpush1.bf16.msra.mxu0 0
    %1038 = vmatprep.subr.bf16.mxu0 0
    %1039 = vmatpush1.bf16.msra.mxu0 0
    %1040 = vmatprep.subr.bf16.mxu0 0
    %1041 = vmatpush1.bf16.msra.mxu0 0
    %1042 = vmatprep.subr.bf16.mxu0 0
    %1043 = vmatpush1.bf16.msra.mxu0 0
    %1044 = vmatprep.subr.bf16.mxu0 0
    %1045 = vmatpush1.bf16.msra.mxu0 0
    %1046 = vmatprep.subr.bf16.mxu0 0
    %1047 = vmatpush1.bf16.msra.mxu0 0
    %1048 = vmatprep.subr.bf16.mxu0 0
    %1049 = vmatpush1.bf16.msra.mxu0 0
    %1050 = vmatprep.subr.bf16.mxu0 0
    %1051 = vmatpush1.bf16.msra.mxu0 0
    %1052 = vmatprep.subr.bf16.mxu0 0
    %1053 = vmatpush1.bf16.msra.mxu0 0
    %1054 = vmatprep.subr.bf16.mxu0 0
    %1055 = vmatpush1.bf16.msra.mxu0 0
    %1056 = vmatprep.subr.bf16.mxu0 0
    %1057 = vmatpush1.bf16.msra.mxu0 0
    %1058 = vmatprep.mubr.bf16.mxu0 0
    %1059 = vmatmul.mubr.bf16.gmra.mrb[0].mxu0 %v1024
    %v1060 = vpop.f32.mrb[0].mxu0
    %v1061 = vadd.f32 0.0, %v1060
    %v1062 = vpop.f32.mrb[0].mxu0
    %v1063 = vpop.f32.mrb[0].mxu0
    %v1064 = vadd.f32 0.0, %v1063
    %v1065 = vpop.f32.mrb[0].mxu0
    %1066 = vdwg.mxu0
    %v1068 = vsel %vm976, %v1022, 0
    %1070 = vmatprep.subr.bf16.mxu0 0
    %1071 = vmatpush1.bf16.msra.mxu0 %v864
    %1072 = vmatprep.subr.bf16.mxu0 0
    %1073 = vmatpush1.bf16.msra.mxu0 0
    %1074 = vmatprep.subr.bf16.mxu0 0
    %1075 = vmatpush1.bf16.msra.mxu0 0
    %1076 = vmatprep.subr.bf16.mxu0 0
    %1077 = vmatpush1.bf16.msra.mxu0 0
    %1078 = vmatprep.subr.bf16.mxu0 0
    %1079 = vmatpush1.bf16.msra.mxu0 0
    %1080 = vmatprep.subr.bf16.mxu0 0
    %1081 = vmatpush1.bf16.msra.mxu0 0
    %1082 = vmatprep.subr.bf16.mxu0 0
    %1083 = vmatpush1.bf16.msra.mxu0 0
    %1084 = vmatprep.subr.bf16.mxu0 0
    %1085 = vmatpush1.bf16.msra.mxu0 0
    %1086 = vmatprep.subr.bf16.mxu0 0
    %1087 = vmatpush1.bf16.msra.mxu0 0
    %1088 = vmatprep.subr.bf16.mxu0 0
    %1089 = vmatpush1.bf16.msra.mxu0 0
    %1090 = vmatprep.subr.bf16.mxu0 0
    %1091 = vmatpush1.bf16.msra.mxu0 0
    %1092 = vmatprep.subr.bf16.mxu0 0
    %1093 = vmatpush1.bf16.msra.mxu0 0
    %1094 = vmatprep.subr.bf16.mxu0 0
    %1095 = vmatpush1.bf16.msra.mxu0 0
    %1096 = vmatprep.subr.bf16.mxu0 0
    %1097 = vmatpush1.bf16.msra.mxu0 0
    %1098 = vmatprep.subr.bf16.mxu0 0
    %1099 = vmatpush1.bf16.msra.mxu0 0
    %1100 = vmatprep.subr.bf16.mxu0 0
    %1101 = vmatpush1.bf16.msra.mxu0 0
    %1102 = vmatprep.mubr.bf16.mxu0 0
    %1103 = vmatmul.mubr.bf16.gmra.mrb[0].mxu0 %v1068
    %v1104 = vpop.f32.mrb[0].mxu0
    %v1105 = vadd.f32 0.0, %v1104
    %v1106 = vpop.f32.mrb[0].mxu0
    %v1107 = vpop.f32.mrb[0].mxu0
    %v1108 = vadd.f32 0.0, %v1107
    %v1109 = vpop.f32.mrb[0].mxu0
    %1110 = vdwg.mxu0
    %1112 = vrot.lane.b32.xlu0 %v854, 96
    %v1113 = vpop.permute.xlu0 %1112
    %1115 = vrot.lane.b32.xlu0 %v858, 96
    %v1116 = vpop.permute.xlu0 %1115
    %v1118 = vsel %vm873, %v1113, 0
    %v1121 = vsel %vm873, %v1116, 0
    %1123 = vmatprep.subr.bf16.mxu0 0
    %1124 = vmatpush1.bf16.xpose.msra.mxu0 %v1121
    %1125 = vmatprep.subr.bf16.mxu0 0
    %1126 = vmatpush1.bf16.xpose.msra.mxu0 0
    %1127 = vmatprep.subr.bf16.mxu0 0
    %1128 = vmatpush1.bf16.xpose.msra.mxu0 0
    %1129 = vmatprep.subr.bf16.mxu0 0
    %1130 = vmatpush1.bf16.xpose.msra.mxu0 0
    %1131 = vmatprep.subr.bf16.mxu0 0
    %1132 = vmatpush1.bf16.xpose.msra.mxu0 0
    %1133 = vmatprep.subr.bf16.mxu0 0
    %1134 = vmatpush1.bf16.xpose.msra.mxu0 0
    %1135 = vmatprep.subr.bf16.mxu0 0
    %1136 = vmatpush1.bf16.xpose.msra.mxu0 0
    %1137 = vmatprep.subr.bf16.mxu0 0
    %1138 = vmatpush1.bf16.xpose.msra.mxu0 0
    %1139 = vmatprep.subr.bf16.mxu0 0
    %1140 = vmatpush1.bf16.xpose.msra.mxu0 0
    %1141 = vmatprep.subr.bf16.mxu0 0
    %1142 = vmatpush1.bf16.xpose.msra.mxu0 0
    %1143 = vmatprep.subr.bf16.mxu0 0
    %1144 = vmatpush1.bf16.xpose.msra.mxu0 0
    %1145 = vmatprep.subr.bf16.mxu0 0
    %1146 = vmatpush1.bf16.xpose.msra.mxu0 0
    %1147 = vmatprep.subr.bf16.mxu0 0
    %1148 = vmatpush1.bf16.xpose.msra.mxu0 0
    %1149 = vmatprep.subr.bf16.mxu0 0
    %1150 = vmatpush1.bf16.xpose.msra.mxu0 0
    %1151 = vmatprep.subr.bf16.mxu0 0
    %1152 = vmatpush1.bf16.xpose.msra.mxu0 0
    %1153 = vmatprep.subr.bf16.mxu0 0
    %1154 = vmatpush1.bf16.xpose.msra.mxu0 0
    %1155 = vmatprep.mubr.bf16.mxu0 0
    %1156 = vmatmul.mubr.bf16.gmra.mrb[0].mxu0 %v1118
    %v1157 = vpop.f32.mrb[0].mxu0
    %v1158 = vadd.f32 0.0, %v1157
    %v1159 = vpop.f32.mrb[0].mxu0
    %v1160 = vpop.f32.mrb[0].mxu0
    %v1161 = vadd.f32 0.0, %v1160
    %v1162 = vpop.f32.mrb[0].mxu0
    %1163 = vdwg.mxu0
    %1165 = vrot.lane.b32.xlu0 %v856, 96
    %v1166 = vpop.permute.xlu0 %1165
    %1168 = vrot.lane.b32.xlu0 %v860, 96
    %v1169 = vpop.permute.xlu0 %1168
    %v1171 = vsel %vm873, %v1166, 0
    %v1174 = vsel %vm873, %v1169, 0
    %1176 = vmatprep.subr.bf16.mxu0 0
    %1177 = vmatpush1.bf16.xpose.msra.mxu0 %v1174
    %1178 = vmatprep.subr.bf16.mxu0 0
    %1179 = vmatpush1.bf16.xpose.msra.mxu0 0
    %1180 = vmatprep.subr.bf16.mxu0 0
    %1181 = vmatpush1.bf16.xpose.msra.mxu0 0
    %1182 = vmatprep.subr.bf16.mxu0 0
    %1183 = vmatpush1.bf16.xpose.msra.mxu0 0
    %1184 = vmatprep.subr.bf16.mxu0 0
    %1185 = vmatpush1.bf16.xpose.msra.mxu0 0
    %1186 = vmatprep.subr.bf16.mxu0 0
    %1187 = vmatpush1.bf16.xpose.msra.mxu0 0
    %1188 = vmatprep.subr.bf16.mxu0 0
    %1189 = vmatpush1.bf16.xpose.msra.mxu0 0
    %1190 = vmatprep.subr.bf16.mxu0 0
    %1191 = vmatpush1.bf16.xpose.msra.mxu0 0
    %1192 = vmatprep.subr.bf16.mxu0 0
    %1193 = vmatpush1.bf16.xpose.msra.mxu0 0
    %1194 = vmatprep.subr.bf16.mxu0 0
    %1195 = vmatpush1.bf16.xpose.msra.mxu0 0
    %1196 = vmatprep.subr.bf16.mxu0 0
    %1197 = vmatpush1.bf16.xpose.msra.mxu0 0
    %1198 = vmatprep.subr.bf16.mxu0 0
    %1199 = vmatpush1.bf16.xpose.msra.mxu0 0
    %1200 = vmatprep.subr.bf16.mxu0 0
    %1201 = vmatpush1.bf16.xpose.msra.mxu0 0
    %1202 = vmatprep.subr.bf16.mxu0 0
    %1203 = vmatpush1.bf16.xpose.msra.mxu0 0
    %1204 = vmatprep.subr.bf16.mxu0 0
    %1205 = vmatpush1.bf16.xpose.msra.mxu0 0
    %1206 = vmatprep.subr.bf16.mxu0 0
    %1207 = vmatpush1.bf16.xpose.msra.mxu0 0
    %1208 = vmatprep.mubr.bf16.mxu0 0
    %1209 = vmatmul.mubr.bf16.gmra.mrb[0].mxu0 %v1171
    %v1210 = vpop.f32.mrb[0].mxu0
    %v1211 = vadd.f32 0.0, %v1210
    %v1212 = vpop.f32.mrb[0].mxu0
    %v1213 = vpop.f32.mrb[0].mxu0
    %v1214 = vadd.f32 0.0, %v1213
    %v1215 = vpop.f32.mrb[0].mxu0
    %1216 = vdwg.mxu0
    %v1217 = vsel %vm970, %v1158, -1e+30
    %v1218 = vsel %vm971, %v1161, -1e+30
    %v1219 = vsel %vm970, %v1211, -1e+30
    %v1220 = vsel %vm971, %v1214, -1e+30
    %v1221 = vsel %vm976, %v1217, -inf
    %1222 = vmax.xlane.f32.xlu0 %v1221
    %v1223 = vpop.xlane.xlu0 %1222
    %v1224 = vsel %vm976, %v1218, -inf
    %1225 = vmax.xlane.f32.xlu0 %v1224
    %v1226 = vpop.xlane.xlu0 %1225
    %v1227 = vsel %vm976, %v1219, -inf
    %1228 = vmax.xlane.f32.xlu0 %v1227
    %v1229 = vpop.xlane.xlu0 %1228
    %v1230 = vsel %vm976, %v1220, -inf
    %1231 = vmax.xlane.f32.xlu0 %v1230
    %v1232 = vpop.xlane.xlu0 %1231
    %v1233 = vsub.f32 %v1217, %v1223
    %v1234 = vsub.f32 %v1218, %v1226
    %v1235 = vsub.f32 %v1219, %v1229
    %v1236 = vsub.f32 %v1220, %v1232
    %v1237 = vmul.f32 %v1233, 1.442695
    %v1238 = vpow.pop %v1237
    %v1239 = vmul.f32 %v1234, 1.442695
    %v1240 = vpow.pop %v1239
    %v1241 = vmul.f32 %v1235, 1.442695
    %v1242 = vpow.pop %v1241
    %v1243 = vmul.f32 %v1236, 1.442695
    %v1244 = vpow.pop %v1243
    %v1245 = vsel %vm976, %v1238, 0.0
    %1246 = vadd.xlane.f32.xlu0 %v1245
    %v1247 = vpop.xlane.xlu0 %1246
    %v1248 = vsel %vm976, %v1240, 0.0
    %1249 = vadd.xlane.f32.xlu0 %v1248
    %v1250 = vpop.xlane.xlu0 %1249
    %v1251 = vsel %vm976, %v1242, 0.0
    %1252 = vadd.xlane.f32.xlu0 %v1251
    %v1253 = vpop.xlane.xlu0 %1252
    %v1254 = vsel %vm976, %v1244, 0.0
    %1255 = vadd.xlane.f32.xlu0 %v1254
    %v1256 = vpop.xlane.xlu0 %1255
    %v1257 = vrcp.pop %v1247
    %v1258 = vrcp.pop %v1250
    %v1259 = vrcp.pop %v1253
    %v1260 = vrcp.pop %v1256
    %v1261 = vmul.f32 %v1238, %v1257
    %v1262 = vmul.f32 %v1240, %v1258
    %v1263 = vmul.f32 %v1242, %v1259
    %v1264 = vmul.f32 %v1244, %v1260
    %v1265 = vpack.c.bf16 %v1262, %v1261
    %v1266 = vpack.c.bf16 %v1264, %v1263
    %1268 = vrot.lane.b32.xlu0 %v862, 96
    %v1269 = vpop.permute.xlu0 %1268
    %v1272 = vsel %vm976, %v1265, 0
    %1274 = vmatprep.subr.bf16.mxu0 0
    %1275 = vmatpush1.bf16.msra.mxu0 %v1269
    %1276 = vmatprep.subr.bf16.mxu0 0
    %1277 = vmatpush1.bf16.msra.mxu0 0
    %1278 = vmatprep.subr.bf16.mxu0 0
    %1279 = vmatpush1.bf16.msra.mxu0 0
    %1280 = vmatprep.subr.bf16.mxu0 0
    %1281 = vmatpush1.bf16.msra.mxu0 0
    %1282 = vmatprep.subr.bf16.mxu0 0
    %1283 = vmatpush1.bf16.msra.mxu0 0
    %1284 = vmatprep.subr.bf16.mxu0 0
    %1285 = vmatpush1.bf16.msra.mxu0 0
    %1286 = vmatprep.subr.bf16.mxu0 0
    %1287 = vmatpush1.bf16.msra.mxu0 0
    %1288 = vmatprep.subr.bf16.mxu0 0
    %1289 = vmatpush1.bf16.msra.mxu0 0
    %1290 = vmatprep.subr.bf16.mxu0 0
    %1291 = vmatpush1.bf16.msra.mxu0 0
    %1292 = vmatprep.subr.bf16.mxu0 0
    %1293 = vmatpush1.bf16.msra.mxu0 0
    %1294 = vmatprep.subr.bf16.mxu0 0
    %1295 = vmatpush1.bf16.msra.mxu0 0
    %1296 = vmatprep.subr.bf16.mxu0 0
    %1297 = vmatpush1.bf16.msra.mxu0 0
    %1298 = vmatprep.subr.bf16.mxu0 0
    %1299 = vmatpush1.bf16.msra.mxu0 0
    %1300 = vmatprep.subr.bf16.mxu0 0
    %1301 = vmatpush1.bf16.msra.mxu0 0
    %1302 = vmatprep.subr.bf16.mxu0 0
    %1303 = vmatpush1.bf16.msra.mxu0 0
    %1304 = vmatprep.subr.bf16.mxu0 0
    %1305 = vmatpush1.bf16.msra.mxu0 0
    %1306 = vmatprep.mubr.bf16.mxu0 0
    %1307 = vmatmul.mubr.bf16.gmra.mrb[0].mxu0 %v1272
    %v1308 = vpop.f32.mrb[0].mxu0
    %v1309 = vadd.f32 0.0, %v1308
    %v1310 = vpop.f32.mrb[0].mxu0
    %v1311 = vpop.f32.mrb[0].mxu0
    %v1312 = vadd.f32 0.0, %v1311
    %v1313 = vpop.f32.mrb[0].mxu0
    %1314 = vdwg.mxu0
    %1316 = vrot.lane.b32.xlu0 %v864, 96
    %v1317 = vpop.permute.xlu0 %1316
    %v1320 = vsel %vm976, %v1266, 0
    %1322 = vmatprep.subr.bf16.mxu0 0
    %1323 = vmatpush1.bf16.msra.mxu0 %v1317
    %1324 = vmatprep.subr.bf16.mxu0 0
    %1325 = vmatpush1.bf16.msra.mxu0 0
    %1326 = vmatprep.subr.bf16.mxu0 0
    %1327 = vmatpush1.bf16.msra.mxu0 0
    %1328 = vmatprep.subr.bf16.mxu0 0
    %1329 = vmatpush1.bf16.msra.mxu0 0
    %1330 = vmatprep.subr.bf16.mxu0 0
    %1331 = vmatpush1.bf16.msra.mxu0 0
    %1332 = vmatprep.subr.bf16.mxu0 0
    %1333 = vmatpush1.bf16.msra.mxu0 0
    %1334 = vmatprep.subr.bf16.mxu0 0
    %1335 = vmatpush1.bf16.msra.mxu0 0
    %1336 = vmatprep.subr.bf16.mxu0 0
    %1337 = vmatpush1.bf16.msra.mxu0 0
    %1338 = vmatprep.subr.bf16.mxu0 0
    %1339 = vmatpush1.bf16.msra.mxu0 0
    %1340 = vmatprep.subr.bf16.mxu0 0
    %1341 = vmatpush1.bf16.msra.mxu0 0
    %1342 = vmatprep.subr.bf16.mxu0 0
    %1343 = vmatpush1.bf16.msra.mxu0 0
    %1344 = vmatprep.subr.bf16.mxu0 0
    %1345 = vmatpush1.bf16.msra.mxu0 0
    %1346 = vmatprep.subr.bf16.mxu0 0
    %1347 = vmatpush1.bf16.msra.mxu0 0
    %1348 = vmatprep.subr.bf16.mxu0 0
    %1349 = vmatpush1.bf16.msra.mxu0 0
    %1350 = vmatprep.subr.bf16.mxu0 0
    %1351 = vmatpush1.bf16.msra.mxu0 0
    %1352 = vmatprep.subr.bf16.mxu0 0
    %1353 = vmatpush1.bf16.msra.mxu0 0
    %1354 = vmatprep.mubr.bf16.mxu0 0
    %1355 = vmatmul.mubr.bf16.gmra.mrb[0].mxu0 %v1320
    %v1356 = vpop.f32.mrb[0].mxu0
    %v1357 = vadd.f32 0.0, %v1356
    %v1358 = vpop.f32.mrb[0].mxu0
    %v1359 = vpop.f32.mrb[0].mxu0
    %v1360 = vadd.f32 0.0, %v1359
    %v1361 = vpop.f32.mrb[0].mxu0
    %1362 = vdwg.mxu0
    %1363 = vrot.lane.b32.xlu0 %v854, 64
    %v1364 = vpop.permute.xlu0 %1363
    %1365 = vrot.lane.b32.xlu0 %v858, 64
    %v1366 = vpop.permute.xlu0 %1365
    %v1368 = vsel %vm873, %v1364, 0
    %v1371 = vsel %vm873, %v1366, 0
    %1373 = vmatprep.subr.bf16.mxu0 0
    %1374 = vmatpush1.bf16.xpose.msra.mxu0 %v1371
    %1375 = vmatprep.subr.bf16.mxu0 0
    %1376 = vmatpush1.bf16.xpose.msra.mxu0 0
    %1377 = vmatprep.subr.bf16.mxu0 0
    %1378 = vmatpush1.bf16.xpose.msra.mxu0 0
    %1379 = vmatprep.subr.bf16.mxu0 0
    %1380 = vmatpush1.bf16.xpose.msra.mxu0 0
    %1381 = vmatprep.subr.bf16.mxu0 0
    %1382 = vmatpush1.bf16.xpose.msra.mxu0 0
    %1383 = vmatprep.subr.bf16.mxu0 0
    %1384 = vmatpush1.bf16.xpose.msra.mxu0 0
    %1385 = vmatprep.subr.bf16.mxu0 0
    %1386 = vmatpush1.bf16.xpose.msra.mxu0 0
    %1387 = vmatprep.subr.bf16.mxu0 0
    %1388 = vmatpush1.bf16.xpose.msra.mxu0 0
    %1389 = vmatprep.subr.bf16.mxu0 0
    %1390 = vmatpush1.bf16.xpose.msra.mxu0 0
    %1391 = vmatprep.subr.bf16.mxu0 0
    %1392 = vmatpush1.bf16.xpose.msra.mxu0 0
    %1393 = vmatprep.subr.bf16.mxu0 0
    %1394 = vmatpush1.bf16.xpose.msra.mxu0 0
    %1395 = vmatprep.subr.bf16.mxu0 0
    %1396 = vmatpush1.bf16.xpose.msra.mxu0 0
    %1397 = vmatprep.subr.bf16.mxu0 0
    %1398 = vmatpush1.bf16.xpose.msra.mxu0 0
    %1399 = vmatprep.subr.bf16.mxu0 0
    %1400 = vmatpush1.bf16.xpose.msra.mxu0 0
    %1401 = vmatprep.subr.bf16.mxu0 0
    %1402 = vmatpush1.bf16.xpose.msra.mxu0 0
    %1403 = vmatprep.subr.bf16.mxu0 0
    %1404 = vmatpush1.bf16.xpose.msra.mxu0 0
    %1405 = vmatprep.mubr.bf16.mxu0 0
    %1406 = vmatmul.mubr.bf16.gmra.mrb[0].mxu0 %v1368
    %v1407 = vpop.f32.mrb[0].mxu0
    %v1408 = vadd.f32 0.0, %v1407
    %v1409 = vpop.f32.mrb[0].mxu0
    %v1410 = vpop.f32.mrb[0].mxu0
    %v1411 = vadd.f32 0.0, %v1410
    %v1412 = vpop.f32.mrb[0].mxu0
    %1413 = vdwg.mxu0
    %1414 = vrot.lane.b32.xlu0 %v856, 64
    %v1415 = vpop.permute.xlu0 %1414
    %1416 = vrot.lane.b32.xlu0 %v860, 64
    %v1417 = vpop.permute.xlu0 %1416
    %v1419 = vsel %vm873, %v1415, 0
    %v1422 = vsel %vm873, %v1417, 0
    %1424 = vmatprep.subr.bf16.mxu0 0
    %1425 = vmatpush1.bf16.xpose.msra.mxu0 %v1422
    %1426 = vmatprep.subr.bf16.mxu0 0
    %1427 = vmatpush1.bf16.xpose.msra.mxu0 0
    %1428 = vmatprep.subr.bf16.mxu0 0
    %1429 = vmatpush1.bf16.xpose.msra.mxu0 0
    %1430 = vmatprep.subr.bf16.mxu0 0
    %1431 = vmatpush1.bf16.xpose.msra.mxu0 0
    %1432 = vmatprep.subr.bf16.mxu0 0
    %1433 = vmatpush1.bf16.xpose.msra.mxu0 0
    %1434 = vmatprep.subr.bf16.mxu0 0
    %1435 = vmatpush1.bf16.xpose.msra.mxu0 0
    %1436 = vmatprep.subr.bf16.mxu0 0
    %1437 = vmatpush1.bf16.xpose.msra.mxu0 0
    %1438 = vmatprep.subr.bf16.mxu0 0
    %1439 = vmatpush1.bf16.xpose.msra.mxu0 0
    %1440 = vmatprep.subr.bf16.mxu0 0
    %1441 = vmatpush1.bf16.xpose.msra.mxu0 0
    %1442 = vmatprep.subr.bf16.mxu0 0
    %1443 = vmatpush1.bf16.xpose.msra.mxu0 0
    %1444 = vmatprep.subr.bf16.mxu0 0
    %1445 = vmatpush1.bf16.xpose.msra.mxu0 0
    %1446 = vmatprep.subr.bf16.mxu0 0
    %1447 = vmatpush1.bf16.xpose.msra.mxu0 0
    %1448 = vmatprep.subr.bf16.mxu0 0
    %1449 = vmatpush1.bf16.xpose.msra.mxu0 0
    %1450 = vmatprep.subr.bf16.mxu0 0
    %1451 = vmatpush1.bf16.xpose.msra.mxu0 0
    %1452 = vmatprep.subr.bf16.mxu0 0
    %1453 = vmatpush1.bf16.xpose.msra.mxu0 0
    %1454 = vmatprep.subr.bf16.mxu0 0
    %1455 = vmatpush1.bf16.xpose.msra.mxu0 0
    %1456 = vmatprep.mubr.bf16.mxu0 0
    %1457 = vmatmul.mubr.bf16.gmra.mrb[0].mxu0 %v1419
    %v1458 = vpop.f32.mrb[0].mxu0
    %v1459 = vadd.f32 0.0, %v1458
    %v1460 = vpop.f32.mrb[0].mxu0
    %v1461 = vpop.f32.mrb[0].mxu0
    %v1462 = vadd.f32 0.0, %v1461
    %v1463 = vpop.f32.mrb[0].mxu0
    %1464 = vdwg.mxu0
    %v1465 = vsel %vm970, %v1408, -1e+30
    %v1466 = vsel %vm971, %v1411, -1e+30
    %v1467 = vsel %vm970, %v1459, -1e+30
    %v1468 = vsel %vm971, %v1462, -1e+30
    %v1469 = vsel %vm976, %v1465, -inf
    %1470 = vmax.xlane.f32.xlu0 %v1469
    %v1471 = vpop.xlane.xlu0 %1470
    %v1472 = vsel %vm976, %v1466, -inf
    %1473 = vmax.xlane.f32.xlu0 %v1472
    %v1474 = vpop.xlane.xlu0 %1473
    %v1475 = vsel %vm976, %v1467, -inf
    %1476 = vmax.xlane.f32.xlu0 %v1475
    %v1477 = vpop.xlane.xlu0 %1476
    %v1478 = vsel %vm976, %v1468, -inf
    %1479 = vmax.xlane.f32.xlu0 %v1478
    %v1480 = vpop.xlane.xlu0 %1479
    %v1481 = vsub.f32 %v1465, %v1471
    %v1482 = vsub.f32 %v1466, %v1474
    %v1483 = vsub.f32 %v1467, %v1477
    %v1484 = vsub.f32 %v1468, %v1480
    %v1485 = vmul.f32 %v1481, 1.442695
    %v1486 = vpow.pop %v1485
    %v1487 = vmul.f32 %v1482, 1.442695
    %v1488 = vpow.pop %v1487
    %v1489 = vmul.f32 %v1483, 1.442695
    %v1490 = vpow.pop %v1489
    %v1491 = vmul.f32 %v1484, 1.442695
    %v1492 = vpow.pop %v1491
    %v1493 = vsel %vm976, %v1486, 0.0
    %1494 = vadd.xlane.f32.xlu0 %v1493
    %v1495 = vpop.xlane.xlu0 %1494
    %v1496 = vsel %vm976, %v1488, 0.0
    %1497 = vadd.xlane.f32.xlu0 %v1496
    %v1498 = vpop.xlane.xlu0 %1497
    %v1499 = vsel %vm976, %v1490, 0.0
    %1500 = vadd.xlane.f32.xlu0 %v1499
    %v1501 = vpop.xlane.xlu0 %1500
    %v1502 = vsel %vm976, %v1492, 0.0
    %1503 = vadd.xlane.f32.xlu0 %v1502
    %v1504 = vpop.xlane.xlu0 %1503
    %v1505 = vrcp.pop %v1495
    %v1506 = vrcp.pop %v1498
    %v1507 = vrcp.pop %v1501
    %v1508 = vrcp.pop %v1504
    %v1509 = vmul.f32 %v1486, %v1505
    %v1510 = vmul.f32 %v1488, %v1506
    %v1511 = vmul.f32 %v1490, %v1507
    %v1512 = vmul.f32 %v1492, %v1508
    %v1513 = vpack.c.bf16 %v1510, %v1509
    %v1514 = vpack.c.bf16 %v1512, %v1511
    %1515 = vrot.lane.b32.xlu0 %v862, 64
    %v1516 = vpop.permute.xlu0 %1515
    %v1519 = vsel %vm976, %v1513, 0
    %1521 = vmatprep.subr.bf16.mxu0 0
    %1522 = vmatpush1.bf16.msra.mxu0 %v1516
    %1523 = vmatprep.subr.bf16.mxu0 0
    %1524 = vmatpush1.bf16.msra.mxu0 0
    %1525 = vmatprep.subr.bf16.mxu0 0
    %1526 = vmatpush1.bf16.msra.mxu0 0
    %1527 = vmatprep.subr.bf16.mxu0 0
    %1528 = vmatpush1.bf16.msra.mxu0 0
    %1529 = vmatprep.subr.bf16.mxu0 0
    %1530 = vmatpush1.bf16.msra.mxu0 0
    %1531 = vmatprep.subr.bf16.mxu0 0
    %1532 = vmatpush1.bf16.msra.mxu0 0
    %1533 = vmatprep.subr.bf16.mxu0 0
    %1534 = vmatpush1.bf16.msra.mxu0 0
    %1535 = vmatprep.subr.bf16.mxu0 0
    %1536 = vmatpush1.bf16.msra.mxu0 0
    %1537 = vmatprep.subr.bf16.mxu0 0
    %1538 = vmatpush1.bf16.msra.mxu0 0
    %1539 = vmatprep.subr.bf16.mxu0 0
    %1540 = vmatpush1.bf16.msra.mxu0 0
    %1541 = vmatprep.subr.bf16.mxu0 0
    %1542 = vmatpush1.bf16.msra.mxu0 0
    %1543 = vmatprep.subr.bf16.mxu0 0
    %1544 = vmatpush1.bf16.msra.mxu0 0
    %1545 = vmatprep.subr.bf16.mxu0 0
    %1546 = vmatpush1.bf16.msra.mxu0 0
    %1547 = vmatprep.subr.bf16.mxu0 0
    %1548 = vmatpush1.bf16.msra.mxu0 0
    %1549 = vmatprep.subr.bf16.mxu0 0
    %1550 = vmatpush1.bf16.msra.mxu0 0
    %1551 = vmatprep.subr.bf16.mxu0 0
    %1552 = vmatpush1.bf16.msra.mxu0 0
    %1553 = vmatprep.mubr.bf16.mxu0 0
    %1554 = vmatmul.mubr.bf16.gmra.mrb[0].mxu0 %v1519
    %v1555 = vpop.f32.mrb[0].mxu0
    %v1556 = vadd.f32 0.0, %v1555
    %v1557 = vpop.f32.mrb[0].mxu0
    %v1558 = vpop.f32.mrb[0].mxu0
    %v1559 = vadd.f32 0.0, %v1558
    %v1560 = vpop.f32.mrb[0].mxu0
    %1561 = vdwg.mxu0
    %1562 = vrot.lane.b32.xlu0 %v864, 64
    %v1563 = vpop.permute.xlu0 %1562
    %v1566 = vsel %vm976, %v1514, 0
    %1568 = vmatprep.subr.bf16.mxu0 0
    %1569 = vmatpush1.bf16.msra.mxu0 %v1563
    %1570 = vmatprep.subr.bf16.mxu0 0
    %1571 = vmatpush1.bf16.msra.mxu0 0
    %1572 = vmatprep.subr.bf16.mxu0 0
    %1573 = vmatpush1.bf16.msra.mxu0 0
    %1574 = vmatprep.subr.bf16.mxu0 0
    %1575 = vmatpush1.bf16.msra.mxu0 0
    %1576 = vmatprep.subr.bf16.mxu0 0
    %1577 = vmatpush1.bf16.msra.mxu0 0
    %1578 = vmatprep.subr.bf16.mxu0 0
    %1579 = vmatpush1.bf16.msra.mxu0 0
    %1580 = vmatprep.subr.bf16.mxu0 0
    %1581 = vmatpush1.bf16.msra.mxu0 0
    %1582 = vmatprep.subr.bf16.mxu0 0
    %1583 = vmatpush1.bf16.msra.mxu0 0
    %1584 = vmatprep.subr.bf16.mxu0 0
    %1585 = vmatpush1.bf16.msra.mxu0 0
    %1586 = vmatprep.subr.bf16.mxu0 0
    %1587 = vmatpush1.bf16.msra.mxu0 0
    %1588 = vmatprep.subr.bf16.mxu0 0
    %1589 = vmatpush1.bf16.msra.mxu0 0
    %1590 = vmatprep.subr.bf16.mxu0 0
    %1591 = vmatpush1.bf16.msra.mxu0 0
    %1592 = vmatprep.subr.bf16.mxu0 0
    %1593 = vmatpush1.bf16.msra.mxu0 0
    %1594 = vmatprep.subr.bf16.mxu0 0
    %1595 = vmatpush1.bf16.msra.mxu0 0
    %1596 = vmatprep.subr.bf16.mxu0 0
    %1597 = vmatpush1.bf16.msra.mxu0 0
    %1598 = vmatprep.subr.bf16.mxu0 0
    %1599 = vmatpush1.bf16.msra.mxu0 0
    %1600 = vmatprep.mubr.bf16.mxu0 0
    %1601 = vmatmul.mubr.bf16.gmra.mrb[0].mxu0 %v1566
    %v1602 = vpop.f32.mrb[0].mxu0
    %v1603 = vadd.f32 0.0, %v1602
    %v1604 = vpop.f32.mrb[0].mxu0
    %v1605 = vpop.f32.mrb[0].mxu0
    %v1606 = vadd.f32 0.0, %v1605
    %v1607 = vpop.f32.mrb[0].mxu0
    %1608 = vdwg.mxu0
    %1609 = vrot.lane.b32.xlu0 %v854, 32
    %v1610 = vpop.permute.xlu0 %1609
    %1611 = vrot.lane.b32.xlu0 %v858, 32
    %v1612 = vpop.permute.xlu0 %1611
    %v1614 = vsel %vm873, %v1610, 0
    %v1617 = vsel %vm873, %v1612, 0
    %1619 = vmatprep.subr.bf16.mxu0 0
    %1620 = vmatpush1.bf16.xpose.msra.mxu0 %v1617
    %1621 = vmatprep.subr.bf16.mxu0 0
    %1622 = vmatpush1.bf16.xpose.msra.mxu0 0
    %1623 = vmatprep.subr.bf16.mxu0 0
    %1624 = vmatpush1.bf16.xpose.msra.mxu0 0
    %1625 = vmatprep.subr.bf16.mxu0 0
    %1626 = vmatpush1.bf16.xpose.msra.mxu0 0
    %1627 = vmatprep.subr.bf16.mxu0 0
    %1628 = vmatpush1.bf16.xpose.msra.mxu0 0
    %1629 = vmatprep.subr.bf16.mxu0 0
    %1630 = vmatpush1.bf16.xpose.msra.mxu0 0
    %1631 = vmatprep.subr.bf16.mxu0 0
    %1632 = vmatpush1.bf16.xpose.msra.mxu0 0
    %1633 = vmatprep.subr.bf16.mxu0 0
    %1634 = vmatpush1.bf16.xpose.msra.mxu0 0
    %1635 = vmatprep.subr.bf16.mxu0 0
    %1636 = vmatpush1.bf16.xpose.msra.mxu0 0
    %1637 = vmatprep.subr.bf16.mxu0 0
    %1638 = vmatpush1.bf16.xpose.msra.mxu0 0
    %1639 = vmatprep.subr.bf16.mxu0 0
    %1640 = vmatpush1.bf16.xpose.msra.mxu0 0
    %1641 = vmatprep.subr.bf16.mxu0 0
    %1642 = vmatpush1.bf16.xpose.msra.mxu0 0
    %1643 = vmatprep.subr.bf16.mxu0 0
    %1644 = vmatpush1.bf16.xpose.msra.mxu0 0
    %1645 = vmatprep.subr.bf16.mxu0 0
    %1646 = vmatpush1.bf16.xpose.msra.mxu0 0
    %1647 = vmatprep.subr.bf16.mxu0 0
    %1648 = vmatpush1.bf16.xpose.msra.mxu0 0
    %1649 = vmatprep.subr.bf16.mxu0 0
    %1650 = vmatpush1.bf16.xpose.msra.mxu0 0
    %1651 = vmatprep.mubr.bf16.mxu0 0
    %1652 = vmatmul.mubr.bf16.gmra.mrb[0].mxu0 %v1614
    %v1653 = vpop.f32.mrb[0].mxu0
    %v1654 = vadd.f32 0.0, %v1653
    %v1655 = vpop.f32.mrb[0].mxu0
    %v1656 = vpop.f32.mrb[0].mxu0
    %v1657 = vadd.f32 0.0, %v1656
    %v1658 = vpop.f32.mrb[0].mxu0
    %1659 = vdwg.mxu0
    %1660 = vrot.lane.b32.xlu0 %v856, 32
    %v1661 = vpop.permute.xlu0 %1660
    %1662 = vrot.lane.b32.xlu0 %v860, 32
    %v1663 = vpop.permute.xlu0 %1662
    %v1665 = vsel %vm873, %v1661, 0
    %v1668 = vsel %vm873, %v1663, 0
    %1670 = vmatprep.subr.bf16.mxu0 0
    %1671 = vmatpush1.bf16.xpose.msra.mxu0 %v1668
    %1672 = vmatprep.subr.bf16.mxu0 0
    %1673 = vmatpush1.bf16.xpose.msra.mxu0 0
    %1674 = vmatprep.subr.bf16.mxu0 0
    %1675 = vmatpush1.bf16.xpose.msra.mxu0 0
    %1676 = vmatprep.subr.bf16.mxu0 0
    %1677 = vmatpush1.bf16.xpose.msra.mxu0 0
    %1678 = vmatprep.subr.bf16.mxu0 0
    %1679 = vmatpush1.bf16.xpose.msra.mxu0 0
    %1680 = vmatprep.subr.bf16.mxu0 0
    %1681 = vmatpush1.bf16.xpose.msra.mxu0 0
    %1682 = vmatprep.subr.bf16.mxu0 0
    %1683 = vmatpush1.bf16.xpose.msra.mxu0 0
    %1684 = vmatprep.subr.bf16.mxu0 0
    %1685 = vmatpush1.bf16.xpose.msra.mxu0 0
    %1686 = vmatprep.subr.bf16.mxu0 0
    %1687 = vmatpush1.bf16.xpose.msra.mxu0 0
    %1688 = vmatprep.subr.bf16.mxu0 0
    %1689 = vmatpush1.bf16.xpose.msra.mxu0 0
    %1690 = vmatprep.subr.bf16.mxu0 0
    %1691 = vmatpush1.bf16.xpose.msra.mxu0 0
    %1692 = vmatprep.subr.bf16.mxu0 0
    %1693 = vmatpush1.bf16.xpose.msra.mxu0 0
    %1694 = vmatprep.subr.bf16.mxu0 0
    %1695 = vmatpush1.bf16.xpose.msra.mxu0 0
    %1696 = vmatprep.subr.bf16.mxu0 0
    %1697 = vmatpush1.bf16.xpose.msra.mxu0 0
    %1698 = vmatprep.subr.bf16.mxu0 0
    %1699 = vmatpush1.bf16.xpose.msra.mxu0 0
    %1700 = vmatprep.subr.bf16.mxu0 0
    %1701 = vmatpush1.bf16.xpose.msra.mxu0 0
    %1702 = vmatprep.mubr.bf16.mxu0 0
    %1703 = vmatmul.mubr.bf16.gmra.mrb[0].mxu0 %v1665
    %v1704 = vpop.f32.mrb[0].mxu0
    %v1705 = vadd.f32 0.0, %v1704
    %v1706 = vpop.f32.mrb[0].mxu0
    %v1707 = vpop.f32.mrb[0].mxu0
    %v1708 = vadd.f32 0.0, %v1707
    %v1709 = vpop.f32.mrb[0].mxu0
    %1710 = vdwg.mxu0
    %v1711 = vsel %vm970, %v1654, -1e+30
    %v1712 = vsel %vm971, %v1657, -1e+30
    %v1713 = vsel %vm970, %v1705, -1e+30
    %v1714 = vsel %vm971, %v1708, -1e+30
    %v1715 = vsel %vm976, %v1711, -inf
    %1716 = vmax.xlane.f32.xlu0 %v1715
    %v1717 = vpop.xlane.xlu0 %1716
    %v1718 = vsel %vm976, %v1712, -inf
    %1719 = vmax.xlane.f32.xlu0 %v1718
    %v1720 = vpop.xlane.xlu0 %1719
    %v1721 = vsel %vm976, %v1713, -inf
    %1722 = vmax.xlane.f32.xlu0 %v1721
    %v1723 = vpop.xlane.xlu0 %1722
    %v1724 = vsel %vm976, %v1714, -inf
    %1725 = vmax.xlane.f32.xlu0 %v1724
    %v1726 = vpop.xlane.xlu0 %1725
    %v1727 = vsub.f32 %v1711, %v1717
    %v1728 = vsub.f32 %v1712, %v1720
    %v1729 = vsub.f32 %v1713, %v1723
    %v1730 = vsub.f32 %v1714, %v1726
    %v1731 = vmul.f32 %v1727, 1.442695
    %v1732 = vpow.pop %v1731
    %v1733 = vmul.f32 %v1728, 1.442695
    %v1734 = vpow.pop %v1733
    %v1735 = vmul.f32 %v1729, 1.442695
    %v1736 = vpow.pop %v1735
    %v1737 = vmul.f32 %v1730, 1.442695
    %v1738 = vpow.pop %v1737
    %v1739 = vsel %vm976, %v1732, 0.0
    %1740 = vadd.xlane.f32.xlu0 %v1739
    %v1741 = vpop.xlane.xlu0 %1740
    %v1742 = vsel %vm976, %v1734, 0.0
    %1743 = vadd.xlane.f32.xlu0 %v1742
    %v1744 = vpop.xlane.xlu0 %1743
    %v1745 = vsel %vm976, %v1736, 0.0
    %1746 = vadd.xlane.f32.xlu0 %v1745
    %v1747 = vpop.xlane.xlu0 %1746
    %v1748 = vsel %vm976, %v1738, 0.0
    %1749 = vadd.xlane.f32.xlu0 %v1748
    %v1750 = vpop.xlane.xlu0 %1749
    %v1751 = vrcp.pop %v1741
    %v1752 = vrcp.pop %v1744
    %v1753 = vrcp.pop %v1747
    %v1754 = vrcp.pop %v1750
    %v1755 = vmul.f32 %v1732, %v1751
    %v1756 = vmul.f32 %v1734, %v1752
    %v1757 = vmul.f32 %v1736, %v1753
    %v1758 = vmul.f32 %v1738, %v1754
    %v1759 = vpack.c.bf16 %v1756, %v1755
    %v1760 = vpack.c.bf16 %v1758, %v1757
    %1761 = vrot.lane.b32.xlu0 %v862, 32
    %v1762 = vpop.permute.xlu0 %1761
    %v1765 = vsel %vm976, %v1759, 0
    %1767 = vmatprep.subr.bf16.mxu0 0
    %1768 = vmatpush1.bf16.msra.mxu0 %v1762
    %1769 = vmatprep.subr.bf16.mxu0 0
    %1770 = vmatpush1.bf16.msra.mxu0 0
    %1771 = vmatprep.subr.bf16.mxu0 0
    %1772 = vmatpush1.bf16.msra.mxu0 0
    %1773 = vmatprep.subr.bf16.mxu0 0
    %1774 = vmatpush1.bf16.msra.mxu0 0
    %1775 = vmatprep.subr.bf16.mxu0 0
    %1776 = vmatpush1.bf16.msra.mxu0 0
    %1777 = vmatprep.subr.bf16.mxu0 0
    %1778 = vmatpush1.bf16.msra.mxu0 0
    %1779 = vmatprep.subr.bf16.mxu0 0
    %1780 = vmatpush1.bf16.msra.mxu0 0
    %1781 = vmatprep.subr.bf16.mxu0 0
    %1782 = vmatpush1.bf16.msra.mxu0 0
    %1783 = vmatprep.subr.bf16.mxu0 0
    %1784 = vmatpush1.bf16.msra.mxu0 0
    %1785 = vmatprep.subr.bf16.mxu0 0
    %1786 = vmatpush1.bf16.msra.mxu0 0
    %1787 = vmatprep.subr.bf16.mxu0 0
    %1788 = vmatpush1.bf16.msra.mxu0 0
    %1789 = vmatprep.subr.bf16.mxu0 0
    %1790 = vmatpush1.bf16.msra.mxu0 0
    %1791 = vmatprep.subr.bf16.mxu0 0
    %1792 = vmatpush1.bf16.msra.mxu0 0
    %1793 = vmatprep.subr.bf16.mxu0 0
    %1794 = vmatpush1.bf16.msra.mxu0 0
    %1795 = vmatprep.subr.bf16.mxu0 0
    %1796 = vmatpush1.bf16.msra.mxu0 0
    %1797 = vmatprep.subr.bf16.mxu0 0
    %1798 = vmatpush1.bf16.msra.mxu0 0
    %1799 = vmatprep.mubr.bf16.mxu0 0
    %1800 = vmatmul.mubr.bf16.gmra.mrb[0].mxu0 %v1765
    %v1801 = vpop.f32.mrb[0].mxu0
    %v1802 = vadd.f32 0.0, %v1801
    %v1803 = vpop.f32.mrb[0].mxu0
    %v1804 = vpop.f32.mrb[0].mxu0
    %v1805 = vadd.f32 0.0, %v1804
    %v1806 = vpop.f32.mrb[0].mxu0
    %1807 = vdwg.mxu0
    %1808 = vrot.lane.b32.xlu0 %v864, 32
    %v1809 = vpop.permute.xlu0 %1808
    %v1812 = vsel %vm976, %v1760, 0
    %1814 = vmatprep.subr.bf16.mxu0 0
    %1815 = vmatpush1.bf16.msra.mxu0 %v1809
    %1816 = vmatprep.subr.bf16.mxu0 0
    %1817 = vmatpush1.bf16.msra.mxu0 0
    %1818 = vmatprep.subr.bf16.mxu0 0
    %1819 = vmatpush1.bf16.msra.mxu0 0
    %1820 = vmatprep.subr.bf16.mxu0 0
    %1821 = vmatpush1.bf16.msra.mxu0 0
    %1822 = vmatprep.subr.bf16.mxu0 0
    %1823 = vmatpush1.bf16.msra.mxu0 0
    %1824 = vmatprep.subr.bf16.mxu0 0
    %1825 = vmatpush1.bf16.msra.mxu0 0
    %1826 = vmatprep.subr.bf16.mxu0 0
    %1827 = vmatpush1.bf16.msra.mxu0 0
    %1828 = vmatprep.subr.bf16.mxu0 0
    %1829 = vmatpush1.bf16.msra.mxu0 0
    %1830 = vmatprep.subr.bf16.mxu0 0
    %1831 = vmatpush1.bf16.msra.mxu0 0
    %1832 = vmatprep.subr.bf16.mxu0 0
    %1833 = vmatpush1.bf16.msra.mxu0 0
    %1834 = vmatprep.subr.bf16.mxu0 0
    %1835 = vmatpush1.bf16.msra.mxu0 0
    %1836 = vmatprep.subr.bf16.mxu0 0
    %1837 = vmatpush1.bf16.msra.mxu0 0
    %1838 = vmatprep.subr.bf16.mxu0 0
    %1839 = vmatpush1.bf16.msra.mxu0 0
    %1840 = vmatprep.subr.bf16.mxu0 0
    %1841 = vmatpush1.bf16.msra.mxu0 0
    %1842 = vmatprep.subr.bf16.mxu0 0
    %1843 = vmatpush1.bf16.msra.mxu0 0
    %1844 = vmatprep.subr.bf16.mxu0 0
    %1845 = vmatpush1.bf16.msra.mxu0 0
    %1846 = vmatprep.mubr.bf16.mxu0 0
    %1847 = vmatmul.mubr.bf16.gmra.mrb[0].mxu0 %v1812
    %v1848 = vpop.f32.mrb[0].mxu0
    %v1849 = vadd.f32 0.0, %v1848
    %v1850 = vpop.f32.mrb[0].mxu0
    %v1851 = vpop.f32.mrb[0].mxu0
    %v1852 = vadd.f32 0.0, %v1851
    %v1853 = vpop.f32.mrb[0].mxu0
    %1854 = vdwg.mxu0
    %v1856 = vsel %vm873, %v855, 0
    %v1859 = vsel %vm873, %v859, 0
    %1861 = vmatprep.subr.bf16.mxu0 0
    %1862 = vmatpush1.bf16.xpose.msra.mxu0 %v1859
    %1863 = vmatprep.subr.bf16.mxu0 0
    %1864 = vmatpush1.bf16.xpose.msra.mxu0 0
    %1865 = vmatprep.subr.bf16.mxu0 0
    %1866 = vmatpush1.bf16.xpose.msra.mxu0 0
    %1867 = vmatprep.subr.bf16.mxu0 0
    %1868 = vmatpush1.bf16.xpose.msra.mxu0 0
    %1869 = vmatprep.subr.bf16.mxu0 0
    %1870 = vmatpush1.bf16.xpose.msra.mxu0 0
    %1871 = vmatprep.subr.bf16.mxu0 0
    %1872 = vmatpush1.bf16.xpose.msra.mxu0 0
    %1873 = vmatprep.subr.bf16.mxu0 0
    %1874 = vmatpush1.bf16.xpose.msra.mxu0 0
    %1875 = vmatprep.subr.bf16.mxu0 0
    %1876 = vmatpush1.bf16.xpose.msra.mxu0 0
    %1877 = vmatprep.subr.bf16.mxu0 0
    %1878 = vmatpush1.bf16.xpose.msra.mxu0 0
    %1879 = vmatprep.subr.bf16.mxu0 0
    %1880 = vmatpush1.bf16.xpose.msra.mxu0 0
    %1881 = vmatprep.subr.bf16.mxu0 0
    %1882 = vmatpush1.bf16.xpose.msra.mxu0 0
    %1883 = vmatprep.subr.bf16.mxu0 0
    %1884 = vmatpush1.bf16.xpose.msra.mxu0 0
    %1885 = vmatprep.subr.bf16.mxu0 0
    %1886 = vmatpush1.bf16.xpose.msra.mxu0 0
    %1887 = vmatprep.subr.bf16.mxu0 0
    %1888 = vmatpush1.bf16.xpose.msra.mxu0 0
    %1889 = vmatprep.subr.bf16.mxu0 0
    %1890 = vmatpush1.bf16.xpose.msra.mxu0 0
    %1891 = vmatprep.subr.bf16.mxu0 0
    %1892 = vmatpush1.bf16.xpose.msra.mxu0 0
    %1893 = vmatprep.mubr.bf16.mxu0 0
    %1894 = vmatmul.mubr.bf16.gmra.mrb[0].mxu0 %v1856
    %v1895 = vpop.f32.mrb[0].mxu0
    %v1896 = vadd.f32 0.0, %v1895
    %v1897 = vpop.f32.mrb[0].mxu0
    %v1898 = vpop.f32.mrb[0].mxu0
    %v1899 = vadd.f32 0.0, %v1898
    %v1900 = vpop.f32.mrb[0].mxu0
    %1901 = vdwg.mxu0
    %v1903 = vsel %vm873, %v857, 0
    %v1906 = vsel %vm873, %v861, 0
    %1908 = vmatprep.subr.bf16.mxu0 0
    %1909 = vmatpush1.bf16.xpose.msra.mxu0 %v1906
    %1910 = vmatprep.subr.bf16.mxu0 0
    %1911 = vmatpush1.bf16.xpose.msra.mxu0 0
    %1912 = vmatprep.subr.bf16.mxu0 0
    %1913 = vmatpush1.bf16.xpose.msra.mxu0 0
    %1914 = vmatprep.subr.bf16.mxu0 0
    %1915 = vmatpush1.bf16.xpose.msra.mxu0 0
    %1916 = vmatprep.subr.bf16.mxu0 0
    %1917 = vmatpush1.bf16.xpose.msra.mxu0 0
    %1918 = vmatprep.subr.bf16.mxu0 0
    %1919 = vmatpush1.bf16.xpose.msra.mxu0 0
    %1920 = vmatprep.subr.bf16.mxu0 0
    %1921 = vmatpush1.bf16.xpose.msra.mxu0 0
    %1922 = vmatprep.subr.bf16.mxu0 0
    %1923 = vmatpush1.bf16.xpose.msra.mxu0 0
    %1924 = vmatprep.subr.bf16.mxu0 0
    %1925 = vmatpush1.bf16.xpose.msra.mxu0 0
    %1926 = vmatprep.subr.bf16.mxu0 0
    %1927 = vmatpush1.bf16.xpose.msra.mxu0 0
    %1928 = vmatprep.subr.bf16.mxu0 0
    %1929 = vmatpush1.bf16.xpose.msra.mxu0 0
    %1930 = vmatprep.subr.bf16.mxu0 0
    %1931 = vmatpush1.bf16.xpose.msra.mxu0 0
    %1932 = vmatprep.subr.bf16.mxu0 0
    %1933 = vmatpush1.bf16.xpose.msra.mxu0 0
    %1934 = vmatprep.subr.bf16.mxu0 0
    %1935 = vmatpush1.bf16.xpose.msra.mxu0 0
    %1936 = vmatprep.subr.bf16.mxu0 0
    %1937 = vmatpush1.bf16.xpose.msra.mxu0 0
    %1938 = vmatprep.subr.bf16.mxu0 0
    %1939 = vmatpush1.bf16.xpose.msra.mxu0 0
    %1940 = vmatprep.mubr.bf16.mxu0 0
    %1941 = vmatmul.mubr.bf16.gmra.mrb[0].mxu0 %v1903
    %v1942 = vpop.f32.mrb[0].mxu0
    %v1943 = vadd.f32 0.0, %v1942
    %v1944 = vpop.f32.mrb[0].mxu0
    %v1945 = vpop.f32.mrb[0].mxu0
    %v1946 = vadd.f32 0.0, %v1945
    %v1947 = vpop.f32.mrb[0].mxu0
    %1948 = vdwg.mxu0
    %v1949 = vsel %vm970, %v1896, -1e+30
    %v1950 = vsel %vm971, %v1899, -1e+30
    %v1951 = vsel %vm970, %v1943, -1e+30
    %v1952 = vsel %vm971, %v1946, -1e+30
    %v1953 = vsel %vm976, %v1949, -inf
    %1954 = vmax.xlane.f32.xlu0 %v1953
    %v1955 = vpop.xlane.xlu0 %1954
    %v1956 = vsel %vm976, %v1950, -inf
    %1957 = vmax.xlane.f32.xlu0 %v1956
    %v1958 = vpop.xlane.xlu0 %1957
    %v1959 = vsel %vm976, %v1951, -inf
    %1960 = vmax.xlane.f32.xlu0 %v1959
    %v1961 = vpop.xlane.xlu0 %1960
    %v1962 = vsel %vm976, %v1952, -inf
    %1963 = vmax.xlane.f32.xlu0 %v1962
    %v1964 = vpop.xlane.xlu0 %1963
    %v1965 = vsub.f32 %v1949, %v1955
    %v1966 = vsub.f32 %v1950, %v1958
    %v1967 = vsub.f32 %v1951, %v1961
    %v1968 = vsub.f32 %v1952, %v1964
    %v1969 = vmul.f32 %v1965, 1.442695
    %v1970 = vpow.pop %v1969
    %v1971 = vmul.f32 %v1966, 1.442695
    %v1972 = vpow.pop %v1971
    %v1973 = vmul.f32 %v1967, 1.442695
    %v1974 = vpow.pop %v1973
    %v1975 = vmul.f32 %v1968, 1.442695
    %v1976 = vpow.pop %v1975
    %v1977 = vsel %vm976, %v1970, 0.0
    %1978 = vadd.xlane.f32.xlu0 %v1977
    %v1979 = vpop.xlane.xlu0 %1978
    %v1980 = vsel %vm976, %v1972, 0.0
    %1981 = vadd.xlane.f32.xlu0 %v1980
    %v1982 = vpop.xlane.xlu0 %1981
    %v1983 = vsel %vm976, %v1974, 0.0
    %1984 = vadd.xlane.f32.xlu0 %v1983
    %v1985 = vpop.xlane.xlu0 %1984
    %v1986 = vsel %vm976, %v1976, 0.0
    %1987 = vadd.xlane.f32.xlu0 %v1986
    %v1988 = vpop.xlane.xlu0 %1987
    %v1989 = vrcp.pop %v1979
    %v1990 = vrcp.pop %v1982
    %v1991 = vrcp.pop %v1985
    %v1992 = vrcp.pop %v1988
    %v1993 = vmul.f32 %v1970, %v1989
    %v1994 = vmul.f32 %v1972, %v1990
    %v1995 = vmul.f32 %v1974, %v1991
    %v1996 = vmul.f32 %v1976, %v1992
    %v1997 = vpack.c.bf16 %v1994, %v1993
    %v1998 = vpack.c.bf16 %v1996, %v1995
    %v2000 = vsel %vm976, %v1997, 0
    %2002 = vmatprep.subr.bf16.mxu0 0
    %2003 = vmatpush1.bf16.msra.mxu0 %v863
    %2004 = vmatprep.subr.bf16.mxu0 0
    %2005 = vmatpush1.bf16.msra.mxu0 0
    %2006 = vmatprep.subr.bf16.mxu0 0
    %2007 = vmatpush1.bf16.msra.mxu0 0
    %2008 = vmatprep.subr.bf16.mxu0 0
    %2009 = vmatpush1.bf16.msra.mxu0 0
    %2010 = vmatprep.subr.bf16.mxu0 0
    %2011 = vmatpush1.bf16.msra.mxu0 0
    %2012 = vmatprep.subr.bf16.mxu0 0
    %2013 = vmatpush1.bf16.msra.mxu0 0
    %2014 = vmatprep.subr.bf16.mxu0 0
    %2015 = vmatpush1.bf16.msra.mxu0 0
    %2016 = vmatprep.subr.bf16.mxu0 0
    %2017 = vmatpush1.bf16.msra.mxu0 0
    %2018 = vmatprep.subr.bf16.mxu0 0
    %2019 = vmatpush1.bf16.msra.mxu0 0
    %2020 = vmatprep.subr.bf16.mxu0 0
    %2021 = vmatpush1.bf16.msra.mxu0 0
    %2022 = vmatprep.subr.bf16.mxu0 0
    %2023 = vmatpush1.bf16.msra.mxu0 0
    %2024 = vmatprep.subr.bf16.mxu0 0
    %2025 = vmatpush1.bf16.msra.mxu0 0
    %2026 = vmatprep.subr.bf16.mxu0 0
    %2027 = vmatpush1.bf16.msra.mxu0 0
    %2028 = vmatprep.subr.bf16.mxu0 0
    %2029 = vmatpush1.bf16.msra.mxu0 0
    %2030 = vmatprep.subr.bf16.mxu0 0
    %2031 = vmatpush1.bf16.msra.mxu0 0
    %2032 = vmatprep.subr.bf16.mxu0 0
    %2033 = vmatpush1.bf16.msra.mxu0 0
    %2034 = vmatprep.mubr.bf16.mxu0 0
    %2035 = vmatmul.mubr.bf16.gmra.mrb[0].mxu0 %v2000
    %v2036 = vpop.f32.mrb[0].mxu0
    %v2037 = vadd.f32 0.0, %v2036
    %v2038 = vpop.f32.mrb[0].mxu0
    %v2039 = vpop.f32.mrb[0].mxu0
    %v2040 = vadd.f32 0.0, %v2039
    %v2041 = vpop.f32.mrb[0].mxu0
    %2042 = vdwg.mxu0
    %v2044 = vsel %vm976, %v1998, 0
    %2046 = vmatprep.subr.bf16.mxu0 0
    %2047 = vmatpush1.bf16.msra.mxu0 %v865
    %2048 = vmatprep.subr.bf16.mxu0 0
    %2049 = vmatpush1.bf16.msra.mxu0 0
    %2050 = vmatprep.subr.bf16.mxu0 0
    %2051 = vmatpush1.bf16.msra.mxu0 0
    %2052 = vmatprep.subr.bf16.mxu0 0
    %2053 = vmatpush1.bf16.msra.mxu0 0
    %2054 = vmatprep.subr.bf16.mxu0 0
    %2055 = vmatpush1.bf16.msra.mxu0 0
    %2056 = vmatprep.subr.bf16.mxu0 0
    %2057 = vmatpush1.bf16.msra.mxu0 0
    %2058 = vmatprep.subr.bf16.mxu0 0
    %2059 = vmatpush1.bf16.msra.mxu0 0
    %2060 = vmatprep.subr.bf16.mxu0 0
    %2061 = vmatpush1.bf16.msra.mxu0 0
    %2062 = vmatprep.subr.bf16.mxu0 0
    %2063 = vmatpush1.bf16.msra.mxu0 0
    %2064 = vmatprep.subr.bf16.mxu0 0
    %2065 = vmatpush1.bf16.msra.mxu0 0
    %2066 = vmatprep.subr.bf16.mxu0 0
    %2067 = vmatpush1.bf16.msra.mxu0 0
    %2068 = vmatprep.subr.bf16.mxu0 0
    %2069 = vmatpush1.bf16.msra.mxu0 0
    %2070 = vmatprep.subr.bf16.mxu0 0
    %2071 = vmatpush1.bf16.msra.mxu0 0
    %2072 = vmatprep.subr.bf16.mxu0 0
    %2073 = vmatpush1.bf16.msra.mxu0 0
    %2074 = vmatprep.subr.bf16.mxu0 0
    %2075 = vmatpush1.bf16.msra.mxu0 0
    %2076 = vmatprep.subr.bf16.mxu0 0
    %2077 = vmatpush1.bf16.msra.mxu0 0
    %2078 = vmatprep.mubr.bf16.mxu0 0
    %2079 = vmatmul.mubr.bf16.gmra.mrb[0].mxu0 %v2044
    %v2080 = vpop.f32.mrb[0].mxu0
    %v2081 = vadd.f32 0.0, %v2080
    %v2082 = vpop.f32.mrb[0].mxu0
    %v2083 = vpop.f32.mrb[0].mxu0
    %v2084 = vadd.f32 0.0, %v2083
    %v2085 = vpop.f32.mrb[0].mxu0
    %2086 = vdwg.mxu0
    %2088 = vrot.lane.b32.xlu0 %v855, 96
    %v2089 = vpop.permute.xlu0 %2088
    %2091 = vrot.lane.b32.xlu0 %v859, 96
    %v2092 = vpop.permute.xlu0 %2091
    %v2094 = vsel %vm873, %v2089, 0
    %v2097 = vsel %vm873, %v2092, 0
    %2099 = vmatprep.subr.bf16.mxu0 0
    %2100 = vmatpush1.bf16.xpose.msra.mxu0 %v2097
    %2101 = vmatprep.subr.bf16.mxu0 0
    %2102 = vmatpush1.bf16.xpose.msra.mxu0 0
    %2103 = vmatprep.subr.bf16.mxu0 0
    %2104 = vmatpush1.bf16.xpose.msra.mxu0 0
    %2105 = vmatprep.subr.bf16.mxu0 0
    %2106 = vmatpush1.bf16.xpose.msra.mxu0 0
    %2107 = vmatprep.subr.bf16.mxu0 0
    %2108 = vmatpush1.bf16.xpose.msra.mxu0 0
    %2109 = vmatprep.subr.bf16.mxu0 0
    %2110 = vmatpush1.bf16.xpose.msra.mxu0 0
    %2111 = vmatprep.subr.bf16.mxu0 0
    %2112 = vmatpush1.bf16.xpose.msra.mxu0 0
    %2113 = vmatprep.subr.bf16.mxu0 0
    %2114 = vmatpush1.bf16.xpose.msra.mxu0 0
    %2115 = vmatprep.subr.bf16.mxu0 0
    %2116 = vmatpush1.bf16.xpose.msra.mxu0 0
    %2117 = vmatprep.subr.bf16.mxu0 0
    %2118 = vmatpush1.bf16.xpose.msra.mxu0 0
    %2119 = vmatprep.subr.bf16.mxu0 0
    %2120 = vmatpush1.bf16.xpose.msra.mxu0 0
    %2121 = vmatprep.subr.bf16.mxu0 0
    %2122 = vmatpush1.bf16.xpose.msra.mxu0 0
    %2123 = vmatprep.subr.bf16.mxu0 0
    %2124 = vmatpush1.bf16.xpose.msra.mxu0 0
    %2125 = vmatprep.subr.bf16.mxu0 0
    %2126 = vmatpush1.bf16.xpose.msra.mxu0 0
    %2127 = vmatprep.subr.bf16.mxu0 0
    %2128 = vmatpush1.bf16.xpose.msra.mxu0 0
    %2129 = vmatprep.subr.bf16.mxu0 0
    %2130 = vmatpush1.bf16.xpose.msra.mxu0 0
    %2131 = vmatprep.mubr.bf16.mxu0 0
    %2132 = vmatmul.mubr.bf16.gmra.mrb[0].mxu0 %v2094
    %v2133 = vpop.f32.mrb[0].mxu0
    %v2134 = vadd.f32 0.0, %v2133
    %v2135 = vpop.f32.mrb[0].mxu0
    %v2136 = vpop.f32.mrb[0].mxu0
    %v2137 = vadd.f32 0.0, %v2136
    %v2138 = vpop.f32.mrb[0].mxu0
    %2139 = vdwg.mxu0
    %2141 = vrot.lane.b32.xlu0 %v857, 96
    %v2142 = vpop.permute.xlu0 %2141
    %2144 = vrot.lane.b32.xlu0 %v861, 96
    %v2145 = vpop.permute.xlu0 %2144
    %v2147 = vsel %vm873, %v2142, 0
    %v2150 = vsel %vm873, %v2145, 0
    %2152 = vmatprep.subr.bf16.mxu0 0
    %2153 = vmatpush1.bf16.xpose.msra.mxu0 %v2150
    %2154 = vmatprep.subr.bf16.mxu0 0
    %2155 = vmatpush1.bf16.xpose.msra.mxu0 0
    %2156 = vmatprep.subr.bf16.mxu0 0
    %2157 = vmatpush1.bf16.xpose.msra.mxu0 0
    %2158 = vmatprep.subr.bf16.mxu0 0
    %2159 = vmatpush1.bf16.xpose.msra.mxu0 0
    %2160 = vmatprep.subr.bf16.mxu0 0
    %2161 = vmatpush1.bf16.xpose.msra.mxu0 0
    %2162 = vmatprep.subr.bf16.mxu0 0
    %2163 = vmatpush1.bf16.xpose.msra.mxu0 0
    %2164 = vmatprep.subr.bf16.mxu0 0
    %2165 = vmatpush1.bf16.xpose.msra.mxu0 0
    %2166 = vmatprep.subr.bf16.mxu0 0
    %2167 = vmatpush1.bf16.xpose.msra.mxu0 0
    %2168 = vmatprep.subr.bf16.mxu0 0
    %2169 = vmatpush1.bf16.xpose.msra.mxu0 0
    %2170 = vmatprep.subr.bf16.mxu0 0
    %2171 = vmatpush1.bf16.xpose.msra.mxu0 0
    %2172 = vmatprep.subr.bf16.mxu0 0
    %2173 = vmatpush1.bf16.xpose.msra.mxu0 0
    %2174 = vmatprep.subr.bf16.mxu0 0
    %2175 = vmatpush1.bf16.xpose.msra.mxu0 0
    %2176 = vmatprep.subr.bf16.mxu0 0
    %2177 = vmatpush1.bf16.xpose.msra.mxu0 0
    %2178 = vmatprep.subr.bf16.mxu0 0
    %2179 = vmatpush1.bf16.xpose.msra.mxu0 0
    %2180 = vmatprep.subr.bf16.mxu0 0
    %2181 = vmatpush1.bf16.xpose.msra.mxu0 0
    %2182 = vmatprep.subr.bf16.mxu0 0
    %2183 = vmatpush1.bf16.xpose.msra.mxu0 0
    %2184 = vmatprep.mubr.bf16.mxu0 0
    %2185 = vmatmul.mubr.bf16.gmra.mrb[0].mxu0 %v2147
    %v2186 = vpop.f32.mrb[0].mxu0
    %v2187 = vadd.f32 0.0, %v2186
    %v2188 = vpop.f32.mrb[0].mxu0
    %v2189 = vpop.f32.mrb[0].mxu0
    %v2190 = vadd.f32 0.0, %v2189
    %v2191 = vpop.f32.mrb[0].mxu0
    %2192 = vdwg.mxu0
    %v2193 = vsel %vm970, %v2134, -1e+30
    %v2194 = vsel %vm971, %v2137, -1e+30
    %v2195 = vsel %vm970, %v2187, -1e+30
    %v2196 = vsel %vm971, %v2190, -1e+30
    %v2197 = vsel %vm976, %v2193, -inf
    %2198 = vmax.xlane.f32.xlu0 %v2197
    %v2199 = vpop.xlane.xlu0 %2198
    %v2200 = vsel %vm976, %v2194, -inf
    %2201 = vmax.xlane.f32.xlu0 %v2200
    %v2202 = vpop.xlane.xlu0 %2201
    %v2203 = vsel %vm976, %v2195, -inf
    %2204 = vmax.xlane.f32.xlu0 %v2203
    %v2205 = vpop.xlane.xlu0 %2204
    %v2206 = vsel %vm976, %v2196, -inf
    %2207 = vmax.xlane.f32.xlu0 %v2206
    %v2208 = vpop.xlane.xlu0 %2207
    %v2209 = vsub.f32 %v2193, %v2199
    %v2210 = vsub.f32 %v2194, %v2202
    %v2211 = vsub.f32 %v2195, %v2205
    %v2212 = vsub.f32 %v2196, %v2208
    %v2213 = vmul.f32 %v2209, 1.442695
    %v2214 = vpow.pop %v2213
    %v2215 = vmul.f32 %v2210, 1.442695
    %v2216 = vpow.pop %v2215
    %v2217 = vmul.f32 %v2211, 1.442695
    %v2218 = vpow.pop %v2217
    %v2219 = vmul.f32 %v2212, 1.442695
    %v2220 = vpow.pop %v2219
    %v2221 = vsel %vm976, %v2214, 0.0
    %2222 = vadd.xlane.f32.xlu0 %v2221
    %v2223 = vpop.xlane.xlu0 %2222
    %v2224 = vsel %vm976, %v2216, 0.0
    %2225 = vadd.xlane.f32.xlu0 %v2224
    %v2226 = vpop.xlane.xlu0 %2225
    %v2227 = vsel %vm976, %v2218, 0.0
    %2228 = vadd.xlane.f32.xlu0 %v2227
    %v2229 = vpop.xlane.xlu0 %2228
    %v2230 = vsel %vm976, %v2220, 0.0
    %2231 = vadd.xlane.f32.xlu0 %v2230
    %v2232 = vpop.xlane.xlu0 %2231
    %v2233 = vrcp.pop %v2223
    %v2234 = vrcp.pop %v2226
    %v2235 = vrcp.pop %v2229
    %v2236 = vrcp.pop %v2232
    %v2237 = vmul.f32 %v2214, %v2233
    %v2238 = vmul.f32 %v2216, %v2234
    %v2239 = vmul.f32 %v2218, %v2235
    %v2240 = vmul.f32 %v2220, %v2236
    %v2241 = vpack.c.bf16 %v2238, %v2237
    %v2242 = vpack.c.bf16 %v2240, %v2239
    %2244 = vrot.lane.b32.xlu0 %v863, 96
    %v2245 = vpop.permute.xlu0 %2244
    %v2248 = vsel %vm976, %v2241, 0
    %2250 = vmatprep.subr.bf16.mxu0 0
    %2251 = vmatpush1.bf16.msra.mxu0 %v2245
    %2252 = vmatprep.subr.bf16.mxu0 0
    %2253 = vmatpush1.bf16.msra.mxu0 0
    %2254 = vmatprep.subr.bf16.mxu0 0
    %2255 = vmatpush1.bf16.msra.mxu0 0
    %2256 = vmatprep.subr.bf16.mxu0 0
    %2257 = vmatpush1.bf16.msra.mxu0 0
    %2258 = vmatprep.subr.bf16.mxu0 0
    %2259 = vmatpush1.bf16.msra.mxu0 0
    %2260 = vmatprep.subr.bf16.mxu0 0
    %2261 = vmatpush1.bf16.msra.mxu0 0
    %2262 = vmatprep.subr.bf16.mxu0 0
    %2263 = vmatpush1.bf16.msra.mxu0 0
    %2264 = vmatprep.subr.bf16.mxu0 0
    %2265 = vmatpush1.bf16.msra.mxu0 0
    %2266 = vmatprep.subr.bf16.mxu0 0
    %2267 = vmatpush1.bf16.msra.mxu0 0
    %2268 = vmatprep.subr.bf16.mxu0 0
    %2269 = vmatpush1.bf16.msra.mxu0 0
    %2270 = vmatprep.subr.bf16.mxu0 0
    %2271 = vmatpush1.bf16.msra.mxu0 0
    %2272 = vmatprep.subr.bf16.mxu0 0
    %2273 = vmatpush1.bf16.msra.mxu0 0
    %2274 = vmatprep.subr.bf16.mxu0 0
    %2275 = vmatpush1.bf16.msra.mxu0 0
    %2276 = vmatprep.subr.bf16.mxu0 0
    %2277 = vmatpush1.bf16.msra.mxu0 0
    %2278 = vmatprep.subr.bf16.mxu0 0
    %2279 = vmatpush1.bf16.msra.mxu0 0
    %2280 = vmatprep.subr.bf16.mxu0 0
    %2281 = vmatpush1.bf16.msra.mxu0 0
    %2282 = vmatprep.mubr.bf16.mxu0 0
    %2283 = vmatmul.mubr.bf16.gmra.mrb[0].mxu0 %v2248
    %v2284 = vpop.f32.mrb[0].mxu0
    %v2285 = vadd.f32 0.0, %v2284
    %v2286 = vpop.f32.mrb[0].mxu0
    %v2287 = vpop.f32.mrb[0].mxu0
    %v2288 = vadd.f32 0.0, %v2287
    %v2289 = vpop.f32.mrb[0].mxu0
    %2290 = vdwg.mxu0
    %2292 = vrot.lane.b32.xlu0 %v865, 96
    %v2293 = vpop.permute.xlu0 %2292
    %v2296 = vsel %vm976, %v2242, 0
    %2298 = vmatprep.subr.bf16.mxu0 0
    %2299 = vmatpush1.bf16.msra.mxu0 %v2293
    %2300 = vmatprep.subr.bf16.mxu0 0
    %2301 = vmatpush1.bf16.msra.mxu0 0
    %2302 = vmatprep.subr.bf16.mxu0 0
    %2303 = vmatpush1.bf16.msra.mxu0 0
    %2304 = vmatprep.subr.bf16.mxu0 0
    %2305 = vmatpush1.bf16.msra.mxu0 0
    %2306 = vmatprep.subr.bf16.mxu0 0
    %2307 = vmatpush1.bf16.msra.mxu0 0
    %2308 = vmatprep.subr.bf16.mxu0 0
    %2309 = vmatpush1.bf16.msra.mxu0 0
    %2310 = vmatprep.subr.bf16.mxu0 0
    %2311 = vmatpush1.bf16.msra.mxu0 0
    %2312 = vmatprep.subr.bf16.mxu0 0
    %2313 = vmatpush1.bf16.msra.mxu0 0
    %2314 = vmatprep.subr.bf16.mxu0 0
    %2315 = vmatpush1.bf16.msra.mxu0 0
    %2316 = vmatprep.subr.bf16.mxu0 0
    %2317 = vmatpush1.bf16.msra.mxu0 0
    %2318 = vmatprep.subr.bf16.mxu0 0
    %2319 = vmatpush1.bf16.msra.mxu0 0
    %2320 = vmatprep.subr.bf16.mxu0 0
    %2321 = vmatpush1.bf16.msra.mxu0 0
    %2322 = vmatprep.subr.bf16.mxu0 0
    %2323 = vmatpush1.bf16.msra.mxu0 0
    %2324 = vmatprep.subr.bf16.mxu0 0
    %2325 = vmatpush1.bf16.msra.mxu0 0
    %2326 = vmatprep.subr.bf16.mxu0 0
    %2327 = vmatpush1.bf16.msra.mxu0 0
    %2328 = vmatprep.subr.bf16.mxu0 0
    %2329 = vmatpush1.bf16.msra.mxu0 0
    %2330 = vmatprep.mubr.bf16.mxu0 0
    %2331 = vmatmul.mubr.bf16.gmra.mrb[0].mxu0 %v2296
    %v2332 = vpop.f32.mrb[0].mxu0
    %v2333 = vadd.f32 0.0, %v2332
    %v2334 = vpop.f32.mrb[0].mxu0
    %v2335 = vpop.f32.mrb[0].mxu0
    %v2336 = vadd.f32 0.0, %v2335
    %v2337 = vpop.f32.mrb[0].mxu0
    %2338 = vdwg.mxu0
    %2343 = vrot.lane.b32.xlu0 %v1309, 32
    %v2344 = vpop.permute.xlu0 %2343
    %2345 = vrot.lane.b32.xlu0 %v1312, 32
    %v2346 = vpop.permute.xlu0 %2345
    %2347 = vrot.lane.b32.xlu0 %v1357, 32
    %v2348 = vpop.permute.xlu0 %2347
    %2349 = vrot.lane.b32.xlu0 %v1360, 32
    %v2350 = vpop.permute.xlu0 %2349
    %2359 = vrot.lane.b32.xlu0 %v1556, 64
    %v2360 = vpop.permute.xlu0 %2359
    %2361 = vrot.lane.b32.xlu0 %v1559, 64
    %v2362 = vpop.permute.xlu0 %2361
    %2363 = vrot.lane.b32.xlu0 %v1603, 64
    %v2364 = vpop.permute.xlu0 %2363
    %2365 = vrot.lane.b32.xlu0 %v1606, 64
    %v2366 = vpop.permute.xlu0 %2365
    %2375 = vrot.lane.b32.xlu0 %v1802, 96
    %v2376 = vpop.permute.xlu0 %2375
    %2377 = vrot.lane.b32.xlu0 %v1805, 96
    %v2378 = vpop.permute.xlu0 %2377
    %2379 = vrot.lane.b32.xlu0 %v1849, 96
    %v2380 = vpop.permute.xlu0 %2379
    %2381 = vrot.lane.b32.xlu0 %v1852, 96
    %v2382 = vpop.permute.xlu0 %2381
    %2391 = vrot.lane.b32.xlu0 %v2285, 32
    %v2392 = vpop.permute.xlu0 %2391
    %2393 = vrot.lane.b32.xlu0 %v2288, 32
    %v2394 = vpop.permute.xlu0 %2393
    %2395 = vrot.lane.b32.xlu0 %v2333, 32
    %v2396 = vpop.permute.xlu0 %2395
    %2397 = vrot.lane.b32.xlu0 %v2336, 32
    %v2398 = vpop.permute.xlu0 %2397
    %v2403 = vsel %vm873, %v1061, %v2344
    %v2404 = vsel %vm873, %v1064, %v2346
    %v2405 = vsel %vm873, %v1105, %v2348
    %v2406 = vsel %vm873, %v1108, %v2350
    %v2407 = vsel %vm105, %v2403, %v2360
    %v2408 = vsel %vm105, %v2404, %v2362
    %v2409 = vsel %vm105, %v2405, %v2364
    %v2410 = vsel %vm105, %v2406, %v2366
    %vm2411 = vcmask 785408
    %v2412 = vsel %vm2411, %v2407, %v2376
    %v2413 = vsel %vm2411, %v2408, %v2378
    %v2414 = vsel %vm2411, %v2409, %v2380
    %v2415 = vsel %vm2411, %v2410, %v2382
    %v2416 = vsel %vm873, %v2037, %v2392
    %v2417 = vsel %vm873, %v2040, %v2394
    %v2418 = vsel %vm873, %v2081, %v2396
    %v2419 = vsel %vm873, %v2084, %v2398
    %v2420 = vpack.c.bf16 %v2413, %v2412
    %v2421 = vpack.c.bf16 %v2417, %v2416
    %v2422 = vpack.c.bf16 %v2415, %v2414
    %v2423 = vpack.c.bf16 %v2419, %v2418
    %v2424 = vld [vmem:[%s9] sm:$0xff]
    %v2425 = vld [vmem:[%s9 + $0x8] sm:$0xff]
    %v2426 = vld [vmem:[%s9 + $0x10] sm:$0xff]
    %v2427 = vld [vmem:[%s9 + $0x18] sm:$0xff]
    %v2428 = vld [vmem:[%s9 + $0x20] sm:$0xff]
    %v2429 = vld [vmem:[%s9 + $0x28] sm:$0xff]
    %v2430 = vld [vmem:[%s9 + $0x30] sm:$0xff]
    %v2431 = vld [vmem:[%s9 + $0x38] sm:$0xff]
    %v2432 = vld [vmem:[%s9 + $0x40] sm:$0xff]
    %v2433 = vld [vmem:[%s9 + $0x48] sm:$0xff]
    %v2434 = vld [vmem:[%s9 + $0x50] sm:$0xff]
    %v2435 = vld [vmem:[%s9 + $0x58] sm:$0xff]
    %v2436 = vld [vmem:[%s9 + $0x60] sm:$0xff]
    %v2437 = vld [vmem:[%s9 + $0x68] sm:$0xff]
    %v2438 = vld [vmem:[%s9 + $0x70] sm:$0xff]
    %v2439 = vld [vmem:[%s9 + $0x78] sm:$0xff]
    %v2440 = vld [vmem:[%s9 + $0x80] sm:$0xff]
    %v2441 = vld [vmem:[%s9 + $0x88] sm:$0xff]
    %v2442 = vld [vmem:[%s9 + $0x90] sm:$0xff]
    %v2443 = vld [vmem:[%s9 + $0x98] sm:$0xff]
    %v2444 = vld [vmem:[%s9 + $0xa0] sm:$0xff]
    %v2445 = vld [vmem:[%s9 + $0xa8] sm:$0xff]
    %v2446 = vld [vmem:[%s9 + $0xb0] sm:$0xff]
    %v2447 = vld [vmem:[%s9 + $0xb8] sm:$0xff]
    %v2448 = vld [vmem:[%s10] sm:$0x3]
    %v2450 = vlaneseq
    %v2451 = vshrl.u32 %v2450, 7
    %v2452 = vsub.s32 0, %v2451
    %v2453 = vrot.slane %v2448, %v2452
    %v2454 = vlaneseq
    %v2455 = vshrl.u32 %v2454, 7
    %v2456 = vsub.s32 1, %v2455
    %v2457 = vrot.slane %v2448, %v2456
    %v2484 = vunpack.c.l.b16 %v2424
    %v2485 = vunpack.c.h.b16 %v2424
    %v2486 = vunpack.c.l.b16 %v2425
    %v2487 = vunpack.c.h.b16 %v2425
    %v2488 = vunpack.c.l.b16 %v2426
    %v2489 = vunpack.c.h.b16 %v2426
    %v2490 = vunpack.c.l.b16 %v2427
    %v2491 = vunpack.c.h.b16 %v2427
    %v2492 = vunpack.c.l.b16 %v2428
    %v2493 = vunpack.c.h.b16 %v2428
    %v2494 = vunpack.c.l.b16 %v2429
    %v2495 = vunpack.c.h.b16 %v2429
    %v2496 = vunpack.c.l.b16 %v2430
    %v2497 = vunpack.c.h.b16 %v2430
    %v2498 = vunpack.c.l.b16 %v2431
    %v2499 = vunpack.c.h.b16 %v2431
    %v2500 = vunpack.c.l.b16 %v2432
    %v2501 = vunpack.c.h.b16 %v2432
    %v2502 = vunpack.c.l.b16 %v2433
    %v2503 = vunpack.c.h.b16 %v2433
    %v2504 = vunpack.c.l.b16 %v2434
    %v2505 = vunpack.c.h.b16 %v2434
    %v2506 = vunpack.c.l.b16 %v2435
    %v2507 = vunpack.c.h.b16 %v2435
    %v2508 = vunpack.c.l.b16 %v2436
    %v2509 = vunpack.c.h.b16 %v2436
    %v2510 = vunpack.c.l.b16 %v2437
    %v2511 = vunpack.c.h.b16 %v2437
    %v2512 = vunpack.c.l.b16 %v2438
    %v2513 = vunpack.c.h.b16 %v2438
    %v2514 = vunpack.c.l.b16 %v2439
    %v2515 = vunpack.c.h.b16 %v2439
    %v2516 = vunpack.c.l.b16 %v2440
    %v2517 = vunpack.c.h.b16 %v2440
    %v2518 = vunpack.c.l.b16 %v2441
    %v2519 = vunpack.c.h.b16 %v2441
    %v2520 = vunpack.c.l.b16 %v2442
    %v2521 = vunpack.c.h.b16 %v2442
    %v2522 = vunpack.c.l.b16 %v2443
    %v2523 = vunpack.c.h.b16 %v2443
    %v2524 = vunpack.c.l.b16 %v2444
    %v2525 = vunpack.c.h.b16 %v2444
    %v2526 = vunpack.c.l.b16 %v2445
    %v2527 = vunpack.c.h.b16 %v2445
    %v2528 = vunpack.c.l.b16 %v2446
    %v2529 = vunpack.c.h.b16 %v2446
    %v2530 = vunpack.c.l.b16 %v2447
    %v2531 = vunpack.c.h.b16 %v2447
    %v2532 = vpack.c.b16 %v2486, %v2484
    %v2533 = vpack.c.b16 %v2487, %v2485
    %v2534 = vpack.c.b16 %v2490, %v2488
    %v2535 = vpack.c.b16 %v2491, %v2489
    %v2536 = vpack.c.b16 %v2494, %v2492
    %v2537 = vpack.c.b16 %v2495, %v2493
    %v2538 = vpack.c.b16 %v2498, %v2496
    %v2539 = vpack.c.b16 %v2499, %v2497
    %v2540 = vpack.c.b16 %v2502, %v2500
    %v2541 = vpack.c.b16 %v2503, %v2501
    %v2542 = vpack.c.b16 %v2506, %v2504
    %v2543 = vpack.c.b16 %v2507, %v2505
    %v2544 = vpack.c.b16 %v2510, %v2508
    %v2545 = vpack.c.b16 %v2511, %v2509
    %v2546 = vpack.c.b16 %v2514, %v2512
    %v2547 = vpack.c.b16 %v2515, %v2513
    %v2548 = vpack.c.b16 %v2518, %v2516
    %v2549 = vpack.c.b16 %v2519, %v2517
    %v2550 = vpack.c.b16 %v2522, %v2520
    %v2551 = vpack.c.b16 %v2523, %v2521
    %v2552 = vpack.c.b16 %v2526, %v2524
    %v2553 = vpack.c.b16 %v2527, %v2525
    %v2554 = vpack.c.b16 %v2530, %v2528
    %v2555 = vpack.c.b16 %v2531, %v2529
    %v2581 = vsel %vm105, %v2421, 0
    %v2584 = vsel %vm105, %v2423, 0
    %2586 = vmatprep.subr.bf16.mxu0 %v2533
    %2587 = vmatpush1.bf16.msra.mxu0 %v2532
    %2588 = vmatprep.subr.bf16.mxu0 %v2535
    %2589 = vmatpush1.bf16.msra.mxu0 %v2534
    %2590 = vmatprep.subr.bf16.mxu0 %v2537
    %2591 = vmatpush1.bf16.msra.mxu0 %v2536
    %2592 = vmatprep.subr.bf16.mxu0 %v2539
    %2593 = vmatpush1.bf16.msra.mxu0 %v2538
    %2594 = vmatprep.subr.bf16.mxu0 %v2541
    %2595 = vmatpush1.bf16.msra.mxu0 %v2540
    %2596 = vmatprep.subr.bf16.mxu0 %v2543
    %2597 = vmatpush1.bf16.msra.mxu0 %v2542
    %2598 = vmatprep.subr.bf16.mxu0 %v2545
    %2599 = vmatpush1.bf16.msra.mxu0 %v2544
    %2600 = vmatprep.subr.bf16.mxu0 %v2547
    %2601 = vmatpush1.bf16.msra.mxu0 %v2546
    %2602 = vmatprep.subr.bf16.mxu0 %v2549
    %2603 = vmatpush1.bf16.msra.mxu0 %v2548
    %2604 = vmatprep.subr.bf16.mxu0 %v2551
    %2605 = vmatpush1.bf16.msra.mxu0 %v2550
    %2606 = vmatprep.subr.bf16.mxu0 %v2553
    %2607 = vmatpush1.bf16.msra.mxu0 %v2552
    %2608 = vmatprep.subr.bf16.mxu0 %v2555
    %2609 = vmatpush1.bf16.msra.mxu0 %v2554
    %2610 = vmatprep.subr.bf16.mxu0 0
    %2611 = vmatpush1.bf16.msra.mxu0 0
    %2612 = vmatprep.subr.bf16.mxu0 0
    %2613 = vmatpush1.bf16.msra.mxu0 0
    %2614 = vmatprep.subr.bf16.mxu0 0
    %2615 = vmatpush1.bf16.msra.mxu0 0
    %2616 = vmatprep.subr.bf16.mxu0 0
    %2617 = vmatpush1.bf16.msra.mxu0 0
    %2618 = vmatprep.mubr.bf16.mxu0 %v2581
    %2619 = vmatmul.mubr.bf16.gmra.mrb[0].mxu0 %v2420
    %v2620 = vpop.f32.mrb[0].mxu0
    %v2621 = vadd.f32 %v2453, %v2620
    %v2622 = vpop.f32.mrb[0].mxu0
    %v2623 = vadd.f32 %v2457, %v2622
    %v2624 = vpop.f32.mrb[0].mxu0
    %v2625 = vadd.f32 %v2453, %v2624
    %v2626 = vpop.f32.mrb[0].mxu0
    %v2627 = vadd.f32 %v2457, %v2626
    %2628 = vmatprep.mubr.bf16.mxu0 %v2584
    %2629 = vmatmul.mubr.bf16.gmra.mrb[0].mxu0 %v2422
    %v2630 = vpop.f32.mrb[0].mxu0
    %v2631 = vadd.f32 %v2453, %v2630
    %v2632 = vpop.f32.mrb[0].mxu0
    %v2633 = vadd.f32 %v2457, %v2632
    %v2634 = vpop.f32.mrb[0].mxu0
    %v2635 = vadd.f32 %v2453, %v2634
    %v2636 = vpop.f32.mrb[0].mxu0
    %v2637 = vadd.f32 %v2457, %v2636
    %2638 = vdwg.mxu0
    %v2639 = vadd.f32 %v95, %v2621
    %v2640 = vadd.f32 %v96, %v2623
    %v2641 = vadd.f32 %v97, %v2625
    %v2642 = vadd.f32 %v98, %v2627
    %v2643 = vadd.f32 %v99, %v2631
    %v2644 = vadd.f32 %v100, %v2633
    %v2645 = vadd.f32 %v101, %v2635
    %v2646 = vadd.f32 %v102, %v2637
    %v2647 = vld [vmem:[%s11] sm:$0x3]
    %v2648 = vld [vmem:[%s12] sm:$0x3]
    %v2649 = vsel %vm105, %v2640, 0.0
    %v2650 = vadd.f32 %v2639, %v2649
    %2651 = vadd.xlane.f32.xlu0 %v2650
    %v2652 = vpop.xlane.xlu0 %2651
    %v2653 = vsel %vm105, %v2642, 0.0
    %v2654 = vadd.f32 %v2641, %v2653
    %2655 = vadd.xlane.f32.xlu0 %v2654
    %v2656 = vpop.xlane.xlu0 %2655
    %v2657 = vsel %vm105, %v2644, 0.0
    %v2658 = vadd.f32 %v2643, %v2657
    %2659 = vadd.xlane.f32.xlu0 %v2658
    %v2660 = vpop.xlane.xlu0 %2659
    %v2661 = vsel %vm105, %v2646, 0.0
    %v2662 = vadd.f32 %v2645, %v2661
    %2663 = vadd.xlane.f32.xlu0 %v2662
    %v2664 = vpop.xlane.xlu0 %2663
    %v2665 = vmul.f32 %v2652, %v122
    %v2666 = vmul.f32 %v2656, %v122
    %v2667 = vmul.f32 %v2660, %v122
    %v2668 = vmul.f32 %v2664, %v122
    %v2669 = vsub.f32 %v2639, %v2665
    %v2670 = vsub.f32 %v2640, %v2665
    %v2671 = vsub.f32 %v2641, %v2666
    %v2672 = vsub.f32 %v2642, %v2666
    %v2673 = vsub.f32 %v2643, %v2667
    %v2674 = vsub.f32 %v2644, %v2667
    %v2675 = vsub.f32 %v2645, %v2668
    %v2676 = vsub.f32 %v2646, %v2668
    %v2677 = vmul.f32 %v2669, %v2669
    %v2678 = vmul.f32 %v2670, %v2670
    %v2679 = vmul.f32 %v2671, %v2671
    %v2680 = vmul.f32 %v2672, %v2672
    %v2681 = vmul.f32 %v2673, %v2673
    %v2682 = vmul.f32 %v2674, %v2674
    %v2683 = vmul.f32 %v2675, %v2675
    %v2684 = vmul.f32 %v2676, %v2676
    %v2685 = vsel %vm105, %v2678, 0.0
    %v2686 = vadd.f32 %v2677, %v2685
    %2687 = vadd.xlane.f32.xlu0 %v2686
    %v2688 = vpop.xlane.xlu0 %2687
    %v2689 = vsel %vm105, %v2680, 0.0
    %v2690 = vadd.f32 %v2679, %v2689
    %2691 = vadd.xlane.f32.xlu0 %v2690
    %v2692 = vpop.xlane.xlu0 %2691
    %v2693 = vsel %vm105, %v2682, 0.0
    %v2694 = vadd.f32 %v2681, %v2693
    %2695 = vadd.xlane.f32.xlu0 %v2694
    %v2696 = vpop.xlane.xlu0 %2695
    %v2697 = vsel %vm105, %v2684, 0.0
    %v2698 = vadd.f32 %v2683, %v2697
    %2699 = vadd.xlane.f32.xlu0 %v2698
    %v2700 = vpop.xlane.xlu0 %2699
    %v2701 = vmul.f32 %v2688, %v122
    %v2702 = vmul.f32 %v2692, %v122
    %v2703 = vmul.f32 %v2696, %v122
    %v2704 = vmul.f32 %v2700, %v122
    %v2705 = vadd.f32 %v2701, 1e-05
    %v2706 = vadd.f32 %v2702, 1e-05
    %v2707 = vadd.f32 %v2703, 1e-05
    %v2708 = vadd.f32 %v2704, 1e-05
    %v2709 = vrsqrt.pop %v2705
    %v2710 = vrsqrt.pop %v2706
    %v2711 = vrsqrt.pop %v2707
    %v2712 = vrsqrt.pop %v2708
    %v2713 = vmul.f32 %v2669, %v2709
    %v2714 = vmul.f32 %v2670, %v2709
    %v2715 = vmul.f32 %v2671, %v2710
    %v2716 = vmul.f32 %v2672, %v2710
    %v2717 = vmul.f32 %v2673, %v2711
    %v2718 = vmul.f32 %v2674, %v2711
    %v2719 = vmul.f32 %v2675, %v2712
    %v2720 = vmul.f32 %v2676, %v2712
    %v2722 = vlaneseq
    %v2723 = vshrl.u32 %v2722, 7
    %v2724 = vsub.s32 0, %v2723
    %v2725 = vrot.slane %v2647, %v2724
    %v2726 = vlaneseq
    %v2727 = vshrl.u32 %v2726, 7
    %v2728 = vsub.s32 1, %v2727
    %v2729 = vrot.slane %v2647, %v2728
    %v2732 = vmul.f32 %v2713, %v2725
    %v2733 = vmul.f32 %v2714, %v2729
    %v2734 = vmul.f32 %v2715, %v2725
    %v2735 = vmul.f32 %v2716, %v2729
    %v2736 = vmul.f32 %v2717, %v2725
    %v2737 = vmul.f32 %v2718, %v2729
    %v2738 = vmul.f32 %v2719, %v2725
    %v2739 = vmul.f32 %v2720, %v2729
    %v2741 = vlaneseq
    %v2742 = vshrl.u32 %v2741, 7
    %v2743 = vsub.s32 0, %v2742
    %v2744 = vrot.slane %v2648, %v2743
    %v2745 = vlaneseq
    %v2746 = vshrl.u32 %v2745, 7
    %v2747 = vsub.s32 1, %v2746
    %v2748 = vrot.slane %v2648, %v2747
    %v2751 = vadd.f32 %v2732, %v2744
    %v2752 = vadd.f32 %v2733, %v2748
    %v2753 = vadd.f32 %v2734, %v2744
    %v2754 = vadd.f32 %v2735, %v2748
    %v2755 = vadd.f32 %v2736, %v2744
    %v2756 = vadd.f32 %v2737, %v2748
    %v2757 = vadd.f32 %v2738, %v2744
    %v2758 = vadd.f32 %v2739, %v2748
    %v2759 = vpack.c.bf16 %v2753, %v2751
    %v2760 = vpack.c.bf16 %v2754, %v2752
    %v2761 = vpack.c.bf16 %v2757, %v2755
    %v2762 = vpack.c.bf16 %v2758, %v2756
    %v2763 = vld [vmem:[%s13] sm:$0xff]
    %v2764 = vld [vmem:[%s13 + $0x8] sm:$0xff]
    %v2765 = vld [vmem:[%s13 + $0x10] sm:$0xff]
    %v2766 = vld [vmem:[%s13 + $0x18] sm:$0xff]
    %v2767 = vld [vmem:[%s13 + $0x20] sm:$0xff]
    %v2768 = vld [vmem:[%s13 + $0x28] sm:$0xff]
    %v2769 = vld [vmem:[%s13 + $0x30] sm:$0xff]
    %v2770 = vld [vmem:[%s13 + $0x38] sm:$0xff]
    %v2771 = vld [vmem:[%s13 + $0x40] sm:$0xff]
    %v2772 = vld [vmem:[%s13 + $0x48] sm:$0xff]
    %v2773 = vld [vmem:[%s13 + $0x50] sm:$0xff]
    %v2774 = vld [vmem:[%s13 + $0x58] sm:$0xff]
    %v2775 = vld [vmem:[%s13 + $0x60] sm:$0xff]
    %v2776 = vld [vmem:[%s13 + $0x68] sm:$0xff]
    %v2777 = vld [vmem:[%s13 + $0x70] sm:$0xff]
    %v2778 = vld [vmem:[%s13 + $0x78] sm:$0xff]
    %v2779 = vld [vmem:[%s13 + $0x80] sm:$0xff]
    %v2780 = vld [vmem:[%s13 + $0x88] sm:$0xff]
    %v2781 = vld [vmem:[%s13 + $0x90] sm:$0xff]
    %v2782 = vld [vmem:[%s13 + $0x98] sm:$0xff]
    %v2783 = vld [vmem:[%s13 + $0xa0] sm:$0xff]
    %v2784 = vld [vmem:[%s13 + $0xa8] sm:$0xff]
    %v2785 = vld [vmem:[%s13 + $0xb0] sm:$0xff]
    %v2786 = vld [vmem:[%s13 + $0xb8] sm:$0xff]
    %v2787 = vld [vmem:[%s13 + $0xc0] sm:$0xff]
    %v2788 = vld [vmem:[%s13 + $0xc8] sm:$0xff]
    %v2789 = vld [vmem:[%s13 + $0xd0] sm:$0xff]
    %v2790 = vld [vmem:[%s13 + $0xd8] sm:$0xff]
    %v2791 = vld [vmem:[%s13 + $0xe0] sm:$0xff]
    %v2792 = vld [vmem:[%s13 + $0xe8] sm:$0xff]
    %v2793 = vld [vmem:[%s13 + $0xf0] sm:$0xff]
    %v2794 = vld [vmem:[%s13 + $0xf8] sm:$0xff]
    %v2795 = vld [vmem:[%s13 + $0x100] sm:$0xff]
    %v2796 = vld [vmem:[%s13 + $0x108] sm:$0xff]
    %v2797 = vld [vmem:[%s13 + $0x110] sm:$0xff]
    %v2798 = vld [vmem:[%s13 + $0x118] sm:$0xff]
    %v2799 = vld [vmem:[%s13 + $0x120] sm:$0xff]
    %v2800 = vld [vmem:[%s13 + $0x128] sm:$0xff]
    %v2801 = vld [vmem:[%s13 + $0x130] sm:$0xff]
    %v2802 = vld [vmem:[%s13 + $0x138] sm:$0xff]
    %v2803 = vld [vmem:[%s13 + $0x140] sm:$0xff]
    %v2804 = vld [vmem:[%s13 + $0x148] sm:$0xff]
    %v2805 = vld [vmem:[%s13 + $0x150] sm:$0xff]
    %v2806 = vld [vmem:[%s13 + $0x158] sm:$0xff]
    %v2807 = vld [vmem:[%s13 + $0x160] sm:$0xff]
    %v2808 = vld [vmem:[%s13 + $0x168] sm:$0xff]
    %v2809 = vld [vmem:[%s13 + $0x170] sm:$0xff]
    %v2810 = vld [vmem:[%s13 + $0x178] sm:$0xff]
    %v2811 = vld [vmem:[%s13 + $0x180] sm:$0xff]
    %v2812 = vld [vmem:[%s13 + $0x188] sm:$0xff]
    %v2813 = vld [vmem:[%s13 + $0x190] sm:$0xff]
    %v2814 = vld [vmem:[%s13 + $0x198] sm:$0xff]
    %v2815 = vld [vmem:[%s13 + $0x1a0] sm:$0xff]
    %v2816 = vld [vmem:[%s13 + $0x1a8] sm:$0xff]
    %v2817 = vld [vmem:[%s13 + $0x1b0] sm:$0xff]
    %v2818 = vld [vmem:[%s13 + $0x1b8] sm:$0xff]
    %v2819 = vld [vmem:[%s13 + $0x1c0] sm:$0xff]
    %v2820 = vld [vmem:[%s13 + $0x1c8] sm:$0xff]
    %v2821 = vld [vmem:[%s13 + $0x1d0] sm:$0xff]
    %v2822 = vld [vmem:[%s13 + $0x1d8] sm:$0xff]
    %v2823 = vld [vmem:[%s13 + $0x1e0] sm:$0xff]
    %v2824 = vld [vmem:[%s13 + $0x1e8] sm:$0xff]
    %v2825 = vld [vmem:[%s13 + $0x1f0] sm:$0xff]
    %v2826 = vld [vmem:[%s13 + $0x1f8] sm:$0xff]
    %v2827 = vld [vmem:[%s13 + $0x200] sm:$0xff]
    %v2828 = vld [vmem:[%s13 + $0x208] sm:$0xff]
    %v2829 = vld [vmem:[%s13 + $0x210] sm:$0xff]
    %v2830 = vld [vmem:[%s13 + $0x218] sm:$0xff]
    %v2831 = vld [vmem:[%s13 + $0x220] sm:$0xff]
    %v2832 = vld [vmem:[%s13 + $0x228] sm:$0xff]
    %v2833 = vld [vmem:[%s13 + $0x230] sm:$0xff]
    %v2834 = vld [vmem:[%s13 + $0x238] sm:$0xff]
    %v2835 = vld [vmem:[%s14] sm:$0x3f]
    %v2837 = vlaneseq
    %v2838 = vshrl.u32 %v2837, 7
    %v2839 = vsub.s32 0, %v2838
    %v2840 = vrot.slane %v2835, %v2839
    %v2841 = vlaneseq
    %v2842 = vshrl.u32 %v2841, 7
    %v2843 = vsub.s32 1, %v2842
    %v2844 = vrot.slane %v2835, %v2843
    %v2845 = vlaneseq
    %v2846 = vshrl.u32 %v2845, 7
    %v2847 = vsub.s32 2, %v2846
    %v2848 = vrot.slane %v2835, %v2847
    %v2849 = vlaneseq
    %v2850 = vshrl.u32 %v2849, 7
    %v2851 = vsub.s32 3, %v2850
    %v2852 = vrot.slane %v2835, %v2851
    %v2853 = vlaneseq
    %v2854 = vshrl.u32 %v2853, 7
    %v2855 = vsub.s32 4, %v2854
    %v2856 = vrot.slane %v2835, %v2855
    %v2857 = vlaneseq
    %v2858 = vshrl.u32 %v2857, 7
    %v2859 = vsub.s32 5, %v2858
    %v2860 = vrot.slane %v2835, %v2859
    %v2939 = vunpack.c.l.b16 %v2763
    %v2940 = vunpack.c.h.b16 %v2763
    %v2941 = vunpack.c.l.b16 %v2764
    %v2942 = vunpack.c.h.b16 %v2764
    %v2943 = vunpack.c.l.b16 %v2765
    %v2944 = vunpack.c.h.b16 %v2765
    %v2945 = vunpack.c.l.b16 %v2766
    %v2946 = vunpack.c.h.b16 %v2766
    %v2947 = vunpack.c.l.b16 %v2767
    %v2948 = vunpack.c.h.b16 %v2767
    %v2949 = vunpack.c.l.b16 %v2768
    %v2950 = vunpack.c.h.b16 %v2768
    %v2951 = vunpack.c.l.b16 %v2769
    %v2952 = vunpack.c.h.b16 %v2769
    %v2953 = vunpack.c.l.b16 %v2770
    %v2954 = vunpack.c.h.b16 %v2770
    %v2955 = vunpack.c.l.b16 %v2771
    %v2956 = vunpack.c.h.b16 %v2771
    %v2957 = vunpack.c.l.b16 %v2772
    %v2958 = vunpack.c.h.b16 %v2772
    %v2959 = vunpack.c.l.b16 %v2773
    %v2960 = vunpack.c.h.b16 %v2773
    %v2961 = vunpack.c.l.b16 %v2774
    %v2962 = vunpack.c.h.b16 %v2774
    %v2963 = vunpack.c.l.b16 %v2775
    %v2964 = vunpack.c.h.b16 %v2775
    %v2965 = vunpack.c.l.b16 %v2776
    %v2966 = vunpack.c.h.b16 %v2776
    %v2967 = vunpack.c.l.b16 %v2777
    %v2968 = vunpack.c.h.b16 %v2777
    %v2969 = vunpack.c.l.b16 %v2778
    %v2970 = vunpack.c.h.b16 %v2778
    %v2971 = vunpack.c.l.b16 %v2779
    %v2972 = vunpack.c.h.b16 %v2779
    %v2973 = vunpack.c.l.b16 %v2780
    %v2974 = vunpack.c.h.b16 %v2780
    %v2975 = vunpack.c.l.b16 %v2781
    %v2976 = vunpack.c.h.b16 %v2781
    %v2977 = vunpack.c.l.b16 %v2782
    %v2978 = vunpack.c.h.b16 %v2782
    %v2979 = vunpack.c.l.b16 %v2783
    %v2980 = vunpack.c.h.b16 %v2783
    %v2981 = vunpack.c.l.b16 %v2784
    %v2982 = vunpack.c.h.b16 %v2784
    %v2983 = vunpack.c.l.b16 %v2785
    %v2984 = vunpack.c.h.b16 %v2785
    %v2985 = vunpack.c.l.b16 %v2786
    %v2986 = vunpack.c.h.b16 %v2786
    %v2987 = vunpack.c.l.b16 %v2787
    %v2988 = vunpack.c.h.b16 %v2787
    %v2989 = vunpack.c.l.b16 %v2788
    %v2990 = vunpack.c.h.b16 %v2788
    %v2991 = vunpack.c.l.b16 %v2789
    %v2992 = vunpack.c.h.b16 %v2789
    %v2993 = vunpack.c.l.b16 %v2790
    %v2994 = vunpack.c.h.b16 %v2790
    %v2995 = vunpack.c.l.b16 %v2791
    %v2996 = vunpack.c.h.b16 %v2791
    %v2997 = vunpack.c.l.b16 %v2792
    %v2998 = vunpack.c.h.b16 %v2792
    %v2999 = vunpack.c.l.b16 %v2793
    %v3000 = vunpack.c.h.b16 %v2793
    %v3001 = vunpack.c.l.b16 %v2794
    %v3002 = vunpack.c.h.b16 %v2794
    %v3003 = vunpack.c.l.b16 %v2795
    %v3004 = vunpack.c.h.b16 %v2795
    %v3005 = vunpack.c.l.b16 %v2796
    %v3006 = vunpack.c.h.b16 %v2796
    %v3007 = vunpack.c.l.b16 %v2797
    %v3008 = vunpack.c.h.b16 %v2797
    %v3009 = vunpack.c.l.b16 %v2798
    %v3010 = vunpack.c.h.b16 %v2798
    %v3011 = vunpack.c.l.b16 %v2799
    %v3012 = vunpack.c.h.b16 %v2799
    %v3013 = vunpack.c.l.b16 %v2800
    %v3014 = vunpack.c.h.b16 %v2800
    %v3015 = vunpack.c.l.b16 %v2801
    %v3016 = vunpack.c.h.b16 %v2801
    %v3017 = vunpack.c.l.b16 %v2802
    %v3018 = vunpack.c.h.b16 %v2802
    %v3019 = vunpack.c.l.b16 %v2803
    %v3020 = vunpack.c.h.b16 %v2803
    %v3021 = vunpack.c.l.b16 %v2804
    %v3022 = vunpack.c.h.b16 %v2804
    %v3023 = vunpack.c.l.b16 %v2805
    %v3024 = vunpack.c.h.b16 %v2805
    %v3025 = vunpack.c.l.b16 %v2806
    %v3026 = vunpack.c.h.b16 %v2806
    %v3027 = vunpack.c.l.b16 %v2807
    %v3028 = vunpack.c.h.b16 %v2807
    %v3029 = vunpack.c.l.b16 %v2808
    %v3030 = vunpack.c.h.b16 %v2808
    %v3031 = vunpack.c.l.b16 %v2809
    %v3032 = vunpack.c.h.b16 %v2809
    %v3033 = vunpack.c.l.b16 %v2810
    %v3034 = vunpack.c.h.b16 %v2810
    %v3035 = vunpack.c.l.b16 %v2811
    %v3036 = vunpack.c.h.b16 %v2811
    %v3037 = vunpack.c.l.b16 %v2812
    %v3038 = vunpack.c.h.b16 %v2812
    %v3039 = vunpack.c.l.b16 %v2813
    %v3040 = vunpack.c.h.b16 %v2813
    %v3041 = vunpack.c.l.b16 %v2814
    %v3042 = vunpack.c.h.b16 %v2814
    %v3043 = vunpack.c.l.b16 %v2815
    %v3044 = vunpack.c.h.b16 %v2815
    %v3045 = vunpack.c.l.b16 %v2816
    %v3046 = vunpack.c.h.b16 %v2816
    %v3047 = vunpack.c.l.b16 %v2817
    %v3048 = vunpack.c.h.b16 %v2817
    %v3049 = vunpack.c.l.b16 %v2818
    %v3050 = vunpack.c.h.b16 %v2818
    %v3051 = vunpack.c.l.b16 %v2819
    %v3052 = vunpack.c.h.b16 %v2819
    %v3053 = vunpack.c.l.b16 %v2820
    %v3054 = vunpack.c.h.b16 %v2820
    %v3055 = vunpack.c.l.b16 %v2821
    %v3056 = vunpack.c.h.b16 %v2821
    %v3057 = vunpack.c.l.b16 %v2822
    %v3058 = vunpack.c.h.b16 %v2822
    %v3059 = vunpack.c.l.b16 %v2823
    %v3060 = vunpack.c.h.b16 %v2823
    %v3061 = vunpack.c.l.b16 %v2824
    %v3062 = vunpack.c.h.b16 %v2824
    %v3063 = vunpack.c.l.b16 %v2825
    %v3064 = vunpack.c.h.b16 %v2825
    %v3065 = vunpack.c.l.b16 %v2826
    %v3066 = vunpack.c.h.b16 %v2826
    %v3067 = vunpack.c.l.b16 %v2827
    %v3068 = vunpack.c.h.b16 %v2827
    %v3069 = vunpack.c.l.b16 %v2828
    %v3070 = vunpack.c.h.b16 %v2828
    %v3071 = vunpack.c.l.b16 %v2829
    %v3072 = vunpack.c.h.b16 %v2829
    %v3073 = vunpack.c.l.b16 %v2830
    %v3074 = vunpack.c.h.b16 %v2830
    %v3075 = vunpack.c.l.b16 %v2831
    %v3076 = vunpack.c.h.b16 %v2831
    %v3077 = vunpack.c.l.b16 %v2832
    %v3078 = vunpack.c.h.b16 %v2832
    %v3079 = vunpack.c.l.b16 %v2833
    %v3080 = vunpack.c.h.b16 %v2833
    %v3081 = vunpack.c.l.b16 %v2834
    %v3082 = vunpack.c.h.b16 %v2834
    %v3083 = vpack.c.b16 %v2945, %v2939
    %v3084 = vpack.c.b16 %v2946, %v2940
    %v3085 = vpack.c.b16 %v2947, %v2941
    %v3086 = vpack.c.b16 %v2948, %v2942
    %v3087 = vpack.c.b16 %v2949, %v2943
    %v3088 = vpack.c.b16 %v2950, %v2944
    %v3089 = vpack.c.b16 %v2957, %v2951
    %v3090 = vpack.c.b16 %v2958, %v2952
    %v3091 = vpack.c.b16 %v2959, %v2953
    %v3092 = vpack.c.b16 %v2960, %v2954
    %v3093 = vpack.c.b16 %v2961, %v2955
    %v3094 = vpack.c.b16 %v2962, %v2956
    %v3095 = vpack.c.b16 %v2969, %v2963
    %v3096 = vpack.c.b16 %v2970, %v2964
    %v3097 = vpack.c.b16 %v2971, %v2965
    %v3098 = vpack.c.b16 %v2972, %v2966
    %v3099 = vpack.c.b16 %v2973, %v2967
    %v3100 = vpack.c.b16 %v2974, %v2968
    %v3101 = vpack.c.b16 %v2981, %v2975
    %v3102 = vpack.c.b16 %v2982, %v2976
    %v3103 = vpack.c.b16 %v2983, %v2977
    %v3104 = vpack.c.b16 %v2984, %v2978
    %v3105 = vpack.c.b16 %v2985, %v2979
    %v3106 = vpack.c.b16 %v2986, %v2980
    %v3107 = vpack.c.b16 %v2993, %v2987
    %v3108 = vpack.c.b16 %v2994, %v2988
    %v3109 = vpack.c.b16 %v2995, %v2989
    %v3110 = vpack.c.b16 %v2996, %v2990
    %v3111 = vpack.c.b16 %v2997, %v2991
    %v3112 = vpack.c.b16 %v2998, %v2992
    %v3113 = vpack.c.b16 %v3005, %v2999
    %v3114 = vpack.c.b16 %v3006, %v3000
    %v3115 = vpack.c.b16 %v3007, %v3001
    %v3116 = vpack.c.b16 %v3008, %v3002
    %v3117 = vpack.c.b16 %v3009, %v3003
    %v3118 = vpack.c.b16 %v3010, %v3004
    %v3119 = vpack.c.b16 %v3017, %v3011
    %v3120 = vpack.c.b16 %v3018, %v3012
    %v3121 = vpack.c.b16 %v3019, %v3013
    %v3122 = vpack.c.b16 %v3020, %v3014
    %v3123 = vpack.c.b16 %v3021, %v3015
    %v3124 = vpack.c.b16 %v3022, %v3016
    %v3125 = vpack.c.b16 %v3029, %v3023
    %v3126 = vpack.c.b16 %v3030, %v3024
    %v3127 = vpack.c.b16 %v3031, %v3025
    %v3128 = vpack.c.b16 %v3032, %v3026
    %v3129 = vpack.c.b16 %v3033, %v3027
    %v3130 = vpack.c.b16 %v3034, %v3028
    %v3131 = vpack.c.b16 %v3041, %v3035
    %v3132 = vpack.c.b16 %v3042, %v3036
    %v3133 = vpack.c.b16 %v3043, %v3037
    %v3134 = vpack.c.b16 %v3044, %v3038
    %v3135 = vpack.c.b16 %v3045, %v3039
    %v3136 = vpack.c.b16 %v3046, %v3040
    %v3137 = vpack.c.b16 %v3053, %v3047
    %v3138 = vpack.c.b16 %v3054, %v3048
    %v3139 = vpack.c.b16 %v3055, %v3049
    %v3140 = vpack.c.b16 %v3056, %v3050
    %v3141 = vpack.c.b16 %v3057, %v3051
    %v3142 = vpack.c.b16 %v3058, %v3052
    %v3143 = vpack.c.b16 %v3065, %v3059
    %v3144 = vpack.c.b16 %v3066, %v3060
    %v3145 = vpack.c.b16 %v3067, %v3061
    %v3146 = vpack.c.b16 %v3068, %v3062
    %v3147 = vpack.c.b16 %v3069, %v3063
    %v3148 = vpack.c.b16 %v3070, %v3064
    %v3149 = vpack.c.b16 %v3077, %v3071
    %v3150 = vpack.c.b16 %v3078, %v3072
    %v3151 = vpack.c.b16 %v3079, %v3073
    %v3152 = vpack.c.b16 %v3080, %v3074
    %v3153 = vpack.c.b16 %v3081, %v3075
    %v3154 = vpack.c.b16 %v3082, %v3076
    %v3228 = vsel %vm105, %v2760, 0
    %v3231 = vsel %vm105, %v2762, 0
    %3233 = vmatprep.subr.bf16.mxu0 %v3084
    %3234 = vmatpush1.bf16.msra.mxu0 %v3083
    %3235 = vmatprep.subr.bf16.mxu0 %v3090
    %3236 = vmatpush1.bf16.msra.mxu0 %v3089
    %3237 = vmatprep.subr.bf16.mxu0 %v3096
    %3238 = vmatpush1.bf16.msra.mxu0 %v3095
    %3239 = vmatprep.subr.bf16.mxu0 %v3102
    %3240 = vmatpush1.bf16.msra.mxu0 %v3101
    %3241 = vmatprep.subr.bf16.mxu0 %v3108
    %3242 = vmatpush1.bf16.msra.mxu0 %v3107
    %3243 = vmatprep.subr.bf16.mxu0 %v3114
    %3244 = vmatpush1.bf16.msra.mxu0 %v3113
    %3245 = vmatprep.subr.bf16.mxu0 %v3120
    %3246 = vmatpush1.bf16.msra.mxu0 %v3119
    %3247 = vmatprep.subr.bf16.mxu0 %v3126
    %3248 = vmatpush1.bf16.msra.mxu0 %v3125
    %3249 = vmatprep.subr.bf16.mxu0 %v3132
    %3250 = vmatpush1.bf16.msra.mxu0 %v3131
    %3251 = vmatprep.subr.bf16.mxu0 %v3138
    %3252 = vmatpush1.bf16.msra.mxu0 %v3137
    %3253 = vmatprep.subr.bf16.mxu0 %v3144
    %3254 = vmatpush1.bf16.msra.mxu0 %v3143
    %3255 = vmatprep.subr.bf16.mxu0 %v3150
    %3256 = vmatpush1.bf16.msra.mxu0 %v3149
    %3257 = vmatprep.subr.bf16.mxu0 0
    %3258 = vmatpush1.bf16.msra.mxu0 0
    %3259 = vmatprep.subr.bf16.mxu0 0
    %3260 = vmatpush1.bf16.msra.mxu0 0
    %3261 = vmatprep.subr.bf16.mxu0 0
    %3262 = vmatpush1.bf16.msra.mxu0 0
    %3263 = vmatprep.subr.bf16.mxu0 0
    %3264 = vmatpush1.bf16.msra.mxu0 0
    %3265 = vmatprep.mubr.bf16.mxu0 %v3228
    %3266 = vmatmul.mubr.bf16.gmra.mrb[0].mxu0 %v2759
    %v3267 = vpop.f32.mrb[0].mxu0
    %v3268 = vadd.f32 %v2840, %v3267
    %v3269 = vpop.f32.mrb[0].mxu0
    %v3270 = vadd.f32 %v2844, %v3269
    %v3271 = vpop.f32.mrb[0].mxu0
    %v3272 = vadd.f32 %v2840, %v3271
    %v3273 = vpop.f32.mrb[0].mxu0
    %v3274 = vadd.f32 %v2844, %v3273
    %3275 = vmatprep.mubr.bf16.mxu0 %v3231
    %3276 = vmatmul.mubr.bf16.gmra.mrb[0].mxu0 %v2761
    %v3277 = vpop.f32.mrb[0].mxu0
    %v3278 = vadd.f32 %v2840, %v3277
    %v3279 = vpop.f32.mrb[0].mxu0
    %v3280 = vadd.f32 %v2844, %v3279
    %v3281 = vpop.f32.mrb[0].mxu0
    %v3282 = vadd.f32 %v2840, %v3281
    %v3283 = vpop.f32.mrb[0].mxu0
    %v3284 = vadd.f32 %v2844, %v3283
    %3285 = vdwg.mxu0
    %3286 = vmatprep.subr.bf16.mxu0 %v3086
    %3287 = vmatpush1.bf16.msra.mxu0 %v3085
    %3288 = vmatprep.subr.bf16.mxu0 %v3092
    %3289 = vmatpush1.bf16.msra.mxu0 %v3091
    %3290 = vmatprep.subr.bf16.mxu0 %v3098
    %3291 = vmatpush1.bf16.msra.mxu0 %v3097
    %3292 = vmatprep.subr.bf16.mxu0 %v3104
    %3293 = vmatpush1.bf16.msra.mxu0 %v3103
    %3294 = vmatprep.subr.bf16.mxu0 %v3110
    %3295 = vmatpush1.bf16.msra.mxu0 %v3109
    %3296 = vmatprep.subr.bf16.mxu0 %v3116
    %3297 = vmatpush1.bf16.msra.mxu0 %v3115
    %3298 = vmatprep.subr.bf16.mxu0 %v3122
    %3299 = vmatpush1.bf16.msra.mxu0 %v3121
    %3300 = vmatprep.subr.bf16.mxu0 %v3128
    %3301 = vmatpush1.bf16.msra.mxu0 %v3127
    %3302 = vmatprep.subr.bf16.mxu0 %v3134
    %3303 = vmatpush1.bf16.msra.mxu0 %v3133
    %3304 = vmatprep.subr.bf16.mxu0 %v3140
    %3305 = vmatpush1.bf16.msra.mxu0 %v3139
    %3306 = vmatprep.subr.bf16.mxu0 %v3146
    %3307 = vmatpush1.bf16.msra.mxu0 %v3145
    %3308 = vmatprep.subr.bf16.mxu0 %v3152
    %3309 = vmatpush1.bf16.msra.mxu0 %v3151
    %3310 = vmatprep.subr.bf16.mxu0 0
    %3311 = vmatpush1.bf16.msra.mxu0 0
    %3312 = vmatprep.subr.bf16.mxu0 0
    %3313 = vmatpush1.bf16.msra.mxu0 0
    %3314 = vmatprep.subr.bf16.mxu0 0
    %3315 = vmatpush1.bf16.msra.mxu0 0
    %3316 = vmatprep.subr.bf16.mxu0 0
    %3317 = vmatpush1.bf16.msra.mxu0 0
    %3318 = vmatprep.mubr.bf16.mxu0 %v3228
    %3319 = vmatmul.mubr.bf16.gmra.mrb[0].mxu0 %v2759
    %v3320 = vpop.f32.mrb[0].mxu0
    %v3321 = vadd.f32 %v2848, %v3320
    %v3322 = vpop.f32.mrb[0].mxu0
    %v3323 = vadd.f32 %v2852, %v3322
    %v3324 = vpop.f32.mrb[0].mxu0
    %v3325 = vadd.f32 %v2848, %v3324
    %v3326 = vpop.f32.mrb[0].mxu0
    %v3327 = vadd.f32 %v2852, %v3326
    %3328 = vmatprep.mubr.bf16.mxu0 %v3231
    %3329 = vmatmul.mubr.bf16.gmra.mrb[0].mxu0 %v2761
    %v3330 = vpop.f32.mrb[0].mxu0
    %v3331 = vadd.f32 %v2848, %v3330
    %v3332 = vpop.f32.mrb[0].mxu0
    %v3333 = vadd.f32 %v2852, %v3332
    %v3334 = vpop.f32.mrb[0].mxu0
    %v3335 = vadd.f32 %v2848, %v3334
    %v3336 = vpop.f32.mrb[0].mxu0
    %v3337 = vadd.f32 %v2852, %v3336
    %3338 = vdwg.mxu0
    %3339 = vmatprep.subr.bf16.mxu0 %v3088
    %3340 = vmatpush1.bf16.msra.mxu0 %v3087
    %3341 = vmatprep.subr.bf16.mxu0 %v3094
    %3342 = vmatpush1.bf16.msra.mxu0 %v3093
    %3343 = vmatprep.subr.bf16.mxu0 %v3100
    %3344 = vmatpush1.bf16.msra.mxu0 %v3099
    %3345 = vmatprep.subr.bf16.mxu0 %v3106
    %3346 = vmatpush1.bf16.msra.mxu0 %v3105
    %3347 = vmatprep.subr.bf16.mxu0 %v3112
    %3348 = vmatpush1.bf16.msra.mxu0 %v3111
    %3349 = vmatprep.subr.bf16.mxu0 %v3118
    %3350 = vmatpush1.bf16.msra.mxu0 %v3117
    %3351 = vmatprep.subr.bf16.mxu0 %v3124
    %3352 = vmatpush1.bf16.msra.mxu0 %v3123
    %3353 = vmatprep.subr.bf16.mxu0 %v3130
    %3354 = vmatpush1.bf16.msra.mxu0 %v3129
    %3355 = vmatprep.subr.bf16.mxu0 %v3136
    %3356 = vmatpush1.bf16.msra.mxu0 %v3135
    %3357 = vmatprep.subr.bf16.mxu0 %v3142
    %3358 = vmatpush1.bf16.msra.mxu0 %v3141
    %3359 = vmatprep.subr.bf16.mxu0 %v3148
    %3360 = vmatpush1.bf16.msra.mxu0 %v3147
    %3361 = vmatprep.subr.bf16.mxu0 %v3154
    %3362 = vmatpush1.bf16.msra.mxu0 %v3153
    %3363 = vmatprep.subr.bf16.mxu0 0
    %3364 = vmatpush1.bf16.msra.mxu0 0
    %3365 = vmatprep.subr.bf16.mxu0 0
    %3366 = vmatpush1.bf16.msra.mxu0 0
    %3367 = vmatprep.subr.bf16.mxu0 0
    %3368 = vmatpush1.bf16.msra.mxu0 0
    %3369 = vmatprep.subr.bf16.mxu0 0
    %3370 = vmatpush1.bf16.msra.mxu0 0
    %3371 = vmatprep.mubr.bf16.mxu0 %v3228
    %3372 = vmatmul.mubr.bf16.gmra.mrb[0].mxu0 %v2759
    %v3373 = vpop.f32.mrb[0].mxu0
    %v3374 = vadd.f32 %v2856, %v3373
    %v3375 = vpop.f32.mrb[0].mxu0
    %v3376 = vadd.f32 %v2860, %v3375
    %v3377 = vpop.f32.mrb[0].mxu0
    %v3378 = vadd.f32 %v2856, %v3377
    %v3379 = vpop.f32.mrb[0].mxu0
    %v3380 = vadd.f32 %v2860, %v3379
    %3381 = vmatprep.mubr.bf16.mxu0 %v3231
    %3382 = vmatmul.mubr.bf16.gmra.mrb[0].mxu0 %v2761
    %v3383 = vpop.f32.mrb[0].mxu0
    %v3384 = vadd.f32 %v2856, %v3383
    %v3385 = vpop.f32.mrb[0].mxu0
    %v3386 = vadd.f32 %v2860, %v3385
    %v3387 = vpop.f32.mrb[0].mxu0
    %v3388 = vadd.f32 %v2856, %v3387
    %v3389 = vpop.f32.mrb[0].mxu0
    %v3390 = vadd.f32 %v2860, %v3389
    %3391 = vdwg.mxu0
    %v3392 = vmul.f32 %v3268, 0.5
    %v3393 = vmul.f32 %v3270, 0.5
    %v3394 = vmul.f32 %v3321, 0.5
    %v3395 = vmul.f32 %v3323, 0.5
    %v3396 = vmul.f32 %v3374, 0.5
    %v3397 = vmul.f32 %v3376, 0.5
    %v3398 = vmul.f32 %v3272, 0.5
    %v3399 = vmul.f32 %v3274, 0.5
    %v3400 = vmul.f32 %v3325, 0.5
    %v3401 = vmul.f32 %v3327, 0.5
    %v3402 = vmul.f32 %v3378, 0.5
    %v3403 = vmul.f32 %v3380, 0.5
    %v3404 = vmul.f32 %v3278, 0.5
    %v3405 = vmul.f32 %v3280, 0.5
    %v3406 = vmul.f32 %v3331, 0.5
    %v3407 = vmul.f32 %v3333, 0.5
    %v3408 = vmul.f32 %v3384, 0.5
    %v3409 = vmul.f32 %v3386, 0.5
    %v3410 = vmul.f32 %v3282, 0.5
    %v3411 = vmul.f32 %v3284, 0.5
    %v3412 = vmul.f32 %v3335, 0.5
    %v3413 = vmul.f32 %v3337, 0.5
    %v3414 = vmul.f32 %v3388, 0.5
    %v3415 = vmul.f32 %v3390, 0.5
    %v3416 = vmul.f32 %v3268, 0.044715
    %v3417 = vmul.f32 %v3270, 0.044715
    %v3418 = vmul.f32 %v3321, 0.044715
    %v3419 = vmul.f32 %v3323, 0.044715
    %v3420 = vmul.f32 %v3374, 0.044715
    %v3421 = vmul.f32 %v3376, 0.044715
    %v3422 = vmul.f32 %v3272, 0.044715
    %v3423 = vmul.f32 %v3274, 0.044715
    %v3424 = vmul.f32 %v3325, 0.044715
    %v3425 = vmul.f32 %v3327, 0.044715
    %v3426 = vmul.f32 %v3378, 0.044715
    %v3427 = vmul.f32 %v3380, 0.044715
    %v3428 = vmul.f32 %v3278, 0.044715
    %v3429 = vmul.f32 %v3280, 0.044715
    %v3430 = vmul.f32 %v3331, 0.044715
    %v3431 = vmul.f32 %v3333, 0.044715
    %v3432 = vmul.f32 %v3384, 0.044715
    %v3433 = vmul.f32 %v3386, 0.044715
    %v3434 = vmul.f32 %v3282, 0.044715
    %v3435 = vmul.f32 %v3284, 0.044715
    %v3436 = vmul.f32 %v3335, 0.044715
    %v3437 = vmul.f32 %v3337, 0.044715
    %v3438 = vmul.f32 %v3388, 0.044715
    %v3439 = vmul.f32 %v3390, 0.044715
    %v3440 = vmul.f32 %v3416, %v3268
    %v3441 = vmul.f32 %v3417, %v3270
    %v3442 = vmul.f32 %v3418, %v3321
    %v3443 = vmul.f32 %v3419, %v3323
    %v3444 = vmul.f32 %v3420, %v3374
    %v3445 = vmul.f32 %v3421, %v3376
    %v3446 = vmul.f32 %v3422, %v3272
    %v3447 = vmul.f32 %v3423, %v3274
    %v3448 = vmul.f32 %v3424, %v3325
    %v3449 = vmul.f32 %v3425, %v3327
    %v3450 = vmul.f32 %v3426, %v3378
    %v3451 = vmul.f32 %v3427, %v3380
    %v3452 = vmul.f32 %v3428, %v3278
    %v3453 = vmul.f32 %v3429, %v3280
    %v3454 = vmul.f32 %v3430, %v3331
    %v3455 = vmul.f32 %v3431, %v3333
    %v3456 = vmul.f32 %v3432, %v3384
    %v3457 = vmul.f32 %v3433, %v3386
    %v3458 = vmul.f32 %v3434, %v3282
    %v3459 = vmul.f32 %v3435, %v3284
    %v3460 = vmul.f32 %v3436, %v3335
    %v3461 = vmul.f32 %v3437, %v3337
    %v3462 = vmul.f32 %v3438, %v3388
    %v3463 = vmul.f32 %v3439, %v3390
    %v3464 = vmul.f32 %v3440, %v3268
    %v3465 = vmul.f32 %v3441, %v3270
    %v3466 = vmul.f32 %v3442, %v3321
    %v3467 = vmul.f32 %v3443, %v3323
    %v3468 = vmul.f32 %v3444, %v3374
    %v3469 = vmul.f32 %v3445, %v3376
    %v3470 = vmul.f32 %v3446, %v3272
    %v3471 = vmul.f32 %v3447, %v3274
    %v3472 = vmul.f32 %v3448, %v3325
    %v3473 = vmul.f32 %v3449, %v3327
    %v3474 = vmul.f32 %v3450, %v3378
    %v3475 = vmul.f32 %v3451, %v3380
    %v3476 = vmul.f32 %v3452, %v3278
    %v3477 = vmul.f32 %v3453, %v3280
    %v3478 = vmul.f32 %v3454, %v3331
    %v3479 = vmul.f32 %v3455, %v3333
    %v3480 = vmul.f32 %v3456, %v3384
    %v3481 = vmul.f32 %v3457, %v3386
    %v3482 = vmul.f32 %v3458, %v3282
    %v3483 = vmul.f32 %v3459, %v3284
    %v3484 = vmul.f32 %v3460, %v3335
    %v3485 = vmul.f32 %v3461, %v3337
    %v3486 = vmul.f32 %v3462, %v3388
    %v3487 = vmul.f32 %v3463, %v3390
    %v3488 = vadd.f32 %v3268, %v3464
    %v3489 = vadd.f32 %v3270, %v3465
    %v3490 = vadd.f32 %v3321, %v3466
    %v3491 = vadd.f32 %v3323, %v3467
    %v3492 = vadd.f32 %v3374, %v3468
    %v3493 = vadd.f32 %v3376, %v3469
    %v3494 = vadd.f32 %v3272, %v3470
    %v3495 = vadd.f32 %v3274, %v3471
    %v3496 = vadd.f32 %v3325, %v3472
    %v3497 = vadd.f32 %v3327, %v3473
    %v3498 = vadd.f32 %v3378, %v3474
    %v3499 = vadd.f32 %v3380, %v3475
    %v3500 = vadd.f32 %v3278, %v3476
    %v3501 = vadd.f32 %v3280, %v3477
    %v3502 = vadd.f32 %v3331, %v3478
    %v3503 = vadd.f32 %v3333, %v3479
    %v3504 = vadd.f32 %v3384, %v3480
    %v3505 = vadd.f32 %v3386, %v3481
    %v3506 = vadd.f32 %v3282, %v3482
    %v3507 = vadd.f32 %v3284, %v3483
    %v3508 = vadd.f32 %v3335, %v3484
    %v3509 = vadd.f32 %v3337, %v3485
    %v3510 = vadd.f32 %v3388, %v3486
    %v3511 = vadd.f32 %v3390, %v3487
    %v3512 = vmul.f32 %v3488, 0.7978846
    %v3513 = vmul.f32 %v3489, 0.7978846
    %v3514 = vmul.f32 %v3490, 0.7978846
    %v3515 = vmul.f32 %v3491, 0.7978846
    %v3516 = vmul.f32 %v3492, 0.7978846
    %v3517 = vmul.f32 %v3493, 0.7978846
    %v3518 = vmul.f32 %v3494, 0.7978846
    %v3519 = vmul.f32 %v3495, 0.7978846
    %v3520 = vmul.f32 %v3496, 0.7978846
    %v3521 = vmul.f32 %v3497, 0.7978846
    %v3522 = vmul.f32 %v3498, 0.7978846
    %v3523 = vmul.f32 %v3499, 0.7978846
    %v3524 = vmul.f32 %v3500, 0.7978846
    %v3525 = vmul.f32 %v3501, 0.7978846
    %v3526 = vmul.f32 %v3502, 0.7978846
    %v3527 = vmul.f32 %v3503, 0.7978846
    %v3528 = vmul.f32 %v3504, 0.7978846
    %v3529 = vmul.f32 %v3505, 0.7978846
    %v3530 = vmul.f32 %v3506, 0.7978846
    %v3531 = vmul.f32 %v3507, 0.7978846
    %v3532 = vmul.f32 %v3508, 0.7978846
    %v3533 = vmul.f32 %v3509, 0.7978846
    %v3534 = vmul.f32 %v3510, 0.7978846
    %v3535 = vmul.f32 %v3511, 0.7978846
    %v3536 = vtanh.pop %v3512
    %v3537 = vtanh.pop %v3513
    %v3538 = vtanh.pop %v3514
    %v3539 = vtanh.pop %v3515
    %v3540 = vtanh.pop %v3516
    %v3541 = vtanh.pop %v3517
    %v3542 = vtanh.pop %v3518
    %v3543 = vtanh.pop %v3519
    %v3544 = vtanh.pop %v3520
    %v3545 = vtanh.pop %v3521
    %v3546 = vtanh.pop %v3522
    %v3547 = vtanh.pop %v3523
    %v3548 = vtanh.pop %v3524
    %v3549 = vtanh.pop %v3525
    %v3550 = vtanh.pop %v3526
    %v3551 = vtanh.pop %v3527
    %v3552 = vtanh.pop %v3528
    %v3553 = vtanh.pop %v3529
    %v3554 = vtanh.pop %v3530
    %v3555 = vtanh.pop %v3531
    %v3556 = vtanh.pop %v3532
    %v3557 = vtanh.pop %v3533
    %v3558 = vtanh.pop %v3534
    %v3559 = vtanh.pop %v3535
    %v3560 = vadd.f32 %v3536, 1.0
    %v3561 = vadd.f32 %v3537, 1.0
    %v3562 = vadd.f32 %v3538, 1.0
    %v3563 = vadd.f32 %v3539, 1.0
    %v3564 = vadd.f32 %v3540, 1.0
    %v3565 = vadd.f32 %v3541, 1.0
    %v3566 = vadd.f32 %v3542, 1.0
    %v3567 = vadd.f32 %v3543, 1.0
    %v3568 = vadd.f32 %v3544, 1.0
    %v3569 = vadd.f32 %v3545, 1.0
    %v3570 = vadd.f32 %v3546, 1.0
    %v3571 = vadd.f32 %v3547, 1.0
    %v3572 = vadd.f32 %v3548, 1.0
    %v3573 = vadd.f32 %v3549, 1.0
    %v3574 = vadd.f32 %v3550, 1.0
    %v3575 = vadd.f32 %v3551, 1.0
    %v3576 = vadd.f32 %v3552, 1.0
    %v3577 = vadd.f32 %v3553, 1.0
    %v3578 = vadd.f32 %v3554, 1.0
    %v3579 = vadd.f32 %v3555, 1.0
    %v3580 = vadd.f32 %v3556, 1.0
    %v3581 = vadd.f32 %v3557, 1.0
    %v3582 = vadd.f32 %v3558, 1.0
    %v3583 = vadd.f32 %v3559, 1.0
    %v3584 = vmul.f32 %v3392, %v3560
    %v3585 = vmul.f32 %v3393, %v3561
    %v3586 = vmul.f32 %v3394, %v3562
    %v3587 = vmul.f32 %v3395, %v3563
    %v3588 = vmul.f32 %v3396, %v3564
    %v3589 = vmul.f32 %v3397, %v3565
    %v3590 = vmul.f32 %v3398, %v3566
    %v3591 = vmul.f32 %v3399, %v3567
    %v3592 = vmul.f32 %v3400, %v3568
    %v3593 = vmul.f32 %v3401, %v3569
    %v3594 = vmul.f32 %v3402, %v3570
    %v3595 = vmul.f32 %v3403, %v3571
    %v3596 = vmul.f32 %v3404, %v3572
    %v3597 = vmul.f32 %v3405, %v3573
    %v3598 = vmul.f32 %v3406, %v3574
    %v3599 = vmul.f32 %v3407, %v3575
    %v3600 = vmul.f32 %v3408, %v3576
    %v3601 = vmul.f32 %v3409, %v3577
    %v3602 = vmul.f32 %v3410, %v3578
    %v3603 = vmul.f32 %v3411, %v3579
    %v3604 = vmul.f32 %v3412, %v3580
    %v3605 = vmul.f32 %v3413, %v3581
    %v3606 = vmul.f32 %v3414, %v3582
    %v3607 = vmul.f32 %v3415, %v3583
    %v3608 = vpack.c.bf16 %v3590, %v3584
    %v3609 = vpack.c.bf16 %v3591, %v3585
    %v3610 = vpack.c.bf16 %v3592, %v3586
    %v3611 = vpack.c.bf16 %v3593, %v3587
    %v3612 = vpack.c.bf16 %v3594, %v3588
    %v3613 = vpack.c.bf16 %v3595, %v3589
    %v3614 = vpack.c.bf16 %v3602, %v3596
    %v3615 = vpack.c.bf16 %v3603, %v3597
    %v3616 = vpack.c.bf16 %v3604, %v3598
    %v3617 = vpack.c.bf16 %v3605, %v3599
    %v3618 = vpack.c.bf16 %v3606, %v3600
    %v3619 = vpack.c.bf16 %v3607, %v3601
    %v3620 = vld [vmem:[%s15] sm:$0xff]
    %v3621 = vld [vmem:[%s15 + $0x8] sm:$0xff]
    %v3622 = vld [vmem:[%s15 + $0x10] sm:$0xff]
    %v3623 = vld [vmem:[%s15 + $0x18] sm:$0xff]
    %v3624 = vld [vmem:[%s15 + $0x20] sm:$0xff]
    %v3625 = vld [vmem:[%s15 + $0x28] sm:$0xff]
    %v3626 = vld [vmem:[%s15 + $0x30] sm:$0xff]
    %v3627 = vld [vmem:[%s15 + $0x38] sm:$0xff]
    %v3628 = vld [vmem:[%s15 + $0x40] sm:$0xff]
    %v3629 = vld [vmem:[%s15 + $0x48] sm:$0xff]
    %v3630 = vld [vmem:[%s15 + $0x50] sm:$0xff]
    %v3631 = vld [vmem:[%s15 + $0x58] sm:$0xff]
    %v3632 = vld [vmem:[%s15 + $0x60] sm:$0xff]
    %v3633 = vld [vmem:[%s15 + $0x68] sm:$0xff]
    %v3634 = vld [vmem:[%s15 + $0x70] sm:$0xff]
    %v3635 = vld [vmem:[%s15 + $0x78] sm:$0xff]
    %v3636 = vld [vmem:[%s15 + $0x80] sm:$0xff]
    %v3637 = vld [vmem:[%s15 + $0x88] sm:$0xff]
    %v3638 = vld [vmem:[%s15 + $0x90] sm:$0xff]
    %v3639 = vld [vmem:[%s15 + $0x98] sm:$0xff]
    %v3640 = vld [vmem:[%s15 + $0xa0] sm:$0xff]
    %v3641 = vld [vmem:[%s15 + $0xa8] sm:$0xff]
    %v3642 = vld [vmem:[%s15 + $0xb0] sm:$0xff]
    %v3643 = vld [vmem:[%s15 + $0xb8] sm:$0xff]
    %v3644 = vld [vmem:[%s15 + $0xc0] sm:$0xff]
    %v3645 = vld [vmem:[%s15 + $0xc8] sm:$0xff]
    %v3646 = vld [vmem:[%s15 + $0xd0] sm:$0xff]
    %v3647 = vld [vmem:[%s15 + $0xd8] sm:$0xff]
    %v3648 = vld [vmem:[%s15 + $0xe0] sm:$0xff]
    %v3649 = vld [vmem:[%s15 + $0xe8] sm:$0xff]
    %v3650 = vld [vmem:[%s15 + $0xf0] sm:$0xff]
    %v3651 = vld [vmem:[%s15 + $0xf8] sm:$0xff]
    %v3652 = vld [vmem:[%s15 + $0x100] sm:$0xff]
    %v3653 = vld [vmem:[%s15 + $0x108] sm:$0xff]
    %v3654 = vld [vmem:[%s15 + $0x110] sm:$0xff]
    %v3655 = vld [vmem:[%s15 + $0x118] sm:$0xff]
    %v3656 = vld [vmem:[%s15 + $0x120] sm:$0xff]
    %v3657 = vld [vmem:[%s15 + $0x128] sm:$0xff]
    %v3658 = vld [vmem:[%s15 + $0x130] sm:$0xff]
    %v3659 = vld [vmem:[%s15 + $0x138] sm:$0xff]
    %v3660 = vld [vmem:[%s15 + $0x140] sm:$0xff]
    %v3661 = vld [vmem:[%s15 + $0x148] sm:$0xff]
    %v3662 = vld [vmem:[%s15 + $0x150] sm:$0xff]
    %v3663 = vld [vmem:[%s15 + $0x158] sm:$0xff]
    %v3664 = vld [vmem:[%s15 + $0x160] sm:$0xff]
    %v3665 = vld [vmem:[%s15 + $0x168] sm:$0xff]
    %v3666 = vld [vmem:[%s15 + $0x170] sm:$0xff]
    %v3667 = vld [vmem:[%s15 + $0x178] sm:$0xff]
    %v3668 = vld [vmem:[%s15 + $0x180] sm:$0xff]
    %v3669 = vld [vmem:[%s15 + $0x188] sm:$0xff]
    %v3670 = vld [vmem:[%s15 + $0x190] sm:$0xff]
    %v3671 = vld [vmem:[%s15 + $0x198] sm:$0xff]
    %v3672 = vld [vmem:[%s15 + $0x1a0] sm:$0xff]
    %v3673 = vld [vmem:[%s15 + $0x1a8] sm:$0xff]
    %v3674 = vld [vmem:[%s15 + $0x1b0] sm:$0xff]
    %v3675 = vld [vmem:[%s15 + $0x1b8] sm:$0xff]
    %v3676 = vld [vmem:[%s15 + $0x1c0] sm:$0xff]
    %v3677 = vld [vmem:[%s15 + $0x1c8] sm:$0xff]
    %v3678 = vld [vmem:[%s15 + $0x1d0] sm:$0xff]
    %v3679 = vld [vmem:[%s15 + $0x1d8] sm:$0xff]
    %v3680 = vld [vmem:[%s15 + $0x1e0] sm:$0xff]
    %v3681 = vld [vmem:[%s15 + $0x1e8] sm:$0xff]
    %v3682 = vld [vmem:[%s15 + $0x1f0] sm:$0xff]
    %v3683 = vld [vmem:[%s15 + $0x1f8] sm:$0xff]
    %v3684 = vld [vmem:[%s15 + $0x200] sm:$0xff]
    %v3685 = vld [vmem:[%s15 + $0x208] sm:$0xff]
    %v3686 = vld [vmem:[%s15 + $0x210] sm:$0xff]
    %v3687 = vld [vmem:[%s15 + $0x218] sm:$0xff]
    %v3688 = vld [vmem:[%s15 + $0x220] sm:$0xff]
    %v3689 = vld [vmem:[%s15 + $0x228] sm:$0xff]
    %v3690 = vld [vmem:[%s15 + $0x230] sm:$0xff]
    %v3691 = vld [vmem:[%s15 + $0x238] sm:$0xff]
    %v3692 = vld [vmem:[%s15 + $0x240] sm:$0xff]
    %v3693 = vld [vmem:[%s15 + $0x248] sm:$0xff]
    %v3694 = vld [vmem:[%s15 + $0x250] sm:$0xff]
    %v3695 = vld [vmem:[%s15 + $0x258] sm:$0xff]
    %v3696 = vld [vmem:[%s15 + $0x260] sm:$0xff]
    %v3697 = vld [vmem:[%s15 + $0x268] sm:$0xff]
    %v3698 = vld [vmem:[%s15 + $0x270] sm:$0xff]
    %v3699 = vld [vmem:[%s15 + $0x278] sm:$0xff]
    %v3700 = vld [vmem:[%s15 + $0x280] sm:$0xff]
    %v3701 = vld [vmem:[%s15 + $0x288] sm:$0xff]
    %v3702 = vld [vmem:[%s15 + $0x290] sm:$0xff]
    %v3703 = vld [vmem:[%s15 + $0x298] sm:$0xff]
    %v3704 = vld [vmem:[%s15 + $0x2a0] sm:$0xff]
    %v3705 = vld [vmem:[%s15 + $0x2a8] sm:$0xff]
    %v3706 = vld [vmem:[%s15 + $0x2b0] sm:$0xff]
    %v3707 = vld [vmem:[%s15 + $0x2b8] sm:$0xff]
    %v3708 = vld [vmem:[%s15 + $0x2c0] sm:$0xff]
    %v3709 = vld [vmem:[%s15 + $0x2c8] sm:$0xff]
    %v3710 = vld [vmem:[%s15 + $0x2d0] sm:$0xff]
    %v3711 = vld [vmem:[%s15 + $0x2d8] sm:$0xff]
    %v3712 = vld [vmem:[%s15 + $0x2e0] sm:$0xff]
    %v3713 = vld [vmem:[%s15 + $0x2e8] sm:$0xff]
    %v3714 = vld [vmem:[%s15 + $0x2f0] sm:$0xff]
    %v3715 = vld [vmem:[%s15 + $0x2f8] sm:$0xff]
    %v3716 = vld [vmem:[%s16] sm:$0x3]
    %v3718 = vlaneseq
    %v3719 = vshrl.u32 %v3718, 7
    %v3720 = vsub.s32 0, %v3719
    %v3721 = vrot.slane %v3716, %v3720
    %v3722 = vlaneseq
    %v3723 = vshrl.u32 %v3722, 7
    %v3724 = vsub.s32 1, %v3723
    %v3725 = vrot.slane %v3716, %v3724
    %v3824 = vunpack.c.l.b16 %v3620
    %v3825 = vunpack.c.h.b16 %v3620
    %v3826 = vunpack.c.l.b16 %v3621
    %v3827 = vunpack.c.h.b16 %v3621
    %v3828 = vunpack.c.l.b16 %v3622
    %v3829 = vunpack.c.h.b16 %v3622
    %v3830 = vunpack.c.l.b16 %v3623
    %v3831 = vunpack.c.h.b16 %v3623
    %v3832 = vunpack.c.l.b16 %v3624
    %v3833 = vunpack.c.h.b16 %v3624
    %v3834 = vunpack.c.l.b16 %v3625
    %v3835 = vunpack.c.h.b16 %v3625
    %v3836 = vunpack.c.l.b16 %v3626
    %v3837 = vunpack.c.h.b16 %v3626
    %v3838 = vunpack.c.l.b16 %v3627
    %v3839 = vunpack.c.h.b16 %v3627
    %v3840 = vunpack.c.l.b16 %v3628
    %v3841 = vunpack.c.h.b16 %v3628
    %v3842 = vunpack.c.l.b16 %v3629
    %v3843 = vunpack.c.h.b16 %v3629
    %v3844 = vunpack.c.l.b16 %v3630
    %v3845 = vunpack.c.h.b16 %v3630
    %v3846 = vunpack.c.l.b16 %v3631
    %v3847 = vunpack.c.h.b16 %v3631
    %v3848 = vunpack.c.l.b16 %v3632
    %v3849 = vunpack.c.h.b16 %v3632
    %v3850 = vunpack.c.l.b16 %v3633
    %v3851 = vunpack.c.h.b16 %v3633
    %v3852 = vunpack.c.l.b16 %v3634
    %v3853 = vunpack.c.h.b16 %v3634
    %v3854 = vunpack.c.l.b16 %v3635
    %v3855 = vunpack.c.h.b16 %v3635
    %v3856 = vunpack.c.l.b16 %v3636
    %v3857 = vunpack.c.h.b16 %v3636
    %v3858 = vunpack.c.l.b16 %v3637
    %v3859 = vunpack.c.h.b16 %v3637
    %v3860 = vunpack.c.l.b16 %v3638
    %v3861 = vunpack.c.h.b16 %v3638
    %v3862 = vunpack.c.l.b16 %v3639
    %v3863 = vunpack.c.h.b16 %v3639
    %v3864 = vunpack.c.l.b16 %v3640
    %v3865 = vunpack.c.h.b16 %v3640
    %v3866 = vunpack.c.l.b16 %v3641
    %v3867 = vunpack.c.h.b16 %v3641
    %v3868 = vunpack.c.l.b16 %v3642
    %v3869 = vunpack.c.h.b16 %v3642
    %v3870 = vunpack.c.l.b16 %v3643
    %v3871 = vunpack.c.h.b16 %v3643
    %v3872 = vunpack.c.l.b16 %v3644
    %v3873 = vunpack.c.h.b16 %v3644
    %v3874 = vunpack.c.l.b16 %v3645
    %v3875 = vunpack.c.h.b16 %v3645
    %v3876 = vunpack.c.l.b16 %v3646
    %v3877 = vunpack.c.h.b16 %v3646
    %v3878 = vunpack.c.l.b16 %v3647
    %v3879 = vunpack.c.h.b16 %v3647
    %v3880 = vunpack.c.l.b16 %v3648
    %v3881 = vunpack.c.h.b16 %v3648
    %v3882 = vunpack.c.l.b16 %v3649
    %v3883 = vunpack.c.h.b16 %v3649
    %v3884 = vunpack.c.l.b16 %v3650
    %v3885 = vunpack.c.h.b16 %v3650
    %v3886 = vunpack.c.l.b16 %v3651
    %v3887 = vunpack.c.h.b16 %v3651
    %v3888 = vunpack.c.l.b16 %v3652
    %v3889 = vunpack.c.h.b16 %v3652
    %v3890 = vunpack.c.l.b16 %v3653
    %v3891 = vunpack.c.h.b16 %v3653
    %v3892 = vunpack.c.l.b16 %v3654
    %v3893 = vunpack.c.h.b16 %v3654
    %v3894 = vunpack.c.l.b16 %v3655
    %v3895 = vunpack.c.h.b16 %v3655
    %v3896 = vunpack.c.l.b16 %v3656
    %v3897 = vunpack.c.h.b16 %v3656
    %v3898 = vunpack.c.l.b16 %v3657
    %v3899 = vunpack.c.h.b16 %v3657
    %v3900 = vunpack.c.l.b16 %v3658
    %v3901 = vunpack.c.h.b16 %v3658
    %v3902 = vunpack.c.l.b16 %v3659
    %v3903 = vunpack.c.h.b16 %v3659
    %v3904 = vunpack.c.l.b16 %v3660
    %v3905 = vunpack.c.h.b16 %v3660
    %v3906 = vunpack.c.l.b16 %v3661
    %v3907 = vunpack.c.h.b16 %v3661
    %v3908 = vunpack.c.l.b16 %v3662
    %v3909 = vunpack.c.h.b16 %v3662
    %v3910 = vunpack.c.l.b16 %v3663
    %v3911 = vunpack.c.h.b16 %v3663
    %v3912 = vunpack.c.l.b16 %v3664
    %v3913 = vunpack.c.h.b16 %v3664
    %v3914 = vunpack.c.l.b16 %v3665
    %v3915 = vunpack.c.h.b16 %v3665
    %v3916 = vunpack.c.l.b16 %v3666
    %v3917 = vunpack.c.h.b16 %v3666
    %v3918 = vunpack.c.l.b16 %v3667
    %v3919 = vunpack.c.h.b16 %v3667
    %v3920 = vunpack.c.l.b16 %v3668
    %v3921 = vunpack.c.h.b16 %v3668
    %v3922 = vunpack.c.l.b16 %v3669
    %v3923 = vunpack.c.h.b16 %v3669
    %v3924 = vunpack.c.l.b16 %v3670
    %v3925 = vunpack.c.h.b16 %v3670
    %v3926 = vunpack.c.l.b16 %v3671
    %v3927 = vunpack.c.h.b16 %v3671
    %v3928 = vunpack.c.l.b16 %v3672
    %v3929 = vunpack.c.h.b16 %v3672
    %v3930 = vunpack.c.l.b16 %v3673
    %v3931 = vunpack.c.h.b16 %v3673
    %v3932 = vunpack.c.l.b16 %v3674
    %v3933 = vunpack.c.h.b16 %v3674
    %v3934 = vunpack.c.l.b16 %v3675
    %v3935 = vunpack.c.h.b16 %v3675
    %v3936 = vunpack.c.l.b16 %v3676
    %v3937 = vunpack.c.h.b16 %v3676
    %v3938 = vunpack.c.l.b16 %v3677
    %v3939 = vunpack.c.h.b16 %v3677
    %v3940 = vunpack.c.l.b16 %v3678
    %v3941 = vunpack.c.h.b16 %v3678
    %v3942 = vunpack.c.l.b16 %v3679
    %v3943 = vunpack.c.h.b16 %v3679
    %v3944 = vunpack.c.l.b16 %v3680
    %v3945 = vunpack.c.h.b16 %v3680
    %v3946 = vunpack.c.l.b16 %v3681
    %v3947 = vunpack.c.h.b16 %v3681
    %v3948 = vunpack.c.l.b16 %v3682
    %v3949 = vunpack.c.h.b16 %v3682
    %v3950 = vunpack.c.l.b16 %v3683
    %v3951 = vunpack.c.h.b16 %v3683
    %v3952 = vunpack.c.l.b16 %v3684
    %v3953 = vunpack.c.h.b16 %v3684
    %v3954 = vunpack.c.l.b16 %v3685
    %v3955 = vunpack.c.h.b16 %v3685
    %v3956 = vunpack.c.l.b16 %v3686
    %v3957 = vunpack.c.h.b16 %v3686
    %v3958 = vunpack.c.l.b16 %v3687
    %v3959 = vunpack.c.h.b16 %v3687
    %v3960 = vunpack.c.l.b16 %v3688
    %v3961 = vunpack.c.h.b16 %v3688
    %v3962 = vunpack.c.l.b16 %v3689
    %v3963 = vunpack.c.h.b16 %v3689
    %v3964 = vunpack.c.l.b16 %v3690
    %v3965 = vunpack.c.h.b16 %v3690
    %v3966 = vunpack.c.l.b16 %v3691
    %v3967 = vunpack.c.h.b16 %v3691
    %v3968 = vunpack.c.l.b16 %v3692
    %v3969 = vunpack.c.h.b16 %v3692
    %v3970 = vunpack.c.l.b16 %v3693
    %v3971 = vunpack.c.h.b16 %v3693
    %v3972 = vunpack.c.l.b16 %v3694
    %v3973 = vunpack.c.h.b16 %v3694
    %v3974 = vunpack.c.l.b16 %v3695
    %v3975 = vunpack.c.h.b16 %v3695
    %v3976 = vunpack.c.l.b16 %v3696
    %v3977 = vunpack.c.h.b16 %v3696
    %v3978 = vunpack.c.l.b16 %v3697
    %v3979 = vunpack.c.h.b16 %v3697
    %v3980 = vunpack.c.l.b16 %v3698
    %v3981 = vunpack.c.h.b16 %v3698
    %v3982 = vunpack.c.l.b16 %v3699
    %v3983 = vunpack.c.h.b16 %v3699
    %v3984 = vunpack.c.l.b16 %v3700
    %v3985 = vunpack.c.h.b16 %v3700
    %v3986 = vunpack.c.l.b16 %v3701
    %v3987 = vunpack.c.h.b16 %v3701
    %v3988 = vunpack.c.l.b16 %v3702
    %v3989 = vunpack.c.h.b16 %v3702
    %v3990 = vunpack.c.l.b16 %v3703
    %v3991 = vunpack.c.h.b16 %v3703
    %v3992 = vunpack.c.l.b16 %v3704
    %v3993 = vunpack.c.h.b16 %v3704
    %v3994 = vunpack.c.l.b16 %v3705
    %v3995 = vunpack.c.h.b16 %v3705
    %v3996 = vunpack.c.l.b16 %v3706
    %v3997 = vunpack.c.h.b16 %v3706
    %v3998 = vunpack.c.l.b16 %v3707
    %v3999 = vunpack.c.h.b16 %v3707
    %v4000 = vunpack.c.l.b16 %v3708
    %v4001 = vunpack.c.h.b16 %v3708
    %v4002 = vunpack.c.l.b16 %v3709
    %v4003 = vunpack.c.h.b16 %v3709
    %v4004 = vunpack.c.l.b16 %v3710
    %v4005 = vunpack.c.h.b16 %v3710
    %v4006 = vunpack.c.l.b16 %v3711
    %v4007 = vunpack.c.h.b16 %v3711
    %v4008 = vunpack.c.l.b16 %v3712
    %v4009 = vunpack.c.h.b16 %v3712
    %v4010 = vunpack.c.l.b16 %v3713
    %v4011 = vunpack.c.h.b16 %v3713
    %v4012 = vunpack.c.l.b16 %v3714
    %v4013 = vunpack.c.h.b16 %v3714
    %v4014 = vunpack.c.l.b16 %v3715
    %v4015 = vunpack.c.h.b16 %v3715
    %v4016 = vpack.c.b16 %v3826, %v3824
    %v4017 = vpack.c.b16 %v3827, %v3825
    %v4018 = vpack.c.b16 %v3830, %v3828
    %v4019 = vpack.c.b16 %v3831, %v3829
    %v4020 = vpack.c.b16 %v3834, %v3832
    %v4021 = vpack.c.b16 %v3835, %v3833
    %v4022 = vpack.c.b16 %v3838, %v3836
    %v4023 = vpack.c.b16 %v3839, %v3837
    %v4024 = vpack.c.b16 %v3842, %v3840
    %v4025 = vpack.c.b16 %v3843, %v3841
    %v4026 = vpack.c.b16 %v3846, %v3844
    %v4027 = vpack.c.b16 %v3847, %v3845
    %v4028 = vpack.c.b16 %v3850, %v3848
    %v4029 = vpack.c.b16 %v3851, %v3849
    %v4030 = vpack.c.b16 %v3854, %v3852
    %v4031 = vpack.c.b16 %v3855, %v3853
    %v4032 = vpack.c.b16 %v3858, %v3856
    %v4033 = vpack.c.b16 %v3859, %v3857
    %v4034 = vpack.c.b16 %v3862, %v3860
    %v4035 = vpack.c.b16 %v3863, %v3861
    %v4036 = vpack.c.b16 %v3866, %v3864
    %v4037 = vpack.c.b16 %v3867, %v3865
    %v4038 = vpack.c.b16 %v3870, %v3868
    %v4039 = vpack.c.b16 %v3871, %v3869
    %v4040 = vpack.c.b16 %v3874, %v3872
    %v4041 = vpack.c.b16 %v3875, %v3873
    %v4042 = vpack.c.b16 %v3878, %v3876
    %v4043 = vpack.c.b16 %v3879, %v3877
    %v4044 = vpack.c.b16 %v3882, %v3880
    %v4045 = vpack.c.b16 %v3883, %v3881
    %v4046 = vpack.c.b16 %v3886, %v3884
    %v4047 = vpack.c.b16 %v3887, %v3885
    %v4048 = vpack.c.b16 %v3890, %v3888
    %v4049 = vpack.c.b16 %v3891, %v3889
    %v4050 = vpack.c.b16 %v3894, %v3892
    %v4051 = vpack.c.b16 %v3895, %v3893
    %v4052 = vpack.c.b16 %v3898, %v3896
    %v4053 = vpack.c.b16 %v3899, %v3897
    %v4054 = vpack.c.b16 %v3902, %v3900
    %v4055 = vpack.c.b16 %v3903, %v3901
    %v4056 = vpack.c.b16 %v3906, %v3904
    %v4057 = vpack.c.b16 %v3907, %v3905
    %v4058 = vpack.c.b16 %v3910, %v3908
    %v4059 = vpack.c.b16 %v3911, %v3909
    %v4060 = vpack.c.b16 %v3914, %v3912
    %v4061 = vpack.c.b16 %v3915, %v3913
    %v4062 = vpack.c.b16 %v3918, %v3916
    %v4063 = vpack.c.b16 %v3919, %v3917
    %v4064 = vpack.c.b16 %v3922, %v3920
    %v4065 = vpack.c.b16 %v3923, %v3921
    %v4066 = vpack.c.b16 %v3926, %v3924
    %v4067 = vpack.c.b16 %v3927, %v3925
    %v4068 = vpack.c.b16 %v3930, %v3928
    %v4069 = vpack.c.b16 %v3931, %v3929
    %v4070 = vpack.c.b16 %v3934, %v3932
    %v4071 = vpack.c.b16 %v3935, %v3933
    %v4072 = vpack.c.b16 %v3938, %v3936
    %v4073 = vpack.c.b16 %v3939, %v3937
    %v4074 = vpack.c.b16 %v3942, %v3940
    %v4075 = vpack.c.b16 %v3943, %v3941
    %v4076 = vpack.c.b16 %v3946, %v3944
    %v4077 = vpack.c.b16 %v3947, %v3945
    %v4078 = vpack.c.b16 %v3950, %v3948
    %v4079 = vpack.c.b16 %v3951, %v3949
    %v4080 = vpack.c.b16 %v3954, %v3952
    %v4081 = vpack.c.b16 %v3955, %v3953
    %v4082 = vpack.c.b16 %v3958, %v3956
    %v4083 = vpack.c.b16 %v3959, %v3957
    %v4084 = vpack.c.b16 %v3962, %v3960
    %v4085 = vpack.c.b16 %v3963, %v3961
    %v4086 = vpack.c.b16 %v3966, %v3964
    %v4087 = vpack.c.b16 %v3967, %v3965
    %v4088 = vpack.c.b16 %v3970, %v3968
    %v4089 = vpack.c.b16 %v3971, %v3969
    %v4090 = vpack.c.b16 %v3974, %v3972
    %v4091 = vpack.c.b16 %v3975, %v3973
    %v4092 = vpack.c.b16 %v3978, %v3976
    %v4093 = vpack.c.b16 %v3979, %v3977
    %v4094 = vpack.c.b16 %v3982, %v3980
    %v4095 = vpack.c.b16 %v3983, %v3981
    %v4096 = vpack.c.b16 %v3986, %v3984
    %v4097 = vpack.c.b16 %v3987, %v3985
    %v4098 = vpack.c.b16 %v3990, %v3988
    %v4099 = vpack.c.b16 %v3991, %v3989
    %v4100 = vpack.c.b16 %v3994, %v3992
    %v4101 = vpack.c.b16 %v3995, %v3993
    %v4102 = vpack.c.b16 %v3998, %v3996
    %v4103 = vpack.c.b16 %v3999, %v3997
    %v4104 = vpack.c.b16 %v4002, %v4000
    %v4105 = vpack.c.b16 %v4003, %v4001
    %v4106 = vpack.c.b16 %v4006, %v4004
    %v4107 = vpack.c.b16 %v4007, %v4005
    %v4108 = vpack.c.b16 %v4010, %v4008
    %v4109 = vpack.c.b16 %v4011, %v4009
    %v4110 = vpack.c.b16 %v4014, %v4012
    %v4111 = vpack.c.b16 %v4015, %v4013
    %4208 = vmatprep.subr.bf16.mxu0 %v4017
    %4209 = vmatpush1.bf16.msra.mxu0 %v4016
    %4210 = vmatprep.subr.bf16.mxu0 %v4019
    %4211 = vmatpush1.bf16.msra.mxu0 %v4018
    %4212 = vmatprep.subr.bf16.mxu0 %v4021
    %4213 = vmatpush1.bf16.msra.mxu0 %v4020
    %4214 = vmatprep.subr.bf16.mxu0 %v4023
    %4215 = vmatpush1.bf16.msra.mxu0 %v4022
    %4216 = vmatprep.subr.bf16.mxu0 %v4025
    %4217 = vmatpush1.bf16.msra.mxu0 %v4024
    %4218 = vmatprep.subr.bf16.mxu0 %v4027
    %4219 = vmatpush1.bf16.msra.mxu0 %v4026
    %4220 = vmatprep.subr.bf16.mxu0 %v4029
    %4221 = vmatpush1.bf16.msra.mxu0 %v4028
    %4222 = vmatprep.subr.bf16.mxu0 %v4031
    %4223 = vmatpush1.bf16.msra.mxu0 %v4030
    %4224 = vmatprep.subr.bf16.mxu0 %v4033
    %4225 = vmatpush1.bf16.msra.mxu0 %v4032
    %4226 = vmatprep.subr.bf16.mxu0 %v4035
    %4227 = vmatpush1.bf16.msra.mxu0 %v4034
    %4228 = vmatprep.subr.bf16.mxu0 %v4037
    %4229 = vmatpush1.bf16.msra.mxu0 %v4036
    %4230 = vmatprep.subr.bf16.mxu0 %v4039
    %4231 = vmatpush1.bf16.msra.mxu0 %v4038
    %4232 = vmatprep.subr.bf16.mxu0 %v4041
    %4233 = vmatpush1.bf16.msra.mxu0 %v4040
    %4234 = vmatprep.subr.bf16.mxu0 %v4043
    %4235 = vmatpush1.bf16.msra.mxu0 %v4042
    %4236 = vmatprep.subr.bf16.mxu0 %v4045
    %4237 = vmatpush1.bf16.msra.mxu0 %v4044
    %4238 = vmatprep.subr.bf16.mxu0 %v4047
    %4239 = vmatpush1.bf16.msra.mxu0 %v4046
    %4240 = vmatprep.mubr.bf16.mxu0 %v3609
    %4241 = vmatmul.mubr.bf16.gmra.mrb[0].mxu0 %v3608
    %v4242 = vpop.f32.mrb[0].mxu0
    %v4243 = vadd.f32 %v3721, %v4242
    %v4244 = vpop.f32.mrb[0].mxu0
    %v4245 = vadd.f32 %v3725, %v4244
    %v4246 = vpop.f32.mrb[0].mxu0
    %v4247 = vadd.f32 %v3721, %v4246
    %v4248 = vpop.f32.mrb[0].mxu0
    %v4249 = vadd.f32 %v3725, %v4248
    %4250 = vmatprep.mubr.bf16.mxu0 %v3615
    %4251 = vmatmul.mubr.bf16.gmra.mrb[0].mxu0 %v3614
    %v4252 = vpop.f32.mrb[0].mxu0
    %v4253 = vadd.f32 %v3721, %v4252
    %v4254 = vpop.f32.mrb[0].mxu0
    %v4255 = vadd.f32 %v3725, %v4254
    %v4256 = vpop.f32.mrb[0].mxu0
    %v4257 = vadd.f32 %v3721, %v4256
    %v4258 = vpop.f32.mrb[0].mxu0
    %v4259 = vadd.f32 %v3725, %v4258
    %4260 = vdwg.mxu0
    %4261 = vmatprep.subr.bf16.mxu0 %v4049
    %4262 = vmatpush1.bf16.msra.mxu0 %v4048
    %4263 = vmatprep.subr.bf16.mxu0 %v4051
    %4264 = vmatpush1.bf16.msra.mxu0 %v4050
    %4265 = vmatprep.subr.bf16.mxu0 %v4053
    %4266 = vmatpush1.bf16.msra.mxu0 %v4052
    %4267 = vmatprep.subr.bf16.mxu0 %v4055
    %4268 = vmatpush1.bf16.msra.mxu0 %v4054
    %4269 = vmatprep.subr.bf16.mxu0 %v4057
    %4270 = vmatpush1.bf16.msra.mxu0 %v4056
    %4271 = vmatprep.subr.bf16.mxu0 %v4059
    %4272 = vmatpush1.bf16.msra.mxu0 %v4058
    %4273 = vmatprep.subr.bf16.mxu0 %v4061
    %4274 = vmatpush1.bf16.msra.mxu0 %v4060
    %4275 = vmatprep.subr.bf16.mxu0 %v4063
    %4276 = vmatpush1.bf16.msra.mxu0 %v4062
    %4277 = vmatprep.subr.bf16.mxu0 %v4065
    %4278 = vmatpush1.bf16.msra.mxu0 %v4064
    %4279 = vmatprep.subr.bf16.mxu0 %v4067
    %4280 = vmatpush1.bf16.msra.mxu0 %v4066
    %4281 = vmatprep.subr.bf16.mxu0 %v4069
    %4282 = vmatpush1.bf16.msra.mxu0 %v4068
    %4283 = vmatprep.subr.bf16.mxu0 %v4071
    %4284 = vmatpush1.bf16.msra.mxu0 %v4070
    %4285 = vmatprep.subr.bf16.mxu0 %v4073
    %4286 = vmatpush1.bf16.msra.mxu0 %v4072
    %4287 = vmatprep.subr.bf16.mxu0 %v4075
    %4288 = vmatpush1.bf16.msra.mxu0 %v4074
    %4289 = vmatprep.subr.bf16.mxu0 %v4077
    %4290 = vmatpush1.bf16.msra.mxu0 %v4076
    %4291 = vmatprep.subr.bf16.mxu0 %v4079
    %4292 = vmatpush1.bf16.msra.mxu0 %v4078
    %4293 = vmatprep.mubr.bf16.mxu0 %v3611
    %4294 = vmatmul.mubr.bf16.gmra.mrb[0].mxu0 %v3610
    %v4295 = vpop.f32.mrb[0].mxu0
    %v4296 = vadd.f32 %v4243, %v4295
    %v4297 = vpop.f32.mrb[0].mxu0
    %v4298 = vadd.f32 %v4245, %v4297
    %v4299 = vpop.f32.mrb[0].mxu0
    %v4300 = vadd.f32 %v4247, %v4299
    %v4301 = vpop.f32.mrb[0].mxu0
    %v4302 = vadd.f32 %v4249, %v4301
    %4303 = vmatprep.mubr.bf16.mxu0 %v3617
    %4304 = vmatmul.mubr.bf16.gmra.mrb[0].mxu0 %v3616
    %v4305 = vpop.f32.mrb[0].mxu0
    %v4306 = vadd.f32 %v4253, %v4305
    %v4307 = vpop.f32.mrb[0].mxu0
    %v4308 = vadd.f32 %v4255, %v4307
    %v4309 = vpop.f32.mrb[0].mxu0
    %v4310 = vadd.f32 %v4257, %v4309
    %v4311 = vpop.f32.mrb[0].mxu0
    %v4312 = vadd.f32 %v4259, %v4311
    %4313 = vdwg.mxu0
    %4314 = vmatprep.subr.bf16.mxu0 %v4081
    %4315 = vmatpush1.bf16.msra.mxu0 %v4080
    %4316 = vmatprep.subr.bf16.mxu0 %v4083
    %4317 = vmatpush1.bf16.msra.mxu0 %v4082
    %4318 = vmatprep.subr.bf16.mxu0 %v4085
    %4319 = vmatpush1.bf16.msra.mxu0 %v4084
    %4320 = vmatprep.subr.bf16.mxu0 %v4087
    %4321 = vmatpush1.bf16.msra.mxu0 %v4086
    %4322 = vmatprep.subr.bf16.mxu0 %v4089
    %4323 = vmatpush1.bf16.msra.mxu0 %v4088
    %4324 = vmatprep.subr.bf16.mxu0 %v4091
    %4325 = vmatpush1.bf16.msra.mxu0 %v4090
    %4326 = vmatprep.subr.bf16.mxu0 %v4093
    %4327 = vmatpush1.bf16.msra.mxu0 %v4092
    %4328 = vmatprep.subr.bf16.mxu0 %v4095
    %4329 = vmatpush1.bf16.msra.mxu0 %v4094
    %4330 = vmatprep.subr.bf16.mxu0 %v4097
    %4331 = vmatpush1.bf16.msra.mxu0 %v4096
    %4332 = vmatprep.subr.bf16.mxu0 %v4099
    %4333 = vmatpush1.bf16.msra.mxu0 %v4098
    %4334 = vmatprep.subr.bf16.mxu0 %v4101
    %4335 = vmatpush1.bf16.msra.mxu0 %v4100
    %4336 = vmatprep.subr.bf16.mxu0 %v4103
    %4337 = vmatpush1.bf16.msra.mxu0 %v4102
    %4338 = vmatprep.subr.bf16.mxu0 %v4105
    %4339 = vmatpush1.bf16.msra.mxu0 %v4104
    %4340 = vmatprep.subr.bf16.mxu0 %v4107
    %4341 = vmatpush1.bf16.msra.mxu0 %v4106
    %4342 = vmatprep.subr.bf16.mxu0 %v4109
    %4343 = vmatpush1.bf16.msra.mxu0 %v4108
    %4344 = vmatprep.subr.bf16.mxu0 %v4111
    %4345 = vmatpush1.bf16.msra.mxu0 %v4110
    %4346 = vmatprep.mubr.bf16.mxu0 %v3613
    %4347 = vmatmul.mubr.bf16.gmra.mrb[0].mxu0 %v3612
    %v4348 = vpop.f32.mrb[0].mxu0
    %v4349 = vadd.f32 %v4296, %v4348
    %v4350 = vpop.f32.mrb[0].mxu0
    %v4351 = vadd.f32 %v4298, %v4350
    %v4352 = vpop.f32.mrb[0].mxu0
    %v4353 = vadd.f32 %v4300, %v4352
    %v4354 = vpop.f32.mrb[0].mxu0
    %v4355 = vadd.f32 %v4302, %v4354
    %4356 = vmatprep.mubr.bf16.mxu0 %v3619
    %4357 = vmatmul.mubr.bf16.gmra.mrb[0].mxu0 %v3618
    %v4358 = vpop.f32.mrb[0].mxu0
    %v4359 = vadd.f32 %v4306, %v4358
    %v4360 = vpop.f32.mrb[0].mxu0
    %v4361 = vadd.f32 %v4308, %v4360
    %v4362 = vpop.f32.mrb[0].mxu0
    %v4363 = vadd.f32 %v4310, %v4362
    %v4364 = vpop.f32.mrb[0].mxu0
    %v4365 = vadd.f32 %v4312, %v4364
    %4366 = vdwg.mxu0
    %v4367 = vadd.f32 %v2639, %v4349
    %v4368 = vadd.f32 %v2640, %v4351
    %v4369 = vadd.f32 %v2641, %v4353
    %v4370 = vadd.f32 %v2642, %v4355
    %v4371 = vadd.f32 %v2643, %v4359
    %v4372 = vadd.f32 %v2644, %v4361
    %v4373 = vadd.f32 %v2645, %v4363
    %v4374 = vadd.f32 %v2646, %v4365
    %4375 = vst [vmem:[#allocation8] sm:$0xff] %v4367
    %4376 = vst.msk [vmem:[#allocation8 + $0x8] sm:$0xff] %vm105, %v4368
    %4377 = vst [vmem:[#allocation8 + $0x10] sm:$0xff] %v4369
    %4378 = vst.msk [vmem:[#allocation8 + $0x18] sm:$0xff] %vm105, %v4370
    %4379 = vst [vmem:[#allocation8 + $0x20] sm:$0xff] %v4371
    %4380 = vst.msk [vmem:[#allocation8 + $0x28] sm:$0xff] %vm105, %v4372
    %4381 = vst [vmem:[#allocation8 + $0x30] sm:$0xff] %v4373
    %4382 = vst.msk [vmem:[#allocation8 + $0x38] sm:$0xff] %vm105, %v4374
    // Predicated region
    $region82: #{tpu_custom_call.1} parent=1 // pred_check
      _
    $region83: #{tpu_custom_call.1} parent=1 // pred_check_branch
      %4384 = sbr.rel (0) target = $region85
    $region84: #{tpu_custom_call.1} parent=1 // pred_region
      %s4386 = ssub.s32 1024, 1024
      %4387 = vsyncadd [#allocation4], %s4386
      %s4388 = sshll.u32 [#allocation8], 4
      %s4389 = int_to_ptr.vmem [resolvable:$true] %s4388
      %4394 = dma.vmem_to_hbm [thread:$0]  %s4389, 1024, %s17, [#allocation4], 256, 256, 16
    $region85: #{tpu_custom_call.1} parent=1 // pred_fallthru
      _
    // Predicated region
    $region86: #{tpu_custom_call.1} parent=1 // pred_check
      _
    $region87: #{tpu_custom_call.1} parent=1 // pred_check_branch
      %4396 = sbr.rel (0) target = $region89
    $region88: #{tpu_custom_call.1} parent=1 // pred_region
      %4397 = dma.done [#allocation4], 1024
    $region89: #{tpu_custom_call.1} parent=1 // pred_fallthru
      _
    %4398 = vsyncpa [#allocation3], 1
    %4399 = vsyncpa [#allocation6], 1
    %4400 = vsyncpa [#allocation4], 1

</llo_original>
